<compile_context>
chip_gen: v5e
topology: v5e:2x2
jax: 0.10.0
libtpu: 0.0.40
codegen_flags: <defaults>
</compile_context>

<pallas_src>
import functools

import jax
import jax.numpy as jnp
import numpy as np
from jax.experimental import pallas as pl
from jax.experimental.pallas import tpu as pltpu


def _round_up(x, m):
    return ((x + m - 1) // m) * m


# ----------------------------- configuration ------------------------------
class Config:
    def __init__(self, input_size, output_size, feat_sizes, kernel_size,
                 num_of_convs=2, residual=True):
        self.input_size = input_size
        self.output_size = output_size
        self.feat_sizes = list(feat_sizes)
        self.kernel_size = kernel_size
        self.num_of_convs = num_of_convs
        self.residual = residual

    def level_io(self):
        # ColonTCN sets the TCN's input_size = feat_sizes[0] (after the 1x1 conv).
        ios = []
        in_ch = self.feat_sizes[0]
        for out_ch in self.feat_sizes:
            ios.append((in_ch, out_ch))
            in_ch = out_ch
        return ios


def layer_plan(cfg):
    """Ordered list of layer descriptors (shared by packing and the kernel)."""
    plan = [dict(kind="pw", cin=cfg.input_size, cout=cfg.feat_sizes[0], dil=1)]
    for i, (in_ch, out_ch) in enumerate(cfg.level_io()):
        d = 2 ** i
        cin = in_ch
        for _ in range(cfg.num_of_convs):
            plan.append(dict(kind="dil", cin=cin, cout=out_ch, dil=d))
            cin = out_ch
        if cfg.residual and in_ch != out_ch:
            plan.append(dict(kind="pw", cin=in_ch, cout=out_ch, dil=1))
    plan.append(dict(kind="pw", cin=cfg.feat_sizes[-1], cout=cfg.output_size, dil=1))
    return plan


# ------------------------------- parameters --------------------------------
def init_params(key, cfg):
    """Deterministic synthetic parameters (PyTorch layout), flat list."""
    params = []
    keys = iter(jax.random.split(key, 64))

    def nrm(shape, scale):
        return scale * jax.random.normal(next(keys), shape, jnp.float32)

    C0 = cfg.feat_sizes[0]
    K = cfg.kernel_size
    # conv_first_layer: nn.Conv1d(input_size, C0, 1) -> weight (C0, Cin), bias (C0, 1)
    params.append(nrm((C0, cfg.input_size), 0.2))
    params.append(nrm((C0, 1), 0.1))
    # TemporalBlocks
    for (in_ch, out_ch) in cfg.level_io():
        cin = in_ch
        for _ in range(cfg.num_of_convs):
            params.append(nrm((K, out_ch, cin), 0.08))   # dilated conv weight (K, Cout, Cin)
            params.append(nrm((out_ch, 1), 0.05))        # bias
            cin = out_ch
        if cfg.residual and in_ch != out_ch:
            params.append(nrm((out_ch, in_ch), 0.2))     # 1x1 downsample
            params.append(nrm((out_ch, 1), 0.05))
    # last_layer: nn.Linear(Cf, output_size)
    Cf = cfg.feat_sizes[-1]
    params.append(nrm((cfg.output_size, Cf), 0.2))
    params.append(nrm((cfg.output_size, 1), 0.1))
    return params


def pack_params(params, cfg):
    """Consolidate ALL weights into one bf16 2-D array (im2col-flattened, widths
    padded to a common multiple of 128) and all biases into one f32 (rows, 1)
    column; biases stay f32 (added after the matmul, fused with the ReLU)."""
    plan = layer_plan(cfg)
    it = iter(params)
    K = cfg.kernel_size

    entries = []
    for lay in plan:
        w, b = next(it), next(it)
        if lay["kind"] == "dil":
            w = jnp.transpose(w, (1, 0, 2)).reshape(lay["cout"], K * lay["cin"])
        entries.append((w, b))

    Ww = _round_up(max(w.shape[1] for w, _ in entries), 128)
    w_rows, b_rows, meta = [], [], []
    rw = 0
    for (w, b), lay in zip(entries, plan):
        cout, width = w.shape
        if width < Ww:
            w = jnp.concatenate([w, jnp.zeros((cout, Ww - width), w.dtype)], axis=1)
        w_rows.append(w)
        b_rows.append(b)
        meta.append(dict(row=rw, cout=cout, width=width))
        rw += cout
    w_all = jnp.concatenate(w_rows, axis=0).astype(jnp.bfloat16)
    b_all = jnp.concatenate(b_rows, axis=0).astype(jnp.float32)
    return w_all, b_all, meta


# ------------------------------ Pallas kernel -------------------------------
def make_kernel(cfg, meta, W):
    """Returns (kernel, slab_rows).  `W` is the padded lane width per grid step."""
    plan = layer_plan(cfg)
    K = cfg.kernel_size
    nconv = cfg.num_of_convs
    slab_rows = _round_up(max(K * lay["cin"] for lay in plan if lay["kind"] == "dil"), 16)

    def kernel(x_ref, w_ref, b_ref, mask_ref, o_ref, slab_ref):
        # constant pad-lane mask (1, W), hoisted once; where-select is NaN-safe
        # w.r.t. uninitialized slab margins (which only ever feed pad lanes).
        maskb = mask_ref[...] > 0.5

        def wslice(m):
            return w_ref[pl.ds(m["row"], m["cout"]), pl.ds(0, m["width"])]

        def bslice(m):
            return b_ref[pl.ds(m["row"], m["cout"]), :]           # (Cout, 1) f32

        def pw(m, op_bf):
            # 1x1 conv / linear: bf16 MXU matmul, f32 accumulate, f32 bias add.
            return jnp.dot(wslice(m), op_bf,
                           preferred_element_type=jnp.float32) + bslice(m)

        def dil(m, h_f32, d):
            # dilated 'same' conv via im2col into the persistent bf16 scratch slab.
            cin = m["width"] // K
            P = (K - 1) * d // 2
            h_bf = h_f32.astype(jnp.bfloat16)        # cast ONCE, before tap writes
            for k in range(K):
                s = k * d - P                        # temporal shift of tap k
                r0 = k * cin
                if s == 0:
                    slab_ref[pl.ds(r0, cin), :] = h_bf
                else:
                    # spread layout => shifted reads stay inside the chunk's own
                    # zero halo; stale slab margins only feed pad lanes.
                    a, b0, wl = max(0, -s), max(0, s), W - abs(s)
                    slab_ref[pl.ds(r0, cin), pl.ds(a, wl)] = h_bf[:, b0:b0 + wl]
            acc = jnp.dot(wslice(m), slab_ref[pl.ds(0, K * cin), :],
                          preferred_element_type=jnp.float32)
            return acc + bslice(m)

        it_m = iter(meta)

        # conv_first_layer (1x1 Conv1d) + ReLU; re-zero pad lanes for the next conv.
        m = next(it_m)
        x_bf = x_ref[0]                              # (Cin, W), already bf16
        h = jnp.where(maskb, jnp.maximum(pw(m, x_bf), 0.0), 0.0)

        # TCN temporal blocks
        for i, (in_ch, out_ch) in enumerate(cfg.level_io()):
            d = 2 ** i
            res_in = h
            for j in range(nconv):
                m = next(it_m)
                h = jnp.maximum(dil(m, h, d), 0.0)
                if j < nconv - 1:                    # last conv is masked with the block output
                    h = jnp.where(maskb, h, 0.0)
            if cfg.residual:
                if in_ch != out_ch:
                    m = next(it_m)
                    res = pw(m, res_in.astype(jnp.bfloat16))
                else:
                    res = res_in
                h = jnp.maximum(h + res, 0.0)
            h = jnp.where(maskb, h, 0.0)

        # last_layer: nn.Linear per time step -> (output_size, W), lane-dense store.
        m = next(it_m)
        o_ref[0] = pw(m, h.astype(jnp.bfloat16)).astype(o_ref.dtype)

    return kernel, slab_rows


# ------------------------- generation-aware tiling ---------------------------
def _gen_info():
    kind = ""
    try:
        kind = jax.devices()[0].device_kind.lower()
    except Exception:
        pass
    if ("v5 lite" in kind) or ("v5e" in kind) or ("v5lite" in kind):
        # v5e MXU is 128-wide; raise VMEM above the 16 MiB scoped default.
        return dict(lane_target=128, keep_two_steps=False, vmem_limit=32 * 1024 * 1024)
    if "v6" in kind:
        # single TC: fold batch into fewer grid steps, plenty of VMEM headroom.
        return dict(lane_target=1024, keep_two_steps=False, vmem_limit=64 * 1024 * 1024)
    if ("v7" in kind) or ("tpu7" in kind):
        # 2 TCs and only 64 MiB VMEM: keep >=2 grid steps, tighter budget.
        return dict(lane_target=256, keep_two_steps=True, vmem_limit=48 * 1024 * 1024)
    return dict(lane_target=256, keep_two_steps=False, vmem_limit=32 * 1024 * 1024)


def _pick_batch_block(B, Tc, info):
    """Largest divisor of B (subject to grid>=2 on dual-TC parts and a lane cap)
    that reaches the generation's lane target."""
    bb = 1
    for cand in range(2, B + 1):
        if B % cand:
            continue
        if info["keep_two_steps"] and B // cand < 2:
            continue
        if cand * Tc > 4096:
            break
        if bb * Tc >= info["lane_target"]:
            break
        bb = cand
    return bb


# --------------------------------- wrapper ----------------------------------
def colontcn_forward(x, params, cfg, batch_block=None):
    """x: (B, C_in, T) float32.  Returns [out] with out: (B, T, output_size) f32."""
    B, Cin, T = x.shape
    K = cfg.kernel_size
    n_levels = len(cfg.feat_sizes)
    pmax = (K - 1) * (2 ** (n_levels - 1)) // 2       # largest 'same' padding
    Tc = T + 2 * pmax                                  # per-chunk lane stride

    info = _gen_info()
    bb = _pick_batch_block(B, Tc, info) if batch_block is None else batch_block
    assert B % bb == 0
    G = B // bb
    W = _round_up(bb * Tc, 128)
    O = cfg.output_size

    w_all, b_all, meta = pack_params(params, cfg)
    kernel, slab_rows = make_kernel(cfg, meta, W)

    # spread layout: every chunk carries its own zero halo; input cast to bf16.
    xp = jnp.pad(x, ((0, 0), (0, 0), (pmax, pmax)))                      # (B, Cin, Tc)
    xw = jnp.transpose(xp.reshape(G, bb, Cin, Tc), (0, 2, 1, 3)).reshape(G, Cin, bb * Tc)
    xw = jnp.pad(xw, ((0, 0), (0, 0), (0, W - bb * Tc))).astype(jnp.bfloat16)

    mask_np = np.zeros((1, W), np.float32)
    for c in range(bb):
        mask_np[0, c * Tc + pmax: c * Tc + pmax + T] = 1.0
    mask = jnp.asarray(mask_np)

    in_specs = [
        pl.BlockSpec((1, Cin, W), lambda g: (g, 0, 0)),
        pl.BlockSpec(w_all.shape, lambda g: (0, 0)),
        pl.BlockSpec(b_all.shape, lambda g: (0, 0)),
        pl.BlockSpec(mask.shape, lambda g: (0, 0)),
    ]
    out_specs = pl.BlockSpec((1, O, W), lambda g: (g, 0, 0))

    # advisory cost estimate (helps XLA overlap this small kernel with neighbours)
    per_t_flops = 0
    for lay in layer_plan(cfg):
        kdim = (K * lay["cin"]) if lay["kind"] == "dil" else lay["cin"]
        per_t_flops += 2 * lay["cout"] * kdim
    flops = per_t_flops * T * B
    bytes_accessed = (xw.size * 2 + G * O * W * 4
                      + w_all.size * 2 + b_all.size * 4 + mask.size * 4)

    out_w = pl.pallas_call(
        kernel,
        out_shape=jax.ShapeDtypeStruct((G, O, W), jnp.float32),
        grid_spec=pltpu.PrefetchScalarGridSpec(
            num_scalar_prefetch=0,
            grid=(G,),
            in_specs=in_specs,
            out_specs=out_specs,
            scratch_shapes=[pltpu.VMEM((slab_rows, W), jnp.bfloat16)],
        ),
        compiler_params=pltpu.CompilerParams(
            dimension_semantics=("parallel",),
            vmem_limit_bytes=info["vmem_limit"],
        ),
        cost_estimate=pl.CostEstimate(
            flops=flops, transcendentals=0, bytes_accessed=bytes_accessed),
    )(xw, w_all, b_all, mask)

    # strip pad lanes, un-spread chunks -> (B, O, T); permute to (B, T, O) in XLA
    # (kernel-side store stays lane-dense -- do not regress this).
    out = out_w[:, :, :bb * Tc].reshape(G, O, bb, Tc)[:, :, :, pmax:pmax + T]
    out_nct = jnp.transpose(out, (0, 2, 1, 3)).reshape(B, O, T)
    return [jnp.transpose(out_nct, (0, 2, 1))]


# ----------------------------- pure-JAX reference ---------------------------
def reference_forward(x, params, cfg):
    HI = jax.lax.Precision.HIGHEST
    it = iter(params)
    nxt = lambda: next(it)

    w0, b0 = nxt(), nxt()
    h = jax.nn.relu(jnp.einsum('oc,bct->bot', w0, x, precision=HI) + b0[None])
    K = cfg.kernel_size
    for i, (in_ch, out_ch) in enumerate(cfg.level_io()):
        d = 2 ** i
        P = (K - 1) * d // 2
        res = h
        for _ in range(cfg.num_of_convs):
            w, b = nxt(), nxt()                       # (K, Cout, Cin), (Cout, 1)
            w_oik = jnp.transpose(w, (1, 2, 0))       # OIH
            h = jax.lax.conv_general_dilated(
                h, w_oik, window_strides=(1,), padding=[(P, P)],
                rhs_dilation=(d,), dimension_numbers=('NCH', 'OIH', 'NCH'),
                precision=HI)
            h = jax.nn.relu(h + b[None])
        if cfg.residual:
            if in_ch != out_ch:
                wd, bd = nxt(), nxt()
                res = jnp.einsum('oc,bct->bot', wd, res, precision=HI) + bd[None]
            h = jax.nn.relu(h + res)
    wl, bl = nxt(), nxt()
    out = jnp.einsum('oc,bct->bot', wl, h, precision=HI) + bl[None]
    return [jnp.transpose(out, (0, 2, 1))]


# ----------------------------------- main ------------------------------------
if __name__ == "__main__":
    cfg = Config(input_size=16, output_size=8, feat_sizes=[32, 64],
                 kernel_size=7, num_of_convs=2, residual=True)

    key = jax.random.PRNGKey(0)
    kx, kp = jax.random.split(key)
    B, T = 4, 128
    x = jax.random.normal(kx, (B, cfg.input_size, T), jnp.float32)   # (B, C_in, T)
    params = init_params(kp, cfg)

    fwd = jax.jit(functools.partial(colontcn_forward, cfg=cfg))
    outs = fwd(x, params)
    outs = [jax.block_until_ready(o) for o in outs]
    assert outs[0].shape == (B, T, cfg.output_size)
    assert outs[0].dtype == jnp.float32

    refs = reference_forward(x, params, cfg)
    out_np = np.asarray(outs[0])
    ref_np = np.asarray(refs[0])
    # bf16 MXU operands (f32 accumulation, f32 biases): tight aggregate check +
    # loose element-wise check against the f32 HIGHEST-precision reference.
    rel_err = float(np.linalg.norm(out_np - ref_np) / np.linalg.norm(ref_np))
    assert rel_err < 4e-2, f"relative Frobenius error too large: {rel_err}"
    np.testing.assert_allclose(out_np, ref_np, rtol=1e-1, atol=1e-1)

    print("KERNEL_OK")
</pallas_src>

<mosaic_0001>
module attributes {stable_mosaic.version = 11 : i64} {
  func.func @kernel(%arg0: i32, %arg1: memref<1x16x384xbf16, #tpu.memory_space<vmem>>, %arg2: memref<296x512xbf16, #tpu.memory_space<vmem>>, %arg3: memref<296x1xf32, #tpu.memory_space<vmem>>, %arg4: memref<1x384xf32, #tpu.memory_space<vmem>>, %arg5: memref<1x8x384xf32, #tpu.memory_space<vmem>>, %arg6: memref<448x384xbf16, #tpu.memory_space<vmem>>) attributes {dimension_semantics = [#tpu.dimension_semantics<parallel>], iteration_bounds = array<i64: 2>, scalar_prefetch = 0 : i64, scratch_operands = 1 : i64, tpu.core_type = #tpu.core_type<tc>, window_params = [{transform_indices = @transform_0, window_bounds = array<i64: 1, 16, 384>}, {pipeline_mode = #tpu.pipeline_mode<synchronous>, transform_indices = @transform_1, window_bounds = array<i64: 296, 512>}, {pipeline_mode = #tpu.pipeline_mode<synchronous>, transform_indices = @transform_2, window_bounds = array<i64: 296, 1>}, {pipeline_mode = #tpu.pipeline_mode<synchronous>, transform_indices = @transform_3, window_bounds = array<i64: 1, 384>}, {transform_indices = @transform_4, window_bounds = array<i64: 1, 8, 384>}]} {
    %c0 = arith.constant 0 : index
    %c0_0 = arith.constant 0 : index
    %0 = vector.load %arg4[%c0, %c0_0] : memref<1x384xf32, #tpu.memory_space<vmem>>, vector<1x384xf32>
    %cst = arith.constant 5.000000e-01 : f32
    %1 = vector.broadcast %cst : f32 to vector<1x384xf32>
    %2 = arith.cmpf ogt, %0, %1 : vector<1x384xf32>
    %c0_1 = arith.constant 0 : index
    %c0_2 = arith.constant 0 : index
    %c0_3 = arith.constant 0 : index
    %3 = vector.load %arg1[%c0_1, %c0_2, %c0_3] : memref<1x16x384xbf16, #tpu.memory_space<vmem>>, vector<1x16x384xbf16>
    %4 = vector.shape_cast %3 : vector<1x16x384xbf16> to vector<16x384xbf16>
    %c0_4 = arith.constant 0 : index
    %c0_5 = arith.constant 0 : index
    %5 = vector.load %arg2[%c0_4, %c0_5] : memref<296x512xbf16, #tpu.memory_space<vmem>>, vector<32x16xbf16>
    %cst_6 = arith.constant dense<0.000000e+00> : vector<32x384xf32>
    %6 = tpu.matmul %5, %4, %cst_6 {dimension_numbers = #tpu.dot_dimension_numbers<[1], [0], [0], [1], [0, 0, 1, 1], [], []>} : vector<32x16xbf16>, vector<16x384xbf16>, vector<32x384xf32> -> vector<32x384xf32>
    %c0_7 = arith.constant 0 : index
    %c0_8 = arith.constant 0 : index
    %7 = vector.load %arg3[%c0_7, %c0_8] : memref<296x1xf32, #tpu.memory_space<vmem>>, vector<32x1xf32>
    %8 = vector.broadcast %7 : vector<32x1xf32> to vector<32x384xf32>
    %9 = arith.addf %6, %8 : vector<32x384xf32>
    %cst_9 = arith.constant 0.000000e+00 : f32
    %10 = vector.broadcast %cst_9 : f32 to vector<32x384xf32>
    %11 = arith.maximumf %9, %10 : vector<32x384xf32>
    %cst_10 = arith.constant 0.000000e+00 : f32
    %12 = vector.shape_cast %2 : vector<1x384xi1> to vector<1x384xi1>
    %13 = vector.broadcast %12 : vector<1x384xi1> to vector<32x384xi1>
    %14 = vector.broadcast %cst_10 : f32 to vector<32x384xf32>
    %15 = arith.select %13, %11, %14 : vector<32x384xi1>, vector<32x384xf32>
    %16 = arith.truncf %15 : vector<32x384xf32> to vector<32x384xbf16>
    %17 = vector.extract_strided_slice %16 {offsets = [0, 0], sizes = [32, 381], strides = [1, 1]} : vector<32x384xbf16> to vector<32x381xbf16>
    %c0_11 = arith.constant 0 : index
    %c3 = arith.constant 3 : index
    %18 = vector.load %arg6[%c0_11, %c3] : memref<448x384xbf16, #tpu.memory_space<vmem>>, vector<32x381xbf16>
    tpu.vector_store %arg6[%c0_11, %c3], %17 {strides = array<i32>} : memref<448x384xbf16, #tpu.memory_space<vmem>>, vector<32x381xbf16>,
    %19 = vector.extract_strided_slice %16 {offsets = [0, 0], sizes = [32, 382], strides = [1, 1]} : vector<32x384xbf16> to vector<32x382xbf16>
    %c32 = arith.constant 32 : index
    %c2 = arith.constant 2 : index
    %20 = vector.load %arg6[%c32, %c2] : memref<448x384xbf16, #tpu.memory_space<vmem>>, vector<32x382xbf16>
    tpu.vector_store %arg6[%c32, %c2], %19 {strides = array<i32>} : memref<448x384xbf16, #tpu.memory_space<vmem>>, vector<32x382xbf16>,
    %21 = vector.extract_strided_slice %16 {offsets = [0, 0], sizes = [32, 383], strides = [1, 1]} : vector<32x384xbf16> to vector<32x383xbf16>
    %c64 = arith.constant 64 : index
    %c1 = arith.constant 1 : index
    %22 = vector.load %arg6[%c64, %c1] : memref<448x384xbf16, #tpu.memory_space<vmem>>, vector<32x383xbf16>
    tpu.vector_store %arg6[%c64, %c1], %21 {strides = array<i32>} : memref<448x384xbf16, #tpu.memory_space<vmem>>, vector<32x383xbf16>,
    %c96 = arith.constant 96 : index
    %c0_12 = arith.constant 0 : index
    %23 = vector.load %arg6[%c96, %c0_12] : memref<448x384xbf16, #tpu.memory_space<vmem>>, vector<32x384xbf16>
    tpu.vector_store %arg6[%c96, %c0_12], %16 {strides = array<i32>} : memref<448x384xbf16, #tpu.memory_space<vmem>>, vector<32x384xbf16>,
    %24 = vector.extract_strided_slice %16 {offsets = [0, 1], sizes = [32, 383], strides = [1, 1]} : vector<32x384xbf16> to vector<32x383xbf16>
    %c128 = arith.constant 128 : index
    %c0_13 = arith.constant 0 : index
    %25 = vector.load %arg6[%c128, %c0_13] : memref<448x384xbf16, #tpu.memory_space<vmem>>, vector<32x383xbf16>
    tpu.vector_store %arg6[%c128, %c0_13], %24 {strides = array<i32>} : memref<448x384xbf16, #tpu.memory_space<vmem>>, vector<32x383xbf16>,
    %26 = vector.extract_strided_slice %16 {offsets = [0, 2], sizes = [32, 382], strides = [1, 1]} : vector<32x384xbf16> to vector<32x382xbf16>
    %c160 = arith.constant 160 : index
    %c0_14 = arith.constant 0 : index
    %27 = vector.load %arg6[%c160, %c0_14] : memref<448x384xbf16, #tpu.memory_space<vmem>>, vector<32x382xbf16>
    tpu.vector_store %arg6[%c160, %c0_14], %26 {strides = array<i32>} : memref<448x384xbf16, #tpu.memory_space<vmem>>, vector<32x382xbf16>,
    %28 = vector.extract_strided_slice %16 {offsets = [0, 3], sizes = [32, 381], strides = [1, 1]} : vector<32x384xbf16> to vector<32x381xbf16>
    %c192 = arith.constant 192 : index
    %c0_15 = arith.constant 0 : index
    %29 = vector.load %arg6[%c192, %c0_15] : memref<448x384xbf16, #tpu.memory_space<vmem>>, vector<32x381xbf16>
    tpu.vector_store %arg6[%c192, %c0_15], %28 {strides = array<i32>} : memref<448x384xbf16, #tpu.memory_space<vmem>>, vector<32x381xbf16>,
    %c32_16 = arith.constant 32 : index
    %c0_17 = arith.constant 0 : index
    %30 = vector.load %arg2[%c32_16, %c0_17] : memref<296x512xbf16, #tpu.memory_space<vmem>>, vector<32x224xbf16>
    %c0_18 = arith.constant 0 : index
    %c0_19 = arith.constant 0 : index
    %31 = vector.load %arg6[%c0_18, %c0_19] : memref<448x384xbf16, #tpu.memory_space<vmem>>, vector<224x384xbf16>
    %cst_20 = arith.constant dense<0.000000e+00> : vector<32x384xf32>
    %32 = tpu.matmul %30, %31, %cst_20 {dimension_numbers = #tpu.dot_dimension_numbers<[1], [0], [0], [1], [0, 0, 1, 1], [], []>} : vector<32x224xbf16>, vector<224x384xbf16>, vector<32x384xf32> -> vector<32x384xf32>
    %c32_21 = arith.constant 32 : index
    %c0_22 = arith.constant 0 : index
    %33 = vector.load %arg3[%c32_21, %c0_22] : memref<296x1xf32, #tpu.memory_space<vmem>>, vector<32x1xf32>
    %34 = vector.broadcast %33 : vector<32x1xf32> to vector<32x384xf32>
    %35 = arith.addf %32, %34 : vector<32x384xf32>
    %cst_23 = arith.constant 0.000000e+00 : f32
    %36 = vector.broadcast %cst_23 : f32 to vector<32x384xf32>
    %37 = arith.maximumf %35, %36 : vector<32x384xf32>
    %cst_24 = arith.constant 0.000000e+00 : f32
    %38 = vector.shape_cast %2 : vector<1x384xi1> to vector<1x384xi1>
    %39 = vector.broadcast %38 : vector<1x384xi1> to vector<32x384xi1>
    %40 = vector.broadcast %cst_24 : f32 to vector<32x384xf32>
    %41 = arith.select %39, %37, %40 : vector<32x384xi1>, vector<32x384xf32>
    %42 = arith.truncf %41 : vector<32x384xf32> to vector<32x384xbf16>
    %43 = vector.extract_strided_slice %42 {offsets = [0, 0], sizes = [32, 381], strides = [1, 1]} : vector<32x384xbf16> to vector<32x381xbf16>
    %c0_25 = arith.constant 0 : index
    %c3_26 = arith.constant 3 : index
    %44 = vector.load %arg6[%c0_25, %c3_26] : memref<448x384xbf16, #tpu.memory_space<vmem>>, vector<32x381xbf16>
    tpu.vector_store %arg6[%c0_25, %c3_26], %43 {strides = array<i32>} : memref<448x384xbf16, #tpu.memory_space<vmem>>, vector<32x381xbf16>,
    %45 = vector.extract_strided_slice %42 {offsets = [0, 0], sizes = [32, 382], strides = [1, 1]} : vector<32x384xbf16> to vector<32x382xbf16>
    %c32_27 = arith.constant 32 : index
    %c2_28 = arith.constant 2 : index
    %46 = vector.load %arg6[%c32_27, %c2_28] : memref<448x384xbf16, #tpu.memory_space<vmem>>, vector<32x382xbf16>
    tpu.vector_store %arg6[%c32_27, %c2_28], %45 {strides = array<i32>} : memref<448x384xbf16, #tpu.memory_space<vmem>>, vector<32x382xbf16>,
    %47 = vector.extract_strided_slice %42 {offsets = [0, 0], sizes = [32, 383], strides = [1, 1]} : vector<32x384xbf16> to vector<32x383xbf16>
    %c64_29 = arith.constant 64 : index
    %c1_30 = arith.constant 1 : index
    %48 = vector.load %arg6[%c64_29, %c1_30] : memref<448x384xbf16, #tpu.memory_space<vmem>>, vector<32x383xbf16>
    tpu.vector_store %arg6[%c64_29, %c1_30], %47 {strides = array<i32>} : memref<448x384xbf16, #tpu.memory_space<vmem>>, vector<32x383xbf16>,
    %c96_31 = arith.constant 96 : index
    %c0_32 = arith.constant 0 : index
    %49 = vector.load %arg6[%c96_31, %c0_32] : memref<448x384xbf16, #tpu.memory_space<vmem>>, vector<32x384xbf16>
    tpu.vector_store %arg6[%c96_31, %c0_32], %42 {strides = array<i32>} : memref<448x384xbf16, #tpu.memory_space<vmem>>, vector<32x384xbf16>,
    %50 = vector.extract_strided_slice %42 {offsets = [0, 1], sizes = [32, 383], strides = [1, 1]} : vector<32x384xbf16> to vector<32x383xbf16>
    %c128_33 = arith.constant 128 : index
    %c0_34 = arith.constant 0 : index
    %51 = vector.load %arg6[%c128_33, %c0_34] : memref<448x384xbf16, #tpu.memory_space<vmem>>, vector<32x383xbf16>
    tpu.vector_store %arg6[%c128_33, %c0_34], %50 {strides = array<i32>} : memref<448x384xbf16, #tpu.memory_space<vmem>>, vector<32x383xbf16>,
    %52 = vector.extract_strided_slice %42 {offsets = [0, 2], sizes = [32, 382], strides = [1, 1]} : vector<32x384xbf16> to vector<32x382xbf16>
    %c160_35 = arith.constant 160 : index
    %c0_36 = arith.constant 0 : index
    %53 = vector.load %arg6[%c160_35, %c0_36] : memref<448x384xbf16, #tpu.memory_space<vmem>>, vector<32x382xbf16>
    tpu.vector_store %arg6[%c160_35, %c0_36], %52 {strides = array<i32>} : memref<448x384xbf16, #tpu.memory_space<vmem>>, vector<32x382xbf16>,
    %54 = vector.extract_strided_slice %42 {offsets = [0, 3], sizes = [32, 381], strides = [1, 1]} : vector<32x384xbf16> to vector<32x381xbf16>
    %c192_37 = arith.constant 192 : index
    %c0_38 = arith.constant 0 : index
    %55 = vector.load %arg6[%c192_37, %c0_38] : memref<448x384xbf16, #tpu.memory_space<vmem>>, vector<32x381xbf16>
    tpu.vector_store %arg6[%c192_37, %c0_38], %54 {strides = array<i32>} : memref<448x384xbf16, #tpu.memory_space<vmem>>, vector<32x381xbf16>,
    %c64_39 = arith.constant 64 : index
    %c0_40 = arith.constant 0 : index
    %56 = vector.load %arg2[%c64_39, %c0_40] : memref<296x512xbf16, #tpu.memory_space<vmem>>, vector<32x224xbf16>
    %c0_41 = arith.constant 0 : index
    %c0_42 = arith.constant 0 : index
    %57 = vector.load %arg6[%c0_41, %c0_42] : memref<448x384xbf16, #tpu.memory_space<vmem>>, vector<224x384xbf16>
    %cst_43 = arith.constant dense<0.000000e+00> : vector<32x384xf32>
    %58 = tpu.matmul %56, %57, %cst_43 {dimension_numbers = #tpu.dot_dimension_numbers<[1], [0], [0], [1], [0, 0, 1, 1], [], []>} : vector<32x224xbf16>, vector<224x384xbf16>, vector<32x384xf32> -> vector<32x384xf32>
    %c64_44 = arith.constant 64 : index
    %c0_45 = arith.constant 0 : index
    %59 = vector.load %arg3[%c64_44, %c0_45] : memref<296x1xf32, #tpu.memory_space<vmem>>, vector<32x1xf32>
    %60 = vector.broadcast %59 : vector<32x1xf32> to vector<32x384xf32>
    %61 = arith.addf %58, %60 : vector<32x384xf32>
    %cst_46 = arith.constant 0.000000e+00 : f32
    %62 = vector.broadcast %cst_46 : f32 to vector<32x384xf32>
    %63 = arith.maximumf %61, %62 : vector<32x384xf32>
    %64 = arith.addf %63, %15 : vector<32x384xf32>
    %cst_47 = arith.constant 0.000000e+00 : f32
    %65 = vector.broadcast %cst_47 : f32 to vector<32x384xf32>
    %66 = arith.maximumf %64, %65 : vector<32x384xf32>
    %cst_48 = arith.constant 0.000000e+00 : f32
    %67 = vector.shape_cast %2 : vector<1x384xi1> to vector<1x384xi1>
    %68 = vector.broadcast %67 : vector<1x384xi1> to vector<32x384xi1>
    %69 = vector.broadcast %cst_48 : f32 to vector<32x384xf32>
    %70 = arith.select %68, %66, %69 : vector<32x384xi1>, vector<32x384xf32>
    %71 = arith.truncf %70 : vector<32x384xf32> to vector<32x384xbf16>
    %72 = vector.extract_strided_slice %71 {offsets = [0, 0], sizes = [32, 378], strides = [1, 1]} : vector<32x384xbf16> to vector<32x378xbf16>
    %c0_49 = arith.constant 0 : index
    %c6 = arith.constant 6 : index
    %73 = vector.load %arg6[%c0_49, %c6] : memref<448x384xbf16, #tpu.memory_space<vmem>>, vector<32x378xbf16>
    tpu.vector_store %arg6[%c0_49, %c6], %72 {strides = array<i32>} : memref<448x384xbf16, #tpu.memory_space<vmem>>, vector<32x378xbf16>,
    %74 = vector.extract_strided_slice %71 {offsets = [0, 0], sizes = [32, 380], strides = [1, 1]} : vector<32x384xbf16> to vector<32x380xbf16>
    %c32_50 = arith.constant 32 : index
    %c4 = arith.constant 4 : index
    %75 = vector.load %arg6[%c32_50, %c4] : memref<448x384xbf16, #tpu.memory_space<vmem>>, vector<32x380xbf16>
    tpu.vector_store %arg6[%c32_50, %c4], %74 {strides = array<i32>} : memref<448x384xbf16, #tpu.memory_space<vmem>>, vector<32x380xbf16>,
    %76 = vector.extract_strided_slice %71 {offsets = [0, 0], sizes = [32, 382], strides = [1, 1]} : vector<32x384xbf16> to vector<32x382xbf16>
    %c64_51 = arith.constant 64 : index
    %c2_52 = arith.constant 2 : index
    %77 = vector.load %arg6[%c64_51, %c2_52] : memref<448x384xbf16, #tpu.memory_space<vmem>>, vector<32x382xbf16>
    tpu.vector_store %arg6[%c64_51, %c2_52], %76 {strides = array<i32>} : memref<448x384xbf16, #tpu.memory_space<vmem>>, vector<32x382xbf16>,
    %c96_53 = arith.constant 96 : index
    %c0_54 = arith.constant 0 : index
    %78 = vector.load %arg6[%c96_53, %c0_54] : memref<448x384xbf16, #tpu.memory_space<vmem>>, vector<32x384xbf16>
    tpu.vector_store %arg6[%c96_53, %c0_54], %71 {strides = array<i32>} : memref<448x384xbf16, #tpu.memory_space<vmem>>, vector<32x384xbf16>,
    %79 = vector.extract_strided_slice %71 {offsets = [0, 2], sizes = [32, 382], strides = [1, 1]} : vector<32x384xbf16> to vector<32x382xbf16>
    %c128_55 = arith.constant 128 : index
    %c0_56 = arith.constant 0 : index
    %80 = vector.load %arg6[%c128_55, %c0_56] : memref<448x384xbf16, #tpu.memory_space<vmem>>, vector<32x382xbf16>
    tpu.vector_store %arg6[%c128_55, %c0_56], %79 {strides = array<i32>} : memref<448x384xbf16, #tpu.memory_space<vmem>>, vector<32x382xbf16>,
    %81 = vector.extract_strided_slice %71 {offsets = [0, 4], sizes = [32, 380], strides = [1, 1]} : vector<32x384xbf16> to vector<32x380xbf16>
    %c160_57 = arith.constant 160 : index
    %c0_58 = arith.constant 0 : index
    %82 = vector.load %arg6[%c160_57, %c0_58] : memref<448x384xbf16, #tpu.memory_space<vmem>>, vector<32x380xbf16>
    tpu.vector_store %arg6[%c160_57, %c0_58], %81 {strides = array<i32>} : memref<448x384xbf16, #tpu.memory_space<vmem>>, vector<32x380xbf16>,
    %83 = vector.extract_strided_slice %71 {offsets = [0, 6], sizes = [32, 378], strides = [1, 1]} : vector<32x384xbf16> to vector<32x378xbf16>
    %c192_59 = arith.constant 192 : index
    %c0_60 = arith.constant 0 : index
    %84 = vector.load %arg6[%c192_59, %c0_60] : memref<448x384xbf16, #tpu.memory_space<vmem>>, vector<32x378xbf16>
    tpu.vector_store %arg6[%c192_59, %c0_60], %83 {strides = array<i32>} : memref<448x384xbf16, #tpu.memory_space<vmem>>, vector<32x378xbf16>,
    %c96_61 = arith.constant 96 : index
    %c0_62 = arith.constant 0 : index
    %85 = vector.load %arg2[%c96_61, %c0_62] : memref<296x512xbf16, #tpu.memory_space<vmem>>, vector<64x224xbf16>
    %c0_63 = arith.constant 0 : index
    %c0_64 = arith.constant 0 : index
    %86 = vector.load %arg6[%c0_63, %c0_64] : memref<448x384xbf16, #tpu.memory_space<vmem>>, vector<224x384xbf16>
    %cst_65 = arith.constant dense<0.000000e+00> : vector<64x384xf32>
    %87 = tpu.matmul %85, %86, %cst_65 {dimension_numbers = #tpu.dot_dimension_numbers<[1], [0], [0], [1], [0, 0, 1, 1], [], []>} : vector<64x224xbf16>, vector<224x384xbf16>, vector<64x384xf32> -> vector<64x384xf32>
    %c96_66 = arith.constant 96 : index
    %c0_67 = arith.constant 0 : index
    %88 = vector.load %arg3[%c96_66, %c0_67] : memref<296x1xf32, #tpu.memory_space<vmem>>, vector<64x1xf32>
    %89 = vector.broadcast %88 : vector<64x1xf32> to vector<64x384xf32>
    %90 = arith.addf %87, %89 : vector<64x384xf32>
    %cst_68 = arith.constant 0.000000e+00 : f32
    %91 = vector.broadcast %cst_68 : f32 to vector<64x384xf32>
    %92 = arith.maximumf %90, %91 : vector<64x384xf32>
    %cst_69 = arith.constant 0.000000e+00 : f32
    %93 = vector.shape_cast %2 : vector<1x384xi1> to vector<1x384xi1>
    %94 = vector.broadcast %93 : vector<1x384xi1> to vector<64x384xi1>
    %95 = vector.broadcast %cst_69 : f32 to vector<64x384xf32>
    %96 = arith.select %94, %92, %95 : vector<64x384xi1>, vector<64x384xf32>
    %97 = arith.truncf %96 : vector<64x384xf32> to vector<64x384xbf16>
    %98 = vector.extract_strided_slice %97 {offsets = [0, 0], sizes = [64, 378], strides = [1, 1]} : vector<64x384xbf16> to vector<64x378xbf16>
    %c0_70 = arith.constant 0 : index
    %c6_71 = arith.constant 6 : index
    %99 = vector.load %arg6[%c0_70, %c6_71] : memref<448x384xbf16, #tpu.memory_space<vmem>>, vector<64x378xbf16>
    tpu.vector_store %arg6[%c0_70, %c6_71], %98 {strides = array<i32>} : memref<448x384xbf16, #tpu.memory_space<vmem>>, vector<64x378xbf16>,
    %100 = vector.extract_strided_slice %97 {offsets = [0, 0], sizes = [64, 380], strides = [1, 1]} : vector<64x384xbf16> to vector<64x380xbf16>
    %c64_72 = arith.constant 64 : index
    %c4_73 = arith.constant 4 : index
    %101 = vector.load %arg6[%c64_72, %c4_73] : memref<448x384xbf16, #tpu.memory_space<vmem>>, vector<64x380xbf16>
    tpu.vector_store %arg6[%c64_72, %c4_73], %100 {strides = array<i32>} : memref<448x384xbf16, #tpu.memory_space<vmem>>, vector<64x380xbf16>,
    %102 = vector.extract_strided_slice %97 {offsets = [0, 0], sizes = [64, 382], strides = [1, 1]} : vector<64x384xbf16> to vector<64x382xbf16>
    %c128_74 = arith.constant 128 : index
    %c2_75 = arith.constant 2 : index
    %103 = vector.load %arg6[%c128_74, %c2_75] : memref<448x384xbf16, #tpu.memory_space<vmem>>, vector<64x382xbf16>
    tpu.vector_store %arg6[%c128_74, %c2_75], %102 {strides = array<i32>} : memref<448x384xbf16, #tpu.memory_space<vmem>>, vector<64x382xbf16>,
    %c192_76 = arith.constant 192 : index
    %c0_77 = arith.constant 0 : index
    %104 = vector.load %arg6[%c192_76, %c0_77] : memref<448x384xbf16, #tpu.memory_space<vmem>>, vector<64x384xbf16>
    tpu.vector_store %arg6[%c192_76, %c0_77], %97 {strides = array<i32>} : memref<448x384xbf16, #tpu.memory_space<vmem>>, vector<64x384xbf16>,
    %105 = vector.extract_strided_slice %97 {offsets = [0, 2], sizes = [64, 382], strides = [1, 1]} : vector<64x384xbf16> to vector<64x382xbf16>
    %c256 = arith.constant 256 : index
    %c0_78 = arith.constant 0 : index
    %106 = vector.load %arg6[%c256, %c0_78] : memref<448x384xbf16, #tpu.memory_space<vmem>>, vector<64x382xbf16>
    tpu.vector_store %arg6[%c256, %c0_78], %105 {strides = array<i32>} : memref<448x384xbf16, #tpu.memory_space<vmem>>, vector<64x382xbf16>,
    %107 = vector.extract_strided_slice %97 {offsets = [0, 4], sizes = [64, 380], strides = [1, 1]} : vector<64x384xbf16> to vector<64x380xbf16>
    %c320 = arith.constant 320 : index
    %c0_79 = arith.constant 0 : index
    %108 = vector.load %arg6[%c320, %c0_79] : memref<448x384xbf16, #tpu.memory_space<vmem>>, vector<64x380xbf16>
    tpu.vector_store %arg6[%c320, %c0_79], %107 {strides = array<i32>} : memref<448x384xbf16, #tpu.memory_space<vmem>>, vector<64x380xbf16>,
    %109 = vector.extract_strided_slice %97 {offsets = [0, 6], sizes = [64, 378], strides = [1, 1]} : vector<64x384xbf16> to vector<64x378xbf16>
    %c384 = arith.constant 384 : index
    %c0_80 = arith.constant 0 : index
    %110 = vector.load %arg6[%c384, %c0_80] : memref<448x384xbf16, #tpu.memory_space<vmem>>, vector<64x378xbf16>
    tpu.vector_store %arg6[%c384, %c0_80], %109 {strides = array<i32>} : memref<448x384xbf16, #tpu.memory_space<vmem>>, vector<64x378xbf16>,
    %c160_81 = arith.constant 160 : index
    %c0_82 = arith.constant 0 : index
    %111 = vector.load %arg2[%c160_81, %c0_82] : memref<296x512xbf16, #tpu.memory_space<vmem>>, vector<64x448xbf16>
    %c0_83 = arith.constant 0 : index
    %c0_84 = arith.constant 0 : index
    %112 = vector.load %arg6[%c0_83, %c0_84] : memref<448x384xbf16, #tpu.memory_space<vmem>>, vector<448x384xbf16>
    %cst_85 = arith.constant dense<0.000000e+00> : vector<64x384xf32>
    %113 = tpu.matmul %111, %112, %cst_85 {dimension_numbers = #tpu.dot_dimension_numbers<[1], [0], [0], [1], [0, 0, 1, 1], [], []>} : vector<64x448xbf16>, vector<448x384xbf16>, vector<64x384xf32> -> vector<64x384xf32>
    %c160_86 = arith.constant 160 : index
    %c0_87 = arith.constant 0 : index
    %114 = vector.load %arg3[%c160_86, %c0_87] : memref<296x1xf32, #tpu.memory_space<vmem>>, vector<64x1xf32>
    %115 = vector.broadcast %114 : vector<64x1xf32> to vector<64x384xf32>
    %116 = arith.addf %113, %115 : vector<64x384xf32>
    %cst_88 = arith.constant 0.000000e+00 : f32
    %117 = vector.broadcast %cst_88 : f32 to vector<64x384xf32>
    %118 = arith.maximumf %116, %117 : vector<64x384xf32>
    %119 = arith.truncf %70 : vector<32x384xf32> to vector<32x384xbf16>
    %c224 = arith.constant 224 : index
    %c0_89 = arith.constant 0 : index
    %120 = vector.load %arg2[%c224, %c0_89] : memref<296x512xbf16, #tpu.memory_space<vmem>>, vector<64x32xbf16>
    %cst_90 = arith.constant dense<0.000000e+00> : vector<64x384xf32>
    %121 = tpu.matmul %120, %119, %cst_90 {dimension_numbers = #tpu.dot_dimension_numbers<[1], [0], [0], [1], [0, 0, 1, 1], [], []>} : vector<64x32xbf16>, vector<32x384xbf16>, vector<64x384xf32> -> vector<64x384xf32>
    %c224_91 = arith.constant 224 : index
    %c0_92 = arith.constant 0 : index
    %122 = vector.load %arg3[%c224_91, %c0_92] : memref<296x1xf32, #tpu.memory_space<vmem>>, vector<64x1xf32>
    %123 = vector.broadcast %122 : vector<64x1xf32> to vector<64x384xf32>
    %124 = arith.addf %121, %123 : vector<64x384xf32>
    %125 = arith.addf %118, %124 : vector<64x384xf32>
    %cst_93 = arith.constant 0.000000e+00 : f32
    %126 = vector.broadcast %cst_93 : f32 to vector<64x384xf32>
    %127 = arith.maximumf %125, %126 : vector<64x384xf32>
    %cst_94 = arith.constant 0.000000e+00 : f32
    %128 = vector.shape_cast %2 : vector<1x384xi1> to vector<1x384xi1>
    %129 = vector.broadcast %128 : vector<1x384xi1> to vector<64x384xi1>
    %130 = vector.broadcast %cst_94 : f32 to vector<64x384xf32>
    %131 = arith.select %129, %127, %130 : vector<64x384xi1>, vector<64x384xf32>
    %132 = arith.truncf %131 : vector<64x384xf32> to vector<64x384xbf16>
    %c288 = arith.constant 288 : index
    %c0_95 = arith.constant 0 : index
    %133 = vector.load %arg2[%c288, %c0_95] : memref<296x512xbf16, #tpu.memory_space<vmem>>, vector<8x64xbf16>
    %cst_96 = arith.constant dense<0.000000e+00> : vector<8x384xf32>
    %134 = tpu.matmul %133, %132, %cst_96 {dimension_numbers = #tpu.dot_dimension_numbers<[1], [0], [0], [1], [0, 0, 1, 1], [], []>} : vector<8x64xbf16>, vector<64x384xbf16>, vector<8x384xf32> -> vector<8x384xf32>
    %c288_97 = arith.constant 288 : index
    %c0_98 = arith.constant 0 : index
    %135 = vector.load %arg3[%c288_97, %c0_98] : memref<296x1xf32, #tpu.memory_space<vmem>>, vector<8x1xf32>
    %136 = vector.broadcast %135 : vector<8x1xf32> to vector<8x384xf32>
    %137 = arith.addf %134, %136 : vector<8x384xf32>
    %c0_99 = arith.constant 0 : index
    %c0_100 = arith.constant 0 : index
    %c0_101 = arith.constant 0 : index
    %138 = vector.load %arg5[%c0_99, %c0_100, %c0_101] : memref<1x8x384xf32, #tpu.memory_space<vmem>>, vector<1x8x384xf32>
    %139 = vector.shape_cast %138 : vector<1x8x384xf32> to vector<8x384xf32>
    %140 = vector.shape_cast %137 : vector<8x384xf32> to vector<1x8x384xf32>
    tpu.vector_store %arg5[%c0_99, %c0_100, %c0_101], %140 {strides = array<i32>} : memref<1x8x384xf32, #tpu.memory_space<vmem>>, vector<1x8x384xf32>,
    return
  }
  func.func @transform_0(%arg0: i32) -> (i32, i32, i32) {
    %c0_i32 = arith.constant 0 : i32
    %c0_i32_0 = arith.constant 0 : i32
    %c0_i32_1 = arith.constant 0 : i32
    return %arg0, %c0_i32, %c0_i32_0 : i32, i32, i32
  }
  func.func @transform_1(%arg0: i32) -> (i32, i32) {
    %c0_i32 = arith.constant 0 : i32
    %c0_i32_0 = arith.constant 0 : i32
    %c0_i32_1 = arith.constant 0 : i32
    return %c0_i32, %c0_i32_0 : i32, i32
  }
  func.func @transform_2(%arg0: i32) -> (i32, i32) {
    %c0_i32 = arith.constant 0 : i32
    %c0_i32_0 = arith.constant 0 : i32
    %c0_i32_1 = arith.constant 0 : i32
    return %c0_i32, %c0_i32_0 : i32, i32
  }
  func.func @transform_3(%arg0: i32) -> (i32, i32) {
    %c0_i32 = arith.constant 0 : i32
    %c0_i32_0 = arith.constant 0 : i32
    %c0_i32_1 = arith.constant 0 : i32
    return %c0_i32, %c0_i32_0 : i32, i32
  }
  func.func @transform_4(%arg0: i32) -> (i32, i32, i32) {
    %c0_i32 = arith.constant 0 : i32
    %c0_i32_0 = arith.constant 0 : i32
    %c0_i32_1 = arith.constant 0 : i32
    return %arg0, %c0_i32, %c0_i32_0 : i32, i32, i32
  }
}

</mosaic_0001>

<llo_original>
// kernel: colontcn_forward.1
$region0: #{colontcn_forward.1}
  #allocation0 [shape = 'u32[]', space=smem, size = 0x4, offset = 0x4, fixed_abs, tag = 'smem constant byte address 0x4 - core index']
  #allocation1 [shape = 'u32[72,128]{1,0:T(1,128)}', space=vmem, size = 0x9000, scoped, tag = 'internal scratch']
  #allocation2 [shape = 'bf16[448,384]{1,0:T(8,128)(2,1)}', space=vmem, size = 0x54000, scoped, tag = 'scratch operand']
  %s0 = inlined_call_operand.vmem [shape: bf16[2,16,384], index: 0, kind: input, shape index: {}]
  %s1 = inlined_call_operand.vmem [shape: bf16[296,512], index: 1, kind: input, shape index: {}]
  %s2 = inlined_call_operand.vmem [shape: f32[296,1], index: 2, kind: input, shape index: {}]
  %s3 = inlined_call_operand.vmem [shape: f32[1,384], index: 3, kind: input, shape index: {}]
  %s4 = inlined_call_operand.vmem [shape: f32[2,8,384], index: 4, kind: output, shape index: {}]
  %s5 = sld [smem:[#allocation0]]
  $region49: #{colontcn_forward.1} parent=0
    _
  %s7 = ssub.s32 1, %s5
  %s8 = scalar_select 0, %s7, %s5
  loop: start=0, step=1, limit=4
  $region2: #{colontcn_forward.1} parent=0 // loop_pre_header
    _
  $region3: #{colontcn_forward.1} parent=0 // loop_header
    %s10 = sphi 0, %s14
    %p11 = scmp.ge.s32.totalorder %s10, 4
    %s20 = sphi 0, %s22
    %s23 = sphi 0, %s20
    %s24 = sphi 0, %s23
    %s40 = sphi 0, %s24
    %s44 = sphi 0, %s44
    %s46 = sphi 0, %s44
    %s47 = sphi 0, %s46
    %s61 = sphi 0, %s47
    %s65 = sphi 0, %s65
    %s67 = sphi 0, %s65
    %s68 = sphi 0, %s67
    %s82 = sphi 0, %s68
    %s86 = sphi 0, %s86
    %s88 = sphi 0, %s86
    %s89 = sphi 0, %s88
    %s103 = sphi 0, %s89
    %s109 = sphi 0, %s111
    %s112 = sphi 0, %s109
    %s113 = sphi 0, %s112
    %s129 = sphi 0, %s113
  $region4: #{colontcn_forward.1} parent=0 // loop_header_branch
    %13 = sbr.rel (%p11) target = $region8
  $region5: #{colontcn_forward.1} parent=0 // loop_body
    %s15 = ssub.s32 %s10, 1
    %s16 = ssub.s32 %s10, 2
    %s17 = sadd.s32 %s10, 1
    %s18 = ssub.s32 %s10, %s17
    %p19 = scmp.eq.s32.totalorder %s18, 0
    %s21 = sadd.s32 %s20, 1
    %s22 = scalar_select %p19, %s20, %s21
    %p25 = pneg %p19
    %p26 = scmp.eq.s32.totalorder %s10, 1
    %p27 = por %p25, %p26
    %p28 = scmp.ne.s32.totalorder %s20, %s23
    %p29 = scmp.eq.s32.totalorder %s10, 0
    %p30 = por %p28, %p29
    %p31 = scmp.ne.s32.totalorder %s20, %s23
    %p32 = scmp.eq.s32.totalorder %s15, 1
    %p33 = por %p31, %p32
    %p34 = scmp.ne.s32.totalorder %s23, %s24
    %p35 = scmp.eq.s32.totalorder %s15, 0
    %p36 = por %p34, %p35
    %p37 = scmp.ne.s32.totalorder %s23, %s24
    %p38 = scmp.eq.s32.totalorder %s16, 1
    %p39 = por %p37, %p38
    %p41 = scmp.ne.s32.totalorder %s24, %s40
    %p42 = scmp.eq.s32.totalorder %s16, 0
    %p43 = por %p41, %p42
    %s45 = sadd.s32 %s44, 1
    %p48 = scmp.eq.s32.totalorder %s10, 1
    %p49 = scmp.ne.s32.totalorder %s44, %s46
    %p50 = scmp.eq.s32.totalorder %s10, 0
    %p51 = por %p49, %p50
    %p52 = scmp.ne.s32.totalorder %s44, %s46
    %p53 = scmp.eq.s32.totalorder %s15, 1
    %p54 = por %p52, %p53
    %p55 = scmp.ne.s32.totalorder %s46, %s47
    %p56 = scmp.eq.s32.totalorder %s15, 0
    %p57 = por %p55, %p56
    %p58 = scmp.ne.s32.totalorder %s46, %s47
    %p59 = scmp.eq.s32.totalorder %s16, 1
    %p60 = por %p58, %p59
    %p62 = scmp.ne.s32.totalorder %s47, %s61
    %p63 = scmp.eq.s32.totalorder %s16, 0
    %p64 = por %p62, %p63
    %s66 = sadd.s32 %s65, 1
    %p69 = scmp.eq.s32.totalorder %s10, 1
    %p70 = scmp.ne.s32.totalorder %s65, %s67
    %p71 = scmp.eq.s32.totalorder %s10, 0
    %p72 = por %p70, %p71
    %p73 = scmp.ne.s32.totalorder %s65, %s67
    %p74 = scmp.eq.s32.totalorder %s15, 1
    %p75 = por %p73, %p74
    %p76 = scmp.ne.s32.totalorder %s67, %s68
    %p77 = scmp.eq.s32.totalorder %s15, 0
    %p78 = por %p76, %p77
    %p79 = scmp.ne.s32.totalorder %s67, %s68
    %p80 = scmp.eq.s32.totalorder %s16, 1
    %p81 = por %p79, %p80
    %p83 = scmp.ne.s32.totalorder %s68, %s82
    %p84 = scmp.eq.s32.totalorder %s16, 0
    %p85 = por %p83, %p84
    %s87 = sadd.s32 %s86, 1
    %p90 = scmp.eq.s32.totalorder %s10, 1
    %p91 = scmp.ne.s32.totalorder %s86, %s88
    %p92 = scmp.eq.s32.totalorder %s10, 0
    %p93 = por %p91, %p92
    %p94 = scmp.ne.s32.totalorder %s86, %s88
    %p95 = scmp.eq.s32.totalorder %s15, 1
    %p96 = por %p94, %p95
    %p97 = scmp.ne.s32.totalorder %s88, %s89
    %p98 = scmp.eq.s32.totalorder %s15, 0
    %p99 = por %p97, %p98
    %p100 = scmp.ne.s32.totalorder %s88, %s89
    %p101 = scmp.eq.s32.totalorder %s16, 1
    %p102 = por %p100, %p101
    %p104 = scmp.ne.s32.totalorder %s89, %s103
    %p105 = scmp.eq.s32.totalorder %s16, 0
    %p106 = por %p104, %p105
    %s107 = ssub.s32 %s10, %s17
    %p108 = scmp.eq.s32.totalorder %s107, 0
    %s110 = sadd.s32 %s109, 1
    %s111 = scalar_select %p108, %s109, %s110
    %p114 = pneg %p108
    %p115 = scmp.eq.s32.totalorder %s10, 1
    %p116 = por %p114, %p115
    %p117 = scmp.ne.s32.totalorder %s109, %s112
    %p118 = scmp.eq.s32.totalorder %s10, 0
    %p119 = por %p117, %p118
    %p120 = scmp.ne.s32.totalorder %s109, %s112
    %p121 = scmp.eq.s32.totalorder %s15, 1
    %p122 = por %p120, %p121
    %p123 = scmp.ne.s32.totalorder %s112, %s113
    %p124 = scmp.eq.s32.totalorder %s15, 0
    %p125 = por %p123, %p124
    %p126 = scmp.ne.s32.totalorder %s112, %s113
    %p127 = scmp.eq.s32.totalorder %s16, 1
    %p128 = por %p126, %p127
    %p130 = scmp.ne.s32.totalorder %s113, %s129
    %p131 = scmp.eq.s32.totalorder %s16, 0
    %p132 = por %p130, %p131
    %p133 = scmp.le.s32.totalorder 1, %s10
    %p134 = scmp.lt.s32.totalorder %s10, 3
    %p135 = pnand %p133, %p134
    %p136 = pneg %p135
    // Predicated region
    $region9: #{colontcn_forward.1} parent=5 // pred_check
      _
    $region10: #{colontcn_forward.1} parent=5 // pred_check_branch
      %138 = sbr.rel (%p135) target = $region12
    $region11: #{colontcn_forward.1} parent=5 // pred_region
      %s139 = ssub.s32 %s10, 1
      // Predicated region
      $region13: #{colontcn_forward.1} parent=11 // pred_check
        %p140 = pneg %p57
      $region14: #{colontcn_forward.1} parent=11 // pred_check_branch
        %142 = sbr.rel (%p140) target = $region16
      $region15: #{colontcn_forward.1} parent=11 // pred_region
        _
      $region16: #{colontcn_forward.1} parent=11 // pred_fallthru
        _
      // Predicated region
      $region17: #{colontcn_forward.1} parent=11 // pred_check
        %p143 = pneg %p78
      $region18: #{colontcn_forward.1} parent=11 // pred_check_branch
        %145 = sbr.rel (%p143) target = $region20
      $region19: #{colontcn_forward.1} parent=11 // pred_region
        _
      $region20: #{colontcn_forward.1} parent=11 // pred_fallthru
        _
      // Predicated region
      $region21: #{colontcn_forward.1} parent=11 // pred_check
        %p146 = pneg %p99
      $region22: #{colontcn_forward.1} parent=11 // pred_check_branch
        %148 = sbr.rel (%p146) target = $region24
      $region23: #{colontcn_forward.1} parent=11 // pred_region
        _
      $region24: #{colontcn_forward.1} parent=11 // pred_fallthru
        _
    $region12: #{colontcn_forward.1} parent=5 // pred_fallthru
      _
    %p149 = scmp.lt.s32.totalorder %s10, 2
    // Predicated region
    $region25: #{colontcn_forward.1} parent=5 // pred_check
      %p150 = pneg %p149
    $region26: #{colontcn_forward.1} parent=5 // pred_check_branch
      %152 = sbr.rel (%p150) target = $region28
    $region27: #{colontcn_forward.1} parent=5 // pred_region
      // Predicated region
      $region29: #{colontcn_forward.1} parent=27 // pred_check
        %p153 = pneg %p30
      $region30: #{colontcn_forward.1} parent=27 // pred_check_branch
        %155 = sbr.rel (%p153) target = $region32
      $region31: #{colontcn_forward.1} parent=27 // pred_region
        %p156 = scmp.lt.s32.totalorder %s10, 1
        %s157 = scalar_select %p156, %s10, 1
        %s158 = smul.addr %s157, 6
        %s159 = smul.addr %s158, 4
        %s160 = scalar_lea.vmem %s0, %s159
      $region32: #{colontcn_forward.1} parent=27 // pred_fallthru
        _
    $region28: #{colontcn_forward.1} parent=5 // pred_fallthru
      _
    %p161 = scmp.le.s32.totalorder 1, %s10
    %p162 = scmp.lt.s32.totalorder %s10, 3
    %p163 = pnand %p161, %p162
    %p164 = pneg %p163
    // Predicated region
    $region33: #{colontcn_forward.1} parent=5 // pred_check
      _
    $region34: #{colontcn_forward.1} parent=5 // pred_check_branch
      %166 = sbr.rel (%p163) target = $region36
    $region35: #{colontcn_forward.1} parent=5 // pred_region
      %s167 = ssub.s32 %s10, 1
      %p168 = scmp.lt.s32.totalorder %s15, 1
      %s169 = scalar_select %p168, %s15, 1
      %s170 = smul.addr %s169, 6
      %s171 = smul.addr %s170, 4
      %s172 = scalar_lea.vmem %s0, %s171
      %p173 = pneg %p36
      %p174 = pneg %p33
      %p175 = pneg %p57
      %p176 = pneg %p54
      %p177 = pneg %p78
      %p178 = pneg %p75
      %p179 = pneg %p99
      %p180 = pneg %p96
      %p181 = pneg %p125
      %p182 = pneg %p122
      %p183 = scmp.lt.s32.totalorder %s15, 1
      %s184 = scalar_select %p183, %s15, 1
      %s185 = smul.addr %s184, 3
      %s186 = smul.addr %s185, 8
      %s187 = scalar_lea.vmem %s4, %s186
      %p188 = scmp.lt.s32.totalorder %s15, 1
      %s189 = scalar_select %p188, %s15, 1
      %s190 = smul.addr %s189, 6
      %s191 = smul.addr %s190, 4
      %s192 = scalar_lea.vmem %s0, %s191
      %p193 = scmp.lt.s32.totalorder %s15, 1
      %s194 = scalar_select %p193, %s15, 1
      %s195 = smul.addr %s194, 3
      %s196 = smul.addr %s195, 8
      %s197 = scalar_lea.vmem %s4, %s196
      %v199 = vld [vmem:[%s3] sm:$0x7]
      %vm200 = vcmp.gt.f32.partialorder %v199, 0.5
      %v201 = vld [vmem:[%s192] sm:$0xff]
      %v202 = vld [vmem:[%s192 + $0x8] sm:$0xf]
      %v203 = vld [vmem:[%s192 + $0xc] sm:$0xff]
      %v204 = vld [vmem:[%s192 + $0x14] sm:$0xf]
      %v205 = vld [vmem:[%s1] sm:$0xf]
      %v206 = vld [vmem:[%s1 + $0x10] sm:$0xf]
      %v207 = vld [vmem:[%s1 + $0x20] sm:$0xf]
      %v208 = vld [vmem:[%s1 + $0x30] sm:$0xf]
      %v209 = vld [vmem:[%s2] sm:$0xff]
      %v210 = vld [vmem:[%s2 + $0x8] sm:$0xff]
      %v211 = vld [vmem:[%s2 + $0x10] sm:$0xff]
      %v212 = vld [vmem:[%s2 + $0x18] sm:$0xff]
      %214 = vset.pattern.permute.xlu0 0
      %215 = vperm.xlu0 %214, %v209
      %v216 = vpop.permute.xlu0 %215
      %219 = vset.pattern.permute.xlu0 0
      %220 = vperm.xlu0 %219, %v210
      %v221 = vpop.permute.xlu0 %220
      %224 = vset.pattern.permute.xlu0 0
      %225 = vperm.xlu0 %224, %v211
      %v226 = vpop.permute.xlu0 %225
      %229 = vset.pattern.permute.xlu0 0
      %230 = vperm.xlu0 %229, %v212
      %v231 = vpop.permute.xlu0 %230
      %v237 = vunpack.c.l.b16 %v205
      %v238 = vunpack.c.l.b16 %v206
      %v239 = vunpack.c.l.b16 %v207
      %v240 = vunpack.c.l.b16 %v208
      %v241 = vpack.c.b16 %v238, %v237
      %v242 = vpack.c.b16 %v240, %v239
      %v247 = vunpack.c.l.b16 %v201
      %v248 = vunpack.c.h.b16 %v201
      %v249 = vunpack.c.l.b16 %v202
      %v250 = vunpack.c.l.b16 %v203
      %v251 = vunpack.c.h.b16 %v203
      %v252 = vunpack.c.l.b16 %v204
      %v253 = vpack.c.b16 %v250, %v247
      %v254 = vpack.c.b16 %v251, %v248
      %v255 = vpack.c.b16 %v252, %v249
      %vm259 = vcmask 130048
      %v261 = vsel %vm259, %v241, 0
      %v264 = vsel %vm259, %v242, 0
      %266 = vmatpush.bf16.msra.mxu0 0
      %267 = vmatpush.bf16.msra.mxu0 0
      %268 = vmatpush.bf16.msra.mxu0 0
      %269 = vmatpush.bf16.msra.mxu0 0
      %270 = vmatpush.bf16.msra.mxu0 0
      %271 = vmatpush.bf16.msra.mxu0 0
      %272 = vmatpush.bf16.msra.mxu0 0
      %273 = vmatpush.bf16.msra.mxu0 %v253
      %274 = vmatmul.bf16.gmra.mxu0 %v261
      %v275 = vpop.f32.mrf.mxu0
      %v276 = vadd.f32 %v216, %v275
      %v277 = vpop.f32.mrf.mxu0
      %v278 = vadd.f32 %v221, %v277
      %279 = vmatmul.bf16.gmra.mxu0 %v264
      %v280 = vpop.f32.mrf.mxu0
      %v281 = vadd.f32 %v226, %v280
      %v282 = vpop.f32.mrf.mxu0
      %v283 = vadd.f32 %v231, %v282
      %284 = vdwg.mxu0
      %285 = vmatpush.bf16.msra.mxu0 0
      %286 = vmatpush.bf16.msra.mxu0 0
      %287 = vmatpush.bf16.msra.mxu0 0
      %288 = vmatpush.bf16.msra.mxu0 0
      %289 = vmatpush.bf16.msra.mxu0 0
      %290 = vmatpush.bf16.msra.mxu0 0
      %291 = vmatpush.bf16.msra.mxu0 0
      %292 = vmatpush.bf16.msra.mxu0 %v254
      %293 = vmatmul.bf16.gmra.mxu0 %v261
      %v294 = vpop.f32.mrf.mxu0
      %v295 = vadd.f32 %v216, %v294
      %v296 = vpop.f32.mrf.mxu0
      %v297 = vadd.f32 %v221, %v296
      %298 = vmatmul.bf16.gmra.mxu0 %v264
      %v299 = vpop.f32.mrf.mxu0
      %v300 = vadd.f32 %v226, %v299
      %v301 = vpop.f32.mrf.mxu0
      %v302 = vadd.f32 %v231, %v301
      %303 = vdwg.mxu0
      %304 = vmatpush.bf16.msra.mxu0 0
      %305 = vmatpush.bf16.msra.mxu0 0
      %306 = vmatpush.bf16.msra.mxu0 0
      %307 = vmatpush.bf16.msra.mxu0 0
      %308 = vmatpush.bf16.msra.mxu0 0
      %309 = vmatpush.bf16.msra.mxu0 0
      %310 = vmatpush.bf16.msra.mxu0 0
      %311 = vmatpush.bf16.msra.mxu0 %v255
      %312 = vmatmul.bf16.gmra.mxu0 %v261
      %v313 = vpop.f32.mrf.mxu0
      %v314 = vadd.f32 %v216, %v313
      %v315 = vpop.f32.mrf.mxu0
      %v316 = vadd.f32 %v221, %v315
      %317 = vmatmul.bf16.gmra.mxu0 %v264
      %v318 = vpop.f32.mrf.mxu0
      %v319 = vadd.f32 %v226, %v318
      %v320 = vpop.f32.mrf.mxu0
      %v321 = vadd.f32 %v231, %v320
      %322 = vdwg.mxu0
      %v323 = vmax.f32 %v276, 0.0
      %v324 = vmax.f32 %v295, 0.0
      %v325 = vmax.f32 %v314, 0.0
      %v326 = vmax.f32 %v278, 0.0
      %v327 = vmax.f32 %v297, 0.0
      %v328 = vmax.f32 %v316, 0.0
      %v329 = vmax.f32 %v281, 0.0
      %v330 = vmax.f32 %v300, 0.0
      %v331 = vmax.f32 %v319, 0.0
      %v332 = vmax.f32 %v283, 0.0
      %v333 = vmax.f32 %v302, 0.0
      %v334 = vmax.f32 %v321, 0.0
      %v335 = vsel %vm200, 1, 0
      %v336 = vperm.slane %v335, 0
      %v337 = vperm.slane %v335, 1
      %v338 = vperm.slane %v335, 2
      %vm339 = vcmp.eq.s32.totalorder %v336, 1
      %vm340 = vcmp.eq.s32.totalorder %v337, 1
      %vm341 = vcmp.eq.s32.totalorder %v338, 1
      %v342 = vsel %vm339, %v323, 0.0
      %v343 = vsel %vm340, %v324, 0.0
      %v344 = vsel %vm341, %v325, 0.0
      %v345 = vsel %vm339, %v326, 0.0
      %v346 = vsel %vm340, %v327, 0.0
      %v347 = vsel %vm341, %v328, 0.0
      %v348 = vsel %vm339, %v329, 0.0
      %v349 = vsel %vm340, %v330, 0.0
      %v350 = vsel %vm341, %v331, 0.0
      %v351 = vsel %vm339, %v332, 0.0
      %v352 = vsel %vm340, %v333, 0.0
      %v353 = vsel %vm341, %v334, 0.0
      %v354 = vpack.c.bf16 %v343, %v342
      %v355 = vpack.c.bf16 %v344, %v344
      %v356 = vpack.c.bf16 %v346, %v345
      %v357 = vpack.c.bf16 %v347, %v347
      %v358 = vpack.c.bf16 %v349, %v348
      %v359 = vpack.c.bf16 %v350, %v350
      %v360 = vpack.c.bf16 %v352, %v351
      %v361 = vpack.c.bf16 %v353, %v353
      %370 = vrot.lane.b32.xlu0 %v354, 3
      %v371 = vpop.permute.xlu0 %370
      %372 = vrot.lane.b32.xlu0 %v355, 3
      %v373 = vpop.permute.xlu0 %372
      %374 = vrot.lane.b32.xlu0 %v356, 3
      %v375 = vpop.permute.xlu0 %374
      %376 = vrot.lane.b32.xlu0 %v357, 3
      %v377 = vpop.permute.xlu0 %376
      %378 = vrot.lane.b32.xlu0 %v358, 3
      %v379 = vpop.permute.xlu0 %378
      %380 = vrot.lane.b32.xlu0 %v359, 3
      %v381 = vpop.permute.xlu0 %380
      %382 = vrot.lane.b32.xlu0 %v360, 3
      %v383 = vpop.permute.xlu0 %382
      %384 = vrot.lane.b32.xlu0 %v361, 3
      %v385 = vpop.permute.xlu0 %384
      %v386 = vrot.slane %v371, 4
      %v387 = vrot.slane %v375, 4
      %v388 = vrot.slane %v379, 4
      %v389 = vrot.slane %v383, 4
      %vm390 = vcmask 23552
      %v391 = vsel %vm390, %v386, %v371
      %v392 = vsel %vm390, %v386, %v373
      %v393 = vsel %vm390, %v387, %v375
      %v394 = vsel %vm390, %v387, %v377
      %v395 = vsel %vm390, %v388, %v379
      %v396 = vsel %vm390, %v388, %v381
      %v397 = vsel %vm390, %v389, %v383
      %v398 = vsel %vm390, %v389, %v385
      %vm407 = vcmask 1043480
      %vm408 = vcmask 1047556
      %vm409 = vmor %vm408, %vm407
      %410 = vst.msk [vmem:[#allocation2] sm:$0xff] %vm409, %v391
      %411 = vst [vmem:[#allocation2 + $0x8] sm:$0xf] %v392
      %412 = vst.msk [vmem:[#allocation2 + $0xc] sm:$0xff] %vm409, %v393
      %413 = vst [vmem:[#allocation2 + $0x14] sm:$0xf] %v394
      %414 = vst.msk [vmem:[#allocation2 + $0x18] sm:$0xff] %vm409, %v395
      %415 = vst [vmem:[#allocation2 + $0x20] sm:$0xf] %v396
      %416 = vst.msk [vmem:[#allocation2 + $0x24] sm:$0xff] %vm409, %v397
      %417 = vst [vmem:[#allocation2 + $0x2c] sm:$0xf] %v398
      %418 = vrot.lane.b32.xlu0 %v354, 2
      %v419 = vpop.permute.xlu0 %418
      %420 = vrot.lane.b32.xlu0 %v355, 2
      %v421 = vpop.permute.xlu0 %420
      %422 = vrot.lane.b32.xlu0 %v356, 2
      %v423 = vpop.permute.xlu0 %422
      %424 = vrot.lane.b32.xlu0 %v357, 2
      %v425 = vpop.permute.xlu0 %424
      %426 = vrot.lane.b32.xlu0 %v358, 2
      %v427 = vpop.permute.xlu0 %426
      %428 = vrot.lane.b32.xlu0 %v359, 2
      %v429 = vpop.permute.xlu0 %428
      %430 = vrot.lane.b32.xlu0 %v360, 2
      %v431 = vpop.permute.xlu0 %430
      %432 = vrot.lane.b32.xlu0 %v361, 2
      %v433 = vpop.permute.xlu0 %432
      %v434 = vrot.slane %v419, 4
      %v435 = vrot.slane %v423, 4
      %v436 = vrot.slane %v427, 4
      %v437 = vrot.slane %v431, 4
      %vm438 = vcmask 15360
      %v439 = vsel %vm438, %v434, %v419
      %v440 = vsel %vm438, %v434, %v421
      %v441 = vsel %vm438, %v435, %v423
      %v442 = vsel %vm438, %v435, %v425
      %v443 = vsel %vm438, %v436, %v427
      %v444 = vsel %vm438, %v436, %v429
      %v445 = vsel %vm438, %v437, %v431
      %v446 = vsel %vm438, %v437, %v433
      %vm455 = vcmask 1043472
      %vm456 = vmor %vm408, %vm455
      %457 = vst.msk [vmem:[#allocation2 + $0x30] sm:$0xff] %vm456, %v439
      %458 = vst [vmem:[#allocation2 + $0x38] sm:$0xf] %v440
      %459 = vst.msk [vmem:[#allocation2 + $0x3c] sm:$0xff] %vm456, %v441
      %460 = vst [vmem:[#allocation2 + $0x44] sm:$0xf] %v442
      %461 = vst.msk [vmem:[#allocation2 + $0x48] sm:$0xff] %vm456, %v443
      %462 = vst [vmem:[#allocation2 + $0x50] sm:$0xf] %v444
      %463 = vst.msk [vmem:[#allocation2 + $0x54] sm:$0xff] %vm456, %v445
      %464 = vst [vmem:[#allocation2 + $0x5c] sm:$0xf] %v446
      %465 = vrot.lane.b32.xlu0 %v354, 1
      %v466 = vpop.permute.xlu0 %465
      %467 = vrot.lane.b32.xlu0 %v355, 1
      %v468 = vpop.permute.xlu0 %467
      %469 = vrot.lane.b32.xlu0 %v356, 1
      %v470 = vpop.permute.xlu0 %469
      %471 = vrot.lane.b32.xlu0 %v357, 1
      %v472 = vpop.permute.xlu0 %471
      %473 = vrot.lane.b32.xlu0 %v358, 1
      %v474 = vpop.permute.xlu0 %473
      %475 = vrot.lane.b32.xlu0 %v359, 1
      %v476 = vpop.permute.xlu0 %475
      %477 = vrot.lane.b32.xlu0 %v360, 1
      %v478 = vpop.permute.xlu0 %477
      %479 = vrot.lane.b32.xlu0 %v361, 1
      %v480 = vpop.permute.xlu0 %479
      %v481 = vrot.slane %v466, 4
      %v482 = vrot.slane %v470, 4
      %v483 = vrot.slane %v474, 4
      %v484 = vrot.slane %v478, 4
      %vm485 = vcmask 7168
      %v486 = vsel %vm485, %v481, %v466
      %v487 = vsel %vm485, %v481, %v468
      %v488 = vsel %vm485, %v482, %v470
      %v489 = vsel %vm485, %v482, %v472
      %v490 = vsel %vm485, %v483, %v474
      %v491 = vsel %vm485, %v483, %v476
      %v492 = vsel %vm485, %v484, %v478
      %v493 = vsel %vm485, %v484, %v480
      %vm502 = vcmask 1043464
      %vm503 = vmor %vm408, %vm502
      %504 = vst.msk [vmem:[#allocation2 + $0x60] sm:$0xff] %vm503, %v486
      %505 = vst [vmem:[#allocation2 + $0x68] sm:$0xf] %v487
      %506 = vst.msk [vmem:[#allocation2 + $0x6c] sm:$0xff] %vm503, %v488
      %507 = vst [vmem:[#allocation2 + $0x74] sm:$0xf] %v489
      %508 = vst.msk [vmem:[#allocation2 + $0x78] sm:$0xff] %vm503, %v490
      %509 = vst [vmem:[#allocation2 + $0x80] sm:$0xf] %v491
      %510 = vst.msk [vmem:[#allocation2 + $0x84] sm:$0xff] %vm503, %v492
      %511 = vst [vmem:[#allocation2 + $0x8c] sm:$0xf] %v493
      %512 = vst [vmem:[#allocation2 + $0x90] sm:$0xff] %v354
      %513 = vst [vmem:[#allocation2 + $0x98] sm:$0xf] %v355
      %514 = vst [vmem:[#allocation2 + $0x9c] sm:$0xff] %v356
      %515 = vst [vmem:[#allocation2 + $0xa4] sm:$0xf] %v357
      %516 = vst [vmem:[#allocation2 + $0xa8] sm:$0xff] %v358
      %517 = vst [vmem:[#allocation2 + $0xb0] sm:$0xf] %v359
      %518 = vst [vmem:[#allocation2 + $0xb4] sm:$0xff] %v360
      %519 = vst [vmem:[#allocation2 + $0xbc] sm:$0xf] %v361
      %520 = vrot.lane.b32.xlu0 %v354, 127
      %v521 = vpop.permute.xlu0 %520
      %522 = vrot.lane.b32.xlu0 %v355, 127
      %v523 = vpop.permute.xlu0 %522
      %524 = vrot.lane.b32.xlu0 %v356, 127
      %v525 = vpop.permute.xlu0 %524
      %526 = vrot.lane.b32.xlu0 %v357, 127
      %v527 = vpop.permute.xlu0 %526
      %528 = vrot.lane.b32.xlu0 %v358, 127
      %v529 = vpop.permute.xlu0 %528
      %530 = vrot.lane.b32.xlu0 %v359, 127
      %v531 = vpop.permute.xlu0 %530
      %532 = vrot.lane.b32.xlu0 %v360, 127
      %v533 = vpop.permute.xlu0 %532
      %534 = vrot.lane.b32.xlu0 %v361, 127
      %v535 = vpop.permute.xlu0 %534
      %v536 = vrot.slane %v521, 4
      %v537 = vrot.slane %v523, 4
      %v538 = vrot.slane %v525, 4
      %v539 = vrot.slane %v527, 4
      %v540 = vrot.slane %v529, 4
      %v541 = vrot.slane %v531, 4
      %v542 = vrot.slane %v533, 4
      %v543 = vrot.slane %v535, 4
      %vm544 = vcmask 1043456
      %v545 = vsel %vm544, %v536, %v537
      %vm546 = vcmask 1039360
      %v547 = vsel %vm546, %v521, %v545
      %v548 = vsel %vm544, %v538, %v539
      %v549 = vsel %vm546, %v525, %v548
      %v550 = vsel %vm544, %v540, %v541
      %v551 = vsel %vm546, %v529, %v550
      %v552 = vsel %vm544, %v542, %v543
      %v553 = vsel %vm546, %v533, %v552
      %562 = vst [vmem:[#allocation2 + $0xc0] sm:$0xff] %v547
      %vm563 = vcmask 1035264
      %564 = vst.msk [vmem:[#allocation2 + $0xc8] sm:$0xf] %vm563, %v523
      %565 = vst [vmem:[#allocation2 + $0xcc] sm:$0xff] %v549
      %566 = vst.msk [vmem:[#allocation2 + $0xd4] sm:$0xf] %vm563, %v527
      %567 = vst [vmem:[#allocation2 + $0xd8] sm:$0xff] %v551
      %568 = vst.msk [vmem:[#allocation2 + $0xe0] sm:$0xf] %vm563, %v531
      %569 = vst [vmem:[#allocation2 + $0xe4] sm:$0xff] %v553
      %570 = vst.msk [vmem:[#allocation2 + $0xec] sm:$0xf] %vm563, %v535
      %571 = vrot.lane.b32.xlu0 %v354, 126
      %v572 = vpop.permute.xlu0 %571
      %573 = vrot.lane.b32.xlu0 %v355, 126
      %v574 = vpop.permute.xlu0 %573
      %575 = vrot.lane.b32.xlu0 %v356, 126
      %v576 = vpop.permute.xlu0 %575
      %577 = vrot.lane.b32.xlu0 %v357, 126
      %v578 = vpop.permute.xlu0 %577
      %579 = vrot.lane.b32.xlu0 %v358, 126
      %v580 = vpop.permute.xlu0 %579
      %581 = vrot.lane.b32.xlu0 %v359, 126
      %v582 = vpop.permute.xlu0 %581
      %583 = vrot.lane.b32.xlu0 %v360, 126
      %v584 = vpop.permute.xlu0 %583
      %585 = vrot.lane.b32.xlu0 %v361, 126
      %v586 = vpop.permute.xlu0 %585
      %v587 = vrot.slane %v572, 4
      %v588 = vrot.slane %v574, 4
      %v589 = vrot.slane %v576, 4
      %v590 = vrot.slane %v578, 4
      %v591 = vrot.slane %v580, 4
      %v592 = vrot.slane %v582, 4
      %v593 = vrot.slane %v584, 4
      %v594 = vrot.slane %v586, 4
      %v595 = vsel %vm544, %v587, %v588
      %vm596 = vcmask 1031168
      %v597 = vsel %vm596, %v572, %v595
      %v598 = vsel %vm544, %v589, %v590
      %v599 = vsel %vm596, %v576, %v598
      %v600 = vsel %vm544, %v591, %v592
      %v601 = vsel %vm596, %v580, %v600
      %v602 = vsel %vm544, %v593, %v594
      %v603 = vsel %vm596, %v584, %v602
      %612 = vst [vmem:[#allocation2 + $0xf0] sm:$0xff] %v597
      %vm613 = vcmask 1027072
      %614 = vst.msk [vmem:[#allocation2 + $0xf8] sm:$0xf] %vm613, %v574
      %615 = vst [vmem:[#allocation2 + $0xfc] sm:$0xff] %v599
      %616 = vst.msk [vmem:[#allocation2 + $0x104] sm:$0xf] %vm613, %v578
      %617 = vst [vmem:[#allocation2 + $0x108] sm:$0xff] %v601
      %618 = vst.msk [vmem:[#allocation2 + $0x110] sm:$0xf] %vm613, %v582
      %619 = vst [vmem:[#allocation2 + $0x114] sm:$0xff] %v603
      %620 = vst.msk [vmem:[#allocation2 + $0x11c] sm:$0xf] %vm613, %v586
      %621 = vrot.lane.b32.xlu0 %v354, 125
      %v622 = vpop.permute.xlu0 %621
      %623 = vrot.lane.b32.xlu0 %v355, 125
      %v624 = vpop.permute.xlu0 %623
      %625 = vrot.lane.b32.xlu0 %v356, 125
      %v626 = vpop.permute.xlu0 %625
      %627 = vrot.lane.b32.xlu0 %v357, 125
      %v628 = vpop.permute.xlu0 %627
      %629 = vrot.lane.b32.xlu0 %v358, 125
      %v630 = vpop.permute.xlu0 %629
      %631 = vrot.lane.b32.xlu0 %v359, 125
      %v632 = vpop.permute.xlu0 %631
      %633 = vrot.lane.b32.xlu0 %v360, 125
      %v634 = vpop.permute.xlu0 %633
      %635 = vrot.lane.b32.xlu0 %v361, 125
      %v636 = vpop.permute.xlu0 %635
      %v637 = vrot.slane %v622, 4
      %v638 = vrot.slane %v624, 4
      %v639 = vrot.slane %v626, 4
      %v640 = vrot.slane %v628, 4
      %v641 = vrot.slane %v630, 4
      %v642 = vrot.slane %v632, 4
      %v643 = vrot.slane %v634, 4
      %v644 = vrot.slane %v636, 4
      %v645 = vsel %vm544, %v637, %v638
      %vm646 = vcmask 1022976
      %v647 = vsel %vm646, %v622, %v645
      %v648 = vsel %vm544, %v639, %v640
      %v649 = vsel %vm646, %v626, %v648
      %v650 = vsel %vm544, %v641, %v642
      %v651 = vsel %vm646, %v630, %v650
      %v652 = vsel %vm544, %v643, %v644
      %v653 = vsel %vm646, %v634, %v652
      %662 = vst [vmem:[#allocation2 + $0x120] sm:$0xff] %v647
      %vm663 = vcmask 1018880
      %664 = vst.msk [vmem:[#allocation2 + $0x128] sm:$0xf] %vm663, %v624
      %665 = vst [vmem:[#allocation2 + $0x12c] sm:$0xff] %v649
      %666 = vst.msk [vmem:[#allocation2 + $0x134] sm:$0xf] %vm663, %v628
      %667 = vst [vmem:[#allocation2 + $0x138] sm:$0xff] %v651
      %668 = vst.msk [vmem:[#allocation2 + $0x140] sm:$0xf] %vm663, %v632
      %669 = vst [vmem:[#allocation2 + $0x144] sm:$0xff] %v653
      %670 = vst.msk [vmem:[#allocation2 + $0x14c] sm:$0xf] %vm663, %v636
      %v671 = vld [vmem:[%s1 + $0x40] sm:$0xff]
      %v672 = vld [vmem:[%s1 + $0x50] sm:$0xff]
      %v673 = vld [vmem:[%s1 + $0x60] sm:$0xff]
      %v674 = vld [vmem:[%s1 + $0x70] sm:$0xff]
      %v675 = vld [vmem:[#allocation2] sm:$0xff]
      %v676 = vld [vmem:[#allocation2 + $0x8] sm:$0xf]
      %v677 = vld [vmem:[#allocation2 + $0xc] sm:$0xff]
      %v678 = vld [vmem:[#allocation2 + $0x14] sm:$0xf]
      %v679 = vld [vmem:[#allocation2 + $0x18] sm:$0xff]
      %v680 = vld [vmem:[#allocation2 + $0x20] sm:$0xf]
      %v681 = vld [vmem:[#allocation2 + $0x24] sm:$0xff]
      %v682 = vld [vmem:[#allocation2 + $0x2c] sm:$0xf]
      %v683 = vld [vmem:[#allocation2 + $0x30] sm:$0xff]
      %v684 = vld [vmem:[#allocation2 + $0x38] sm:$0xf]
      %v685 = vld [vmem:[#allocation2 + $0x3c] sm:$0xff]
      %v686 = vld [vmem:[#allocation2 + $0x44] sm:$0xf]
      %v687 = vld [vmem:[#allocation2 + $0x48] sm:$0xff]
      %v688 = vld [vmem:[#allocation2 + $0x50] sm:$0xf]
      %v689 = vld [vmem:[#allocation2 + $0x54] sm:$0xff]
      %v690 = vld [vmem:[#allocation2 + $0x5c] sm:$0xf]
      %v691 = vld [vmem:[#allocation2 + $0x60] sm:$0xff]
      %v692 = vld [vmem:[#allocation2 + $0x68] sm:$0xf]
      %v693 = vld [vmem:[#allocation2 + $0x6c] sm:$0xff]
      %v694 = vld [vmem:[#allocation2 + $0x74] sm:$0xf]
      %v695 = vld [vmem:[#allocation2 + $0x78] sm:$0xff]
      %v696 = vld [vmem:[#allocation2 + $0x80] sm:$0xf]
      %v697 = vld [vmem:[#allocation2 + $0x84] sm:$0xff]
      %v698 = vld [vmem:[#allocation2 + $0x8c] sm:$0xf]
      %v699 = vld [vmem:[#allocation2 + $0x90] sm:$0xff]
      %v700 = vld [vmem:[#allocation2 + $0x98] sm:$0xf]
      %v701 = vld [vmem:[#allocation2 + $0x9c] sm:$0xff]
      %v702 = vld [vmem:[#allocation2 + $0xa4] sm:$0xf]
      %v703 = vld [vmem:[#allocation2 + $0xa8] sm:$0xff]
      %v704 = vld [vmem:[#allocation2 + $0xb0] sm:$0xf]
      %v705 = vld [vmem:[#allocation2 + $0xb4] sm:$0xff]
      %v706 = vld [vmem:[#allocation2 + $0xbc] sm:$0xf]
      %v707 = vld [vmem:[#allocation2 + $0xc0] sm:$0xff]
      %v708 = vld [vmem:[#allocation2 + $0xc8] sm:$0xf]
      %v709 = vld [vmem:[#allocation2 + $0xcc] sm:$0xff]
      %v710 = vld [vmem:[#allocation2 + $0xd4] sm:$0xf]
      %v711 = vld [vmem:[#allocation2 + $0xd8] sm:$0xff]
      %v712 = vld [vmem:[#allocation2 + $0xe0] sm:$0xf]
      %v713 = vld [vmem:[#allocation2 + $0xe4] sm:$0xff]
      %v714 = vld [vmem:[#allocation2 + $0xec] sm:$0xf]
      %v715 = vld [vmem:[#allocation2 + $0xf0] sm:$0xff]
      %v716 = vld [vmem:[#allocation2 + $0xf8] sm:$0xf]
      %v717 = vld [vmem:[#allocation2 + $0xfc] sm:$0xff]
      %v718 = vld [vmem:[#allocation2 + $0x104] sm:$0xf]
      %v719 = vld [vmem:[#allocation2 + $0x108] sm:$0xff]
      %v720 = vld [vmem:[#allocation2 + $0x110] sm:$0xf]
      %v721 = vld [vmem:[#allocation2 + $0x114] sm:$0xff]
      %v722 = vld [vmem:[#allocation2 + $0x11c] sm:$0xf]
      %v723 = vld [vmem:[#allocation2 + $0x120] sm:$0xff]
      %v724 = vld [vmem:[#allocation2 + $0x128] sm:$0xf]
      %v725 = vld [vmem:[#allocation2 + $0x12c] sm:$0xff]
      %v726 = vld [vmem:[#allocation2 + $0x134] sm:$0xf]
      %v727 = vld [vmem:[#allocation2 + $0x138] sm:$0xff]
      %v728 = vld [vmem:[#allocation2 + $0x140] sm:$0xf]
      %v729 = vld [vmem:[#allocation2 + $0x144] sm:$0xff]
      %v730 = vld [vmem:[#allocation2 + $0x14c] sm:$0xf]
      %v731 = vld [vmem:[%s2 + $0x20] sm:$0xff]
      %v732 = vld [vmem:[%s2 + $0x28] sm:$0xff]
      %v733 = vld [vmem:[%s2 + $0x30] sm:$0xff]
      %v734 = vld [vmem:[%s2 + $0x38] sm:$0xff]
      %736 = vset.pattern.permute.xlu0 0
      %737 = vperm.xlu0 %736, %v731
      %v738 = vpop.permute.xlu0 %737
      %741 = vset.pattern.permute.xlu0 0
      %742 = vperm.xlu0 %741, %v732
      %v743 = vpop.permute.xlu0 %742
      %746 = vset.pattern.permute.xlu0 0
      %747 = vperm.xlu0 %746, %v733
      %v748 = vpop.permute.xlu0 %747
      %751 = vset.pattern.permute.xlu0 0
      %752 = vperm.xlu0 %751, %v734
      %v753 = vpop.permute.xlu0 %752
      %v759 = vunpack.c.l.b16 %v671
      %v760 = vunpack.c.h.b16 %v671
      %v761 = vunpack.c.l.b16 %v672
      %v762 = vunpack.c.h.b16 %v672
      %v763 = vunpack.c.l.b16 %v673
      %v764 = vunpack.c.h.b16 %v673
      %v765 = vunpack.c.l.b16 %v674
      %v766 = vunpack.c.h.b16 %v674
      %v767 = vpack.c.b16 %v761, %v759
      %v768 = vpack.c.b16 %v762, %v760
      %v769 = vpack.c.b16 %v765, %v763
      %v770 = vpack.c.b16 %v766, %v764
      %v829 = vunpack.c.l.b16 %v675
      %v830 = vunpack.c.h.b16 %v675
      %v831 = vunpack.c.l.b16 %v676
      %v832 = vunpack.c.l.b16 %v677
      %v833 = vunpack.c.h.b16 %v677
      %v834 = vunpack.c.l.b16 %v678
      %v835 = vunpack.c.l.b16 %v679
      %v836 = vunpack.c.h.b16 %v679
      %v837 = vunpack.c.l.b16 %v680
      %v838 = vunpack.c.l.b16 %v681
      %v839 = vunpack.c.h.b16 %v681
      %v840 = vunpack.c.l.b16 %v682
      %v841 = vunpack.c.l.b16 %v683
      %v842 = vunpack.c.h.b16 %v683
      %v843 = vunpack.c.l.b16 %v684
      %v844 = vunpack.c.l.b16 %v685
      %v845 = vunpack.c.h.b16 %v685
      %v846 = vunpack.c.l.b16 %v686
      %v847 = vunpack.c.l.b16 %v687
      %v848 = vunpack.c.h.b16 %v687
      %v849 = vunpack.c.l.b16 %v688
      %v850 = vunpack.c.l.b16 %v689
      %v851 = vunpack.c.h.b16 %v689
      %v852 = vunpack.c.l.b16 %v690
      %v853 = vunpack.c.l.b16 %v691
      %v854 = vunpack.c.h.b16 %v691
      %v855 = vunpack.c.l.b16 %v692
      %v856 = vunpack.c.l.b16 %v693
      %v857 = vunpack.c.h.b16 %v693
      %v858 = vunpack.c.l.b16 %v694
      %v859 = vunpack.c.l.b16 %v695
      %v860 = vunpack.c.h.b16 %v695
      %v861 = vunpack.c.l.b16 %v696
      %v862 = vunpack.c.l.b16 %v697
      %v863 = vunpack.c.h.b16 %v697
      %v864 = vunpack.c.l.b16 %v698
      %v865 = vunpack.c.l.b16 %v699
      %v866 = vunpack.c.h.b16 %v699
      %v867 = vunpack.c.l.b16 %v700
      %v868 = vunpack.c.l.b16 %v701
      %v869 = vunpack.c.h.b16 %v701
      %v870 = vunpack.c.l.b16 %v702
      %v871 = vunpack.c.l.b16 %v703
      %v872 = vunpack.c.h.b16 %v703
      %v873 = vunpack.c.l.b16 %v704
      %v874 = vunpack.c.l.b16 %v705
      %v875 = vunpack.c.h.b16 %v705
      %v876 = vunpack.c.l.b16 %v706
      %v877 = vunpack.c.l.b16 %v707
      %v878 = vunpack.c.h.b16 %v707
      %v879 = vunpack.c.l.b16 %v708
      %v880 = vunpack.c.l.b16 %v709
      %v881 = vunpack.c.h.b16 %v709
      %v882 = vunpack.c.l.b16 %v710
      %v883 = vunpack.c.l.b16 %v711
      %v884 = vunpack.c.h.b16 %v711
      %v885 = vunpack.c.l.b16 %v712
      %v886 = vunpack.c.l.b16 %v713
      %v887 = vunpack.c.h.b16 %v713
      %v888 = vunpack.c.l.b16 %v714
      %v889 = vunpack.c.l.b16 %v715
      %v890 = vunpack.c.h.b16 %v715
      %v891 = vunpack.c.l.b16 %v716
      %v892 = vunpack.c.l.b16 %v717
      %v893 = vunpack.c.h.b16 %v717
      %v894 = vunpack.c.l.b16 %v718
      %v895 = vunpack.c.l.b16 %v719
      %v896 = vunpack.c.h.b16 %v719
      %v897 = vunpack.c.l.b16 %v720
      %v898 = vunpack.c.l.b16 %v721
      %v899 = vunpack.c.h.b16 %v721
      %v900 = vunpack.c.l.b16 %v722
      %v901 = vunpack.c.l.b16 %v723
      %v902 = vunpack.c.h.b16 %v723
      %v903 = vunpack.c.l.b16 %v724
      %v904 = vunpack.c.l.b16 %v725
      %v905 = vunpack.c.h.b16 %v725
      %v906 = vunpack.c.l.b16 %v726
      %v907 = vunpack.c.l.b16 %v727
      %v908 = vunpack.c.h.b16 %v727
      %v909 = vunpack.c.l.b16 %v728
      %v910 = vunpack.c.l.b16 %v729
      %v911 = vunpack.c.h.b16 %v729
      %v912 = vunpack.c.l.b16 %v730
      %v913 = vpack.c.b16 %v832, %v829
      %v914 = vpack.c.b16 %v833, %v830
      %v915 = vpack.c.b16 %v834, %v831
      %v916 = vpack.c.b16 %v838, %v835
      %v917 = vpack.c.b16 %v839, %v836
      %v918 = vpack.c.b16 %v840, %v837
      %v919 = vpack.c.b16 %v844, %v841
      %v920 = vpack.c.b16 %v845, %v842
      %v921 = vpack.c.b16 %v846, %v843
      %v922 = vpack.c.b16 %v850, %v847
      %v923 = vpack.c.b16 %v851, %v848
      %v924 = vpack.c.b16 %v852, %v849
      %v925 = vpack.c.b16 %v856, %v853
      %v926 = vpack.c.b16 %v857, %v854
      %v927 = vpack.c.b16 %v858, %v855
      %v928 = vpack.c.b16 %v862, %v859
      %v929 = vpack.c.b16 %v863, %v860
      %v930 = vpack.c.b16 %v864, %v861
      %v931 = vpack.c.b16 %v868, %v865
      %v932 = vpack.c.b16 %v869, %v866
      %v933 = vpack.c.b16 %v870, %v867
      %v934 = vpack.c.b16 %v874, %v871
      %v935 = vpack.c.b16 %v875, %v872
      %v936 = vpack.c.b16 %v876, %v873
      %v937 = vpack.c.b16 %v880, %v877
      %v938 = vpack.c.b16 %v881, %v878
      %v939 = vpack.c.b16 %v882, %v879
      %v940 = vpack.c.b16 %v886, %v883
      %v941 = vpack.c.b16 %v887, %v884
      %v942 = vpack.c.b16 %v888, %v885
      %v943 = vpack.c.b16 %v892, %v889
      %v944 = vpack.c.b16 %v893, %v890
      %v945 = vpack.c.b16 %v894, %v891
      %v946 = vpack.c.b16 %v898, %v895
      %v947 = vpack.c.b16 %v899, %v896
      %v948 = vpack.c.b16 %v900, %v897
      %v949 = vpack.c.b16 %v904, %v901
      %v950 = vpack.c.b16 %v905, %v902
      %v951 = vpack.c.b16 %v906, %v903
      %v952 = vpack.c.b16 %v910, %v907
      %v953 = vpack.c.b16 %v911, %v908
      %v954 = vpack.c.b16 %v912, %v909
      %vm997 = vcmask 785408
      %v999 = vsel %vm997, %v768, 0
      %v1002 = vsel %vm997, %v770, 0
      %1004 = vmatpush.bf16.msra.mxu0 %v934
      %1005 = vmatpush.bf16.msra.mxu0 %v931
      %1006 = vmatpush.bf16.msra.mxu0 %v928
      %1007 = vmatpush.bf16.msra.mxu0 %v925
      %1008 = vmatpush.bf16.msra.mxu0 %v922
      %1009 = vmatpush.bf16.msra.mxu0 %v919
      %1010 = vmatpush.bf16.msra.mxu0 %v916
      %1011 = vmatpush.bf16.msra.mxu0 %v913
      %1012 = vmatmul.bf16.gmra.mxu0 %v767
      %v1013 = vpop.f32.mrf.mxu0
      %v1014 = vadd.f32 %v738, %v1013
      %v1015 = vpop.f32.mrf.mxu0
      %v1016 = vadd.f32 %v743, %v1015
      %1017 = vmatmul.bf16.gmra.mxu0 %v769
      %v1018 = vpop.f32.mrf.mxu0
      %v1019 = vadd.f32 %v748, %v1018
      %v1020 = vpop.f32.mrf.mxu0
      %v1021 = vadd.f32 %v753, %v1020
      %1022 = vdwg.mxu0
      %1023 = vmatpush.bf16.msra.mxu0 0
      %1024 = vmatpush.bf16.msra.mxu0 0
      %1025 = vmatpush.bf16.msra.mxu0 %v952
      %1026 = vmatpush.bf16.msra.mxu0 %v949
      %1027 = vmatpush.bf16.msra.mxu0 %v946
      %1028 = vmatpush.bf16.msra.mxu0 %v943
      %1029 = vmatpush.bf16.msra.mxu0 %v940
      %1030 = vmatpush.bf16.msra.mxu0 %v937
      %1031 = vmatmul.bf16.gmra.mxu0 %v999
      %v1032 = vpop.f32.mrf.mxu0
      %v1033 = vadd.f32 %v1014, %v1032
      %v1034 = vpop.f32.mrf.mxu0
      %v1035 = vadd.f32 %v1016, %v1034
      %1036 = vmatmul.bf16.gmra.mxu0 %v1002
      %v1037 = vpop.f32.mrf.mxu0
      %v1038 = vadd.f32 %v1019, %v1037
      %v1039 = vpop.f32.mrf.mxu0
      %v1040 = vadd.f32 %v1021, %v1039
      %1041 = vdwg.mxu0
      %1042 = vmatpush.bf16.msra.mxu0 %v935
      %1043 = vmatpush.bf16.msra.mxu0 %v932
      %1044 = vmatpush.bf16.msra.mxu0 %v929
      %1045 = vmatpush.bf16.msra.mxu0 %v926
      %1046 = vmatpush.bf16.msra.mxu0 %v923
      %1047 = vmatpush.bf16.msra.mxu0 %v920
      %1048 = vmatpush.bf16.msra.mxu0 %v917
      %1049 = vmatpush.bf16.msra.mxu0 %v914
      %1050 = vmatmul.bf16.gmra.mxu0 %v767
      %v1051 = vpop.f32.mrf.mxu0
      %v1052 = vadd.f32 %v738, %v1051
      %v1053 = vpop.f32.mrf.mxu0
      %v1054 = vadd.f32 %v743, %v1053
      %1055 = vmatmul.bf16.gmra.mxu0 %v769
      %v1056 = vpop.f32.mrf.mxu0
      %v1057 = vadd.f32 %v748, %v1056
      %v1058 = vpop.f32.mrf.mxu0
      %v1059 = vadd.f32 %v753, %v1058
      %1060 = vdwg.mxu0
      %1061 = vmatpush.bf16.msra.mxu0 0
      %1062 = vmatpush.bf16.msra.mxu0 0
      %1063 = vmatpush.bf16.msra.mxu0 %v953
      %1064 = vmatpush.bf16.msra.mxu0 %v950
      %1065 = vmatpush.bf16.msra.mxu0 %v947
      %1066 = vmatpush.bf16.msra.mxu0 %v944
      %1067 = vmatpush.bf16.msra.mxu0 %v941
      %1068 = vmatpush.bf16.msra.mxu0 %v938
      %1069 = vmatmul.bf16.gmra.mxu0 %v999
      %v1070 = vpop.f32.mrf.mxu0
      %v1071 = vadd.f32 %v1052, %v1070
      %v1072 = vpop.f32.mrf.mxu0
      %v1073 = vadd.f32 %v1054, %v1072
      %1074 = vmatmul.bf16.gmra.mxu0 %v1002
      %v1075 = vpop.f32.mrf.mxu0
      %v1076 = vadd.f32 %v1057, %v1075
      %v1077 = vpop.f32.mrf.mxu0
      %v1078 = vadd.f32 %v1059, %v1077
      %1079 = vdwg.mxu0
      %1080 = vmatpush.bf16.msra.mxu0 %v936
      %1081 = vmatpush.bf16.msra.mxu0 %v933
      %1082 = vmatpush.bf16.msra.mxu0 %v930
      %1083 = vmatpush.bf16.msra.mxu0 %v927
      %1084 = vmatpush.bf16.msra.mxu0 %v924
      %1085 = vmatpush.bf16.msra.mxu0 %v921
      %1086 = vmatpush.bf16.msra.mxu0 %v918
      %1087 = vmatpush.bf16.msra.mxu0 %v915
      %1088 = vmatmul.bf16.gmra.mxu0 %v767
      %v1089 = vpop.f32.mrf.mxu0
      %v1090 = vadd.f32 %v738, %v1089
      %v1091 = vpop.f32.mrf.mxu0
      %v1092 = vadd.f32 %v743, %v1091
      %1093 = vmatmul.bf16.gmra.mxu0 %v769
      %v1094 = vpop.f32.mrf.mxu0
      %v1095 = vadd.f32 %v748, %v1094
      %v1096 = vpop.f32.mrf.mxu0
      %v1097 = vadd.f32 %v753, %v1096
      %1098 = vdwg.mxu0
      %1099 = vmatpush.bf16.msra.mxu0 0
      %1100 = vmatpush.bf16.msra.mxu0 0
      %1101 = vmatpush.bf16.msra.mxu0 %v954
      %1102 = vmatpush.bf16.msra.mxu0 %v951
      %1103 = vmatpush.bf16.msra.mxu0 %v948
      %1104 = vmatpush.bf16.msra.mxu0 %v945
      %1105 = vmatpush.bf16.msra.mxu0 %v942
      %1106 = vmatpush.bf16.msra.mxu0 %v939
      %1107 = vmatmul.bf16.gmra.mxu0 %v999
      %v1108 = vpop.f32.mrf.mxu0
      %v1109 = vadd.f32 %v1090, %v1108
      %v1110 = vpop.f32.mrf.mxu0
      %v1111 = vadd.f32 %v1092, %v1110
      %1112 = vmatmul.bf16.gmra.mxu0 %v1002
      %v1113 = vpop.f32.mrf.mxu0
      %v1114 = vadd.f32 %v1095, %v1113
      %v1115 = vpop.f32.mrf.mxu0
      %v1116 = vadd.f32 %v1097, %v1115
      %1117 = vdwg.mxu0
      %v1118 = vmax.f32 %v1033, 0.0
      %v1119 = vmax.f32 %v1071, 0.0
      %v1120 = vmax.f32 %v1109, 0.0
      %v1121 = vmax.f32 %v1035, 0.0
      %v1122 = vmax.f32 %v1073, 0.0
      %v1123 = vmax.f32 %v1111, 0.0
      %v1124 = vmax.f32 %v1038, 0.0
      %v1125 = vmax.f32 %v1076, 0.0
      %v1126 = vmax.f32 %v1114, 0.0
      %v1127 = vmax.f32 %v1040, 0.0
      %v1128 = vmax.f32 %v1078, 0.0
      %v1129 = vmax.f32 %v1116, 0.0
      %v1130 = vsel %vm339, %v1118, 0.0
      %v1131 = vsel %vm340, %v1119, 0.0
      %v1132 = vsel %vm341, %v1120, 0.0
      %v1133 = vsel %vm339, %v1121, 0.0
      %v1134 = vsel %vm340, %v1122, 0.0
      %v1135 = vsel %vm341, %v1123, 0.0
      %v1136 = vsel %vm339, %v1124, 0.0
      %v1137 = vsel %vm340, %v1125, 0.0
      %v1138 = vsel %vm341, %v1126, 0.0
      %v1139 = vsel %vm339, %v1127, 0.0
      %v1140 = vsel %vm340, %v1128, 0.0
      %v1141 = vsel %vm341, %v1129, 0.0
      %v1142 = vpack.c.bf16 %v1131, %v1130
      %v1143 = vpack.c.bf16 %v1132, %v1132
      %v1144 = vpack.c.bf16 %v1134, %v1133
      %v1145 = vpack.c.bf16 %v1135, %v1135
      %v1146 = vpack.c.bf16 %v1137, %v1136
      %v1147 = vpack.c.bf16 %v1138, %v1138
      %v1148 = vpack.c.bf16 %v1140, %v1139
      %v1149 = vpack.c.bf16 %v1141, %v1141
      %1158 = vrot.lane.b32.xlu0 %v1142, 3
      %v1159 = vpop.permute.xlu0 %1158
      %1160 = vrot.lane.b32.xlu0 %v1143, 3
      %v1161 = vpop.permute.xlu0 %1160
      %1162 = vrot.lane.b32.xlu0 %v1144, 3
      %v1163 = vpop.permute.xlu0 %1162
      %1164 = vrot.lane.b32.xlu0 %v1145, 3
      %v1165 = vpop.permute.xlu0 %1164
      %1166 = vrot.lane.b32.xlu0 %v1146, 3
      %v1167 = vpop.permute.xlu0 %1166
      %1168 = vrot.lane.b32.xlu0 %v1147, 3
      %v1169 = vpop.permute.xlu0 %1168
      %1170 = vrot.lane.b32.xlu0 %v1148, 3
      %v1171 = vpop.permute.xlu0 %1170
      %1172 = vrot.lane.b32.xlu0 %v1149, 3
      %v1173 = vpop.permute.xlu0 %1172
      %v1174 = vrot.slane %v1159, 4
      %v1175 = vrot.slane %v1163, 4
      %v1176 = vrot.slane %v1167, 4
      %v1177 = vrot.slane %v1171, 4
      %v1178 = vsel %vm390, %v1174, %v1159
      %v1179 = vsel %vm390, %v1174, %v1161
      %v1180 = vsel %vm390, %v1175, %v1163
      %v1181 = vsel %vm390, %v1175, %v1165
      %v1182 = vsel %vm390, %v1176, %v1167
      %v1183 = vsel %vm390, %v1176, %v1169
      %v1184 = vsel %vm390, %v1177, %v1171
      %v1185 = vsel %vm390, %v1177, %v1173
      %1194 = vst.msk [vmem:[#allocation2] sm:$0xff] %vm409, %v1178
      %1195 = vst [vmem:[#allocation2 + $0x8] sm:$0xf] %v1179
      %1196 = vst.msk [vmem:[#allocation2 + $0xc] sm:$0xff] %vm409, %v1180
      %1197 = vst [vmem:[#allocation2 + $0x14] sm:$0xf] %v1181
      %1198 = vst.msk [vmem:[#allocation2 + $0x18] sm:$0xff] %vm409, %v1182
      %1199 = vst [vmem:[#allocation2 + $0x20] sm:$0xf] %v1183
      %1200 = vst.msk [vmem:[#allocation2 + $0x24] sm:$0xff] %vm409, %v1184
      %1201 = vst [vmem:[#allocation2 + $0x2c] sm:$0xf] %v1185
      %1202 = vrot.lane.b32.xlu0 %v1142, 2
      %v1203 = vpop.permute.xlu0 %1202
      %1204 = vrot.lane.b32.xlu0 %v1143, 2
      %v1205 = vpop.permute.xlu0 %1204
      %1206 = vrot.lane.b32.xlu0 %v1144, 2
      %v1207 = vpop.permute.xlu0 %1206
      %1208 = vrot.lane.b32.xlu0 %v1145, 2
      %v1209 = vpop.permute.xlu0 %1208
      %1210 = vrot.lane.b32.xlu0 %v1146, 2
      %v1211 = vpop.permute.xlu0 %1210
      %1212 = vrot.lane.b32.xlu0 %v1147, 2
      %v1213 = vpop.permute.xlu0 %1212
      %1214 = vrot.lane.b32.xlu0 %v1148, 2
      %v1215 = vpop.permute.xlu0 %1214
      %1216 = vrot.lane.b32.xlu0 %v1149, 2
      %v1217 = vpop.permute.xlu0 %1216
      %v1218 = vrot.slane %v1203, 4
      %v1219 = vrot.slane %v1207, 4
      %v1220 = vrot.slane %v1211, 4
      %v1221 = vrot.slane %v1215, 4
      %v1222 = vsel %vm438, %v1218, %v1203
      %v1223 = vsel %vm438, %v1218, %v1205
      %v1224 = vsel %vm438, %v1219, %v1207
      %v1225 = vsel %vm438, %v1219, %v1209
      %v1226 = vsel %vm438, %v1220, %v1211
      %v1227 = vsel %vm438, %v1220, %v1213
      %v1228 = vsel %vm438, %v1221, %v1215
      %v1229 = vsel %vm438, %v1221, %v1217
      %1238 = vst.msk [vmem:[#allocation2 + $0x30] sm:$0xff] %vm456, %v1222
      %1239 = vst [vmem:[#allocation2 + $0x38] sm:$0xf] %v1223
      %1240 = vst.msk [vmem:[#allocation2 + $0x3c] sm:$0xff] %vm456, %v1224
      %1241 = vst [vmem:[#allocation2 + $0x44] sm:$0xf] %v1225
      %1242 = vst.msk [vmem:[#allocation2 + $0x48] sm:$0xff] %vm456, %v1226
      %1243 = vst [vmem:[#allocation2 + $0x50] sm:$0xf] %v1227
      %1244 = vst.msk [vmem:[#allocation2 + $0x54] sm:$0xff] %vm456, %v1228
      %1245 = vst [vmem:[#allocation2 + $0x5c] sm:$0xf] %v1229
      %1246 = vrot.lane.b32.xlu0 %v1142, 1
      %v1247 = vpop.permute.xlu0 %1246
      %1248 = vrot.lane.b32.xlu0 %v1143, 1
      %v1249 = vpop.permute.xlu0 %1248
      %1250 = vrot.lane.b32.xlu0 %v1144, 1
      %v1251 = vpop.permute.xlu0 %1250
      %1252 = vrot.lane.b32.xlu0 %v1145, 1
      %v1253 = vpop.permute.xlu0 %1252
      %1254 = vrot.lane.b32.xlu0 %v1146, 1
      %v1255 = vpop.permute.xlu0 %1254
      %1256 = vrot.lane.b32.xlu0 %v1147, 1
      %v1257 = vpop.permute.xlu0 %1256
      %1258 = vrot.lane.b32.xlu0 %v1148, 1
      %v1259 = vpop.permute.xlu0 %1258
      %1260 = vrot.lane.b32.xlu0 %v1149, 1
      %v1261 = vpop.permute.xlu0 %1260
      %v1262 = vrot.slane %v1247, 4
      %v1263 = vrot.slane %v1251, 4
      %v1264 = vrot.slane %v1255, 4
      %v1265 = vrot.slane %v1259, 4
      %v1266 = vsel %vm485, %v1262, %v1247
      %v1267 = vsel %vm485, %v1262, %v1249
      %v1268 = vsel %vm485, %v1263, %v1251
      %v1269 = vsel %vm485, %v1263, %v1253
      %v1270 = vsel %vm485, %v1264, %v1255
      %v1271 = vsel %vm485, %v1264, %v1257
      %v1272 = vsel %vm485, %v1265, %v1259
      %v1273 = vsel %vm485, %v1265, %v1261
      %1282 = vst.msk [vmem:[#allocation2 + $0x60] sm:$0xff] %vm503, %v1266
      %1283 = vst [vmem:[#allocation2 + $0x68] sm:$0xf] %v1267
      %1284 = vst.msk [vmem:[#allocation2 + $0x6c] sm:$0xff] %vm503, %v1268
      %1285 = vst [vmem:[#allocation2 + $0x74] sm:$0xf] %v1269
      %1286 = vst.msk [vmem:[#allocation2 + $0x78] sm:$0xff] %vm503, %v1270
      %1287 = vst [vmem:[#allocation2 + $0x80] sm:$0xf] %v1271
      %1288 = vst.msk [vmem:[#allocation2 + $0x84] sm:$0xff] %vm503, %v1272
      %1289 = vst [vmem:[#allocation2 + $0x8c] sm:$0xf] %v1273
      %1290 = vst [vmem:[#allocation2 + $0x90] sm:$0xff] %v1142
      %1291 = vst [vmem:[#allocation2 + $0x98] sm:$0xf] %v1143
      %1292 = vst [vmem:[#allocation2 + $0x9c] sm:$0xff] %v1144
      %1293 = vst [vmem:[#allocation2 + $0xa4] sm:$0xf] %v1145
      %1294 = vst [vmem:[#allocation2 + $0xa8] sm:$0xff] %v1146
      %1295 = vst [vmem:[#allocation2 + $0xb0] sm:$0xf] %v1147
      %1296 = vst [vmem:[#allocation2 + $0xb4] sm:$0xff] %v1148
      %1297 = vst [vmem:[#allocation2 + $0xbc] sm:$0xf] %v1149
      %1298 = vrot.lane.b32.xlu0 %v1142, 127
      %v1299 = vpop.permute.xlu0 %1298
      %1300 = vrot.lane.b32.xlu0 %v1143, 127
      %v1301 = vpop.permute.xlu0 %1300
      %1302 = vrot.lane.b32.xlu0 %v1144, 127
      %v1303 = vpop.permute.xlu0 %1302
      %1304 = vrot.lane.b32.xlu0 %v1145, 127
      %v1305 = vpop.permute.xlu0 %1304
      %1306 = vrot.lane.b32.xlu0 %v1146, 127
      %v1307 = vpop.permute.xlu0 %1306
      %1308 = vrot.lane.b32.xlu0 %v1147, 127
      %v1309 = vpop.permute.xlu0 %1308
      %1310 = vrot.lane.b32.xlu0 %v1148, 127
      %v1311 = vpop.permute.xlu0 %1310
      %1312 = vrot.lane.b32.xlu0 %v1149, 127
      %v1313 = vpop.permute.xlu0 %1312
      %v1314 = vrot.slane %v1299, 4
      %v1315 = vrot.slane %v1301, 4
      %v1316 = vrot.slane %v1303, 4
      %v1317 = vrot.slane %v1305, 4
      %v1318 = vrot.slane %v1307, 4
      %v1319 = vrot.slane %v1309, 4
      %v1320 = vrot.slane %v1311, 4
      %v1321 = vrot.slane %v1313, 4
      %v1322 = vsel %vm544, %v1314, %v1315
      %v1323 = vsel %vm546, %v1299, %v1322
      %v1324 = vsel %vm544, %v1316, %v1317
      %v1325 = vsel %vm546, %v1303, %v1324
      %v1326 = vsel %vm544, %v1318, %v1319
      %v1327 = vsel %vm546, %v1307, %v1326
      %v1328 = vsel %vm544, %v1320, %v1321
      %v1329 = vsel %vm546, %v1311, %v1328
      %1338 = vst [vmem:[#allocation2 + $0xc0] sm:$0xff] %v1323
      %1339 = vst.msk [vmem:[#allocation2 + $0xc8] sm:$0xf] %vm563, %v1301
      %1340 = vst [vmem:[#allocation2 + $0xcc] sm:$0xff] %v1325
      %1341 = vst.msk [vmem:[#allocation2 + $0xd4] sm:$0xf] %vm563, %v1305
      %1342 = vst [vmem:[#allocation2 + $0xd8] sm:$0xff] %v1327
      %1343 = vst.msk [vmem:[#allocation2 + $0xe0] sm:$0xf] %vm563, %v1309
      %1344 = vst [vmem:[#allocation2 + $0xe4] sm:$0xff] %v1329
      %1345 = vst.msk [vmem:[#allocation2 + $0xec] sm:$0xf] %vm563, %v1313
      %1346 = vrot.lane.b32.xlu0 %v1142, 126
      %v1347 = vpop.permute.xlu0 %1346
      %1348 = vrot.lane.b32.xlu0 %v1143, 126
      %v1349 = vpop.permute.xlu0 %1348
      %1350 = vrot.lane.b32.xlu0 %v1144, 126
      %v1351 = vpop.permute.xlu0 %1350
      %1352 = vrot.lane.b32.xlu0 %v1145, 126
      %v1353 = vpop.permute.xlu0 %1352
      %1354 = vrot.lane.b32.xlu0 %v1146, 126
      %v1355 = vpop.permute.xlu0 %1354
      %1356 = vrot.lane.b32.xlu0 %v1147, 126
      %v1357 = vpop.permute.xlu0 %1356
      %1358 = vrot.lane.b32.xlu0 %v1148, 126
      %v1359 = vpop.permute.xlu0 %1358
      %1360 = vrot.lane.b32.xlu0 %v1149, 126
      %v1361 = vpop.permute.xlu0 %1360
      %v1362 = vrot.slane %v1347, 4
      %v1363 = vrot.slane %v1349, 4
      %v1364 = vrot.slane %v1351, 4
      %v1365 = vrot.slane %v1353, 4
      %v1366 = vrot.slane %v1355, 4
      %v1367 = vrot.slane %v1357, 4
      %v1368 = vrot.slane %v1359, 4
      %v1369 = vrot.slane %v1361, 4
      %v1370 = vsel %vm544, %v1362, %v1363
      %v1371 = vsel %vm596, %v1347, %v1370
      %v1372 = vsel %vm544, %v1364, %v1365
      %v1373 = vsel %vm596, %v1351, %v1372
      %v1374 = vsel %vm544, %v1366, %v1367
      %v1375 = vsel %vm596, %v1355, %v1374
      %v1376 = vsel %vm544, %v1368, %v1369
      %v1377 = vsel %vm596, %v1359, %v1376
      %1386 = vst [vmem:[#allocation2 + $0xf0] sm:$0xff] %v1371
      %1387 = vst.msk [vmem:[#allocation2 + $0xf8] sm:$0xf] %vm613, %v1349
      %1388 = vst [vmem:[#allocation2 + $0xfc] sm:$0xff] %v1373
      %1389 = vst.msk [vmem:[#allocation2 + $0x104] sm:$0xf] %vm613, %v1353
      %1390 = vst [vmem:[#allocation2 + $0x108] sm:$0xff] %v1375
      %1391 = vst.msk [vmem:[#allocation2 + $0x110] sm:$0xf] %vm613, %v1357
      %1392 = vst [vmem:[#allocation2 + $0x114] sm:$0xff] %v1377
      %1393 = vst.msk [vmem:[#allocation2 + $0x11c] sm:$0xf] %vm613, %v1361
      %1394 = vrot.lane.b32.xlu0 %v1142, 125
      %v1395 = vpop.permute.xlu0 %1394
      %1396 = vrot.lane.b32.xlu0 %v1143, 125
      %v1397 = vpop.permute.xlu0 %1396
      %1398 = vrot.lane.b32.xlu0 %v1144, 125
      %v1399 = vpop.permute.xlu0 %1398
      %1400 = vrot.lane.b32.xlu0 %v1145, 125
      %v1401 = vpop.permute.xlu0 %1400
      %1402 = vrot.lane.b32.xlu0 %v1146, 125
      %v1403 = vpop.permute.xlu0 %1402
      %1404 = vrot.lane.b32.xlu0 %v1147, 125
      %v1405 = vpop.permute.xlu0 %1404
      %1406 = vrot.lane.b32.xlu0 %v1148, 125
      %v1407 = vpop.permute.xlu0 %1406
      %1408 = vrot.lane.b32.xlu0 %v1149, 125
      %v1409 = vpop.permute.xlu0 %1408
      %v1410 = vrot.slane %v1395, 4
      %v1411 = vrot.slane %v1397, 4
      %v1412 = vrot.slane %v1399, 4
      %v1413 = vrot.slane %v1401, 4
      %v1414 = vrot.slane %v1403, 4
      %v1415 = vrot.slane %v1405, 4
      %v1416 = vrot.slane %v1407, 4
      %v1417 = vrot.slane %v1409, 4
      %v1418 = vsel %vm544, %v1410, %v1411
      %v1419 = vsel %vm646, %v1395, %v1418
      %v1420 = vsel %vm544, %v1412, %v1413
      %v1421 = vsel %vm646, %v1399, %v1420
      %v1422 = vsel %vm544, %v1414, %v1415
      %v1423 = vsel %vm646, %v1403, %v1422
      %v1424 = vsel %vm544, %v1416, %v1417
      %v1425 = vsel %vm646, %v1407, %v1424
      %1434 = vst [vmem:[#allocation2 + $0x120] sm:$0xff] %v1419
      %1435 = vst.msk [vmem:[#allocation2 + $0x128] sm:$0xf] %vm663, %v1397
      %1436 = vst [vmem:[#allocation2 + $0x12c] sm:$0xff] %v1421
      %1437 = vst.msk [vmem:[#allocation2 + $0x134] sm:$0xf] %vm663, %v1401
      %1438 = vst [vmem:[#allocation2 + $0x138] sm:$0xff] %v1423
      %1439 = vst.msk [vmem:[#allocation2 + $0x140] sm:$0xf] %vm663, %v1405
      %1440 = vst [vmem:[#allocation2 + $0x144] sm:$0xff] %v1425
      %1441 = vst.msk [vmem:[#allocation2 + $0x14c] sm:$0xf] %vm663, %v1409
      %v1442 = vld [vmem:[%s1 + $0x80] sm:$0xff]
      %v1443 = vld [vmem:[%s1 + $0x90] sm:$0xff]
      %v1444 = vld [vmem:[%s1 + $0xa0] sm:$0xff]
      %v1445 = vld [vmem:[%s1 + $0xb0] sm:$0xff]
      %v1446 = vld [vmem:[#allocation2] sm:$0xff]
      %v1447 = vld [vmem:[#allocation2 + $0x8] sm:$0xf]
      %v1448 = vld [vmem:[#allocation2 + $0xc] sm:$0xff]
      %v1449 = vld [vmem:[#allocation2 + $0x14] sm:$0xf]
      %v1450 = vld [vmem:[#allocation2 + $0x18] sm:$0xff]
      %v1451 = vld [vmem:[#allocation2 + $0x20] sm:$0xf]
      %v1452 = vld [vmem:[#allocation2 + $0x24] sm:$0xff]
      %v1453 = vld [vmem:[#allocation2 + $0x2c] sm:$0xf]
      %v1454 = vld [vmem:[#allocation2 + $0x30] sm:$0xff]
      %v1455 = vld [vmem:[#allocation2 + $0x38] sm:$0xf]
      %v1456 = vld [vmem:[#allocation2 + $0x3c] sm:$0xff]
      %v1457 = vld [vmem:[#allocation2 + $0x44] sm:$0xf]
      %v1458 = vld [vmem:[#allocation2 + $0x48] sm:$0xff]
      %v1459 = vld [vmem:[#allocation2 + $0x50] sm:$0xf]
      %v1460 = vld [vmem:[#allocation2 + $0x54] sm:$0xff]
      %v1461 = vld [vmem:[#allocation2 + $0x5c] sm:$0xf]
      %v1462 = vld [vmem:[#allocation2 + $0x60] sm:$0xff]
      %v1463 = vld [vmem:[#allocation2 + $0x68] sm:$0xf]
      %v1464 = vld [vmem:[#allocation2 + $0x6c] sm:$0xff]
      %v1465 = vld [vmem:[#allocation2 + $0x74] sm:$0xf]
      %v1466 = vld [vmem:[#allocation2 + $0x78] sm:$0xff]
      %v1467 = vld [vmem:[#allocation2 + $0x80] sm:$0xf]
      %v1468 = vld [vmem:[#allocation2 + $0x84] sm:$0xff]
      %v1469 = vld [vmem:[#allocation2 + $0x8c] sm:$0xf]
      %v1470 = vld [vmem:[#allocation2 + $0x90] sm:$0xff]
      %v1471 = vld [vmem:[#allocation2 + $0x98] sm:$0xf]
      %v1472 = vld [vmem:[#allocation2 + $0x9c] sm:$0xff]
      %v1473 = vld [vmem:[#allocation2 + $0xa4] sm:$0xf]
      %v1474 = vld [vmem:[#allocation2 + $0xa8] sm:$0xff]
      %v1475 = vld [vmem:[#allocation2 + $0xb0] sm:$0xf]
      %v1476 = vld [vmem:[#allocation2 + $0xb4] sm:$0xff]
      %v1477 = vld [vmem:[#allocation2 + $0xbc] sm:$0xf]
      %v1478 = vld [vmem:[#allocation2 + $0xc0] sm:$0xff]
      %v1479 = vld [vmem:[#allocation2 + $0xc8] sm:$0xf]
      %v1480 = vld [vmem:[#allocation2 + $0xcc] sm:$0xff]
      %v1481 = vld [vmem:[#allocation2 + $0xd4] sm:$0xf]
      %v1482 = vld [vmem:[#allocation2 + $0xd8] sm:$0xff]
      %v1483 = vld [vmem:[#allocation2 + $0xe0] sm:$0xf]
      %v1484 = vld [vmem:[#allocation2 + $0xe4] sm:$0xff]
      %v1485 = vld [vmem:[#allocation2 + $0xec] sm:$0xf]
      %v1486 = vld [vmem:[#allocation2 + $0xf0] sm:$0xff]
      %v1487 = vld [vmem:[#allocation2 + $0xf8] sm:$0xf]
      %v1488 = vld [vmem:[#allocation2 + $0xfc] sm:$0xff]
      %v1489 = vld [vmem:[#allocation2 + $0x104] sm:$0xf]
      %v1490 = vld [vmem:[#allocation2 + $0x108] sm:$0xff]
      %v1491 = vld [vmem:[#allocation2 + $0x110] sm:$0xf]
      %v1492 = vld [vmem:[#allocation2 + $0x114] sm:$0xff]
      %v1493 = vld [vmem:[#allocation2 + $0x11c] sm:$0xf]
      %v1494 = vld [vmem:[#allocation2 + $0x120] sm:$0xff]
      %v1495 = vld [vmem:[#allocation2 + $0x128] sm:$0xf]
      %v1496 = vld [vmem:[#allocation2 + $0x12c] sm:$0xff]
      %v1497 = vld [vmem:[#allocation2 + $0x134] sm:$0xf]
      %v1498 = vld [vmem:[#allocation2 + $0x138] sm:$0xff]
      %v1499 = vld [vmem:[#allocation2 + $0x140] sm:$0xf]
      %v1500 = vld [vmem:[#allocation2 + $0x144] sm:$0xff]
      %v1501 = vld [vmem:[#allocation2 + $0x14c] sm:$0xf]
      %v1502 = vld [vmem:[%s2 + $0x40] sm:$0xff]
      %v1503 = vld [vmem:[%s2 + $0x48] sm:$0xff]
      %v1504 = vld [vmem:[%s2 + $0x50] sm:$0xff]
      %v1505 = vld [vmem:[%s2 + $0x58] sm:$0xff]
      %1507 = vset.pattern.permute.xlu0 0
      %1508 = vperm.xlu0 %1507, %v1502
      %v1509 = vpop.permute.xlu0 %1508
      %1512 = vset.pattern.permute.xlu0 0
      %1513 = vperm.xlu0 %1512, %v1503
      %v1514 = vpop.permute.xlu0 %1513
      %1517 = vset.pattern.permute.xlu0 0
      %1518 = vperm.xlu0 %1517, %v1504
      %v1519 = vpop.permute.xlu0 %1518
      %1522 = vset.pattern.permute.xlu0 0
      %1523 = vperm.xlu0 %1522, %v1505
      %v1524 = vpop.permute.xlu0 %1523
      %v1530 = vunpack.c.l.b16 %v1442
      %v1531 = vunpack.c.h.b16 %v1442
      %v1532 = vunpack.c.l.b16 %v1443
      %v1533 = vunpack.c.h.b16 %v1443
      %v1534 = vunpack.c.l.b16 %v1444
      %v1535 = vunpack.c.h.b16 %v1444
      %v1536 = vunpack.c.l.b16 %v1445
      %v1537 = vunpack.c.h.b16 %v1445
      %v1538 = vpack.c.b16 %v1532, %v1530
      %v1539 = vpack.c.b16 %v1533, %v1531
      %v1540 = vpack.c.b16 %v1536, %v1534
      %v1541 = vpack.c.b16 %v1537, %v1535
      %v1600 = vunpack.c.l.b16 %v1446
      %v1601 = vunpack.c.h.b16 %v1446
      %v1602 = vunpack.c.l.b16 %v1447
      %v1603 = vunpack.c.l.b16 %v1448
      %v1604 = vunpack.c.h.b16 %v1448
      %v1605 = vunpack.c.l.b16 %v1449
      %v1606 = vunpack.c.l.b16 %v1450
      %v1607 = vunpack.c.h.b16 %v1450
      %v1608 = vunpack.c.l.b16 %v1451
      %v1609 = vunpack.c.l.b16 %v1452
      %v1610 = vunpack.c.h.b16 %v1452
      %v1611 = vunpack.c.l.b16 %v1453
      %v1612 = vunpack.c.l.b16 %v1454
      %v1613 = vunpack.c.h.b16 %v1454
      %v1614 = vunpack.c.l.b16 %v1455
      %v1615 = vunpack.c.l.b16 %v1456
      %v1616 = vunpack.c.h.b16 %v1456
      %v1617 = vunpack.c.l.b16 %v1457
      %v1618 = vunpack.c.l.b16 %v1458
      %v1619 = vunpack.c.h.b16 %v1458
      %v1620 = vunpack.c.l.b16 %v1459
      %v1621 = vunpack.c.l.b16 %v1460
      %v1622 = vunpack.c.h.b16 %v1460
      %v1623 = vunpack.c.l.b16 %v1461
      %v1624 = vunpack.c.l.b16 %v1462
      %v1625 = vunpack.c.h.b16 %v1462
      %v1626 = vunpack.c.l.b16 %v1463
      %v1627 = vunpack.c.l.b16 %v1464
      %v1628 = vunpack.c.h.b16 %v1464
      %v1629 = vunpack.c.l.b16 %v1465
      %v1630 = vunpack.c.l.b16 %v1466
      %v1631 = vunpack.c.h.b16 %v1466
      %v1632 = vunpack.c.l.b16 %v1467
      %v1633 = vunpack.c.l.b16 %v1468
      %v1634 = vunpack.c.h.b16 %v1468
      %v1635 = vunpack.c.l.b16 %v1469
      %v1636 = vunpack.c.l.b16 %v1470
      %v1637 = vunpack.c.h.b16 %v1470
      %v1638 = vunpack.c.l.b16 %v1471
      %v1639 = vunpack.c.l.b16 %v1472
      %v1640 = vunpack.c.h.b16 %v1472
      %v1641 = vunpack.c.l.b16 %v1473
      %v1642 = vunpack.c.l.b16 %v1474
      %v1643 = vunpack.c.h.b16 %v1474
      %v1644 = vunpack.c.l.b16 %v1475
      %v1645 = vunpack.c.l.b16 %v1476
      %v1646 = vunpack.c.h.b16 %v1476
      %v1647 = vunpack.c.l.b16 %v1477
      %v1648 = vunpack.c.l.b16 %v1478
      %v1649 = vunpack.c.h.b16 %v1478
      %v1650 = vunpack.c.l.b16 %v1479
      %v1651 = vunpack.c.l.b16 %v1480
      %v1652 = vunpack.c.h.b16 %v1480
      %v1653 = vunpack.c.l.b16 %v1481
      %v1654 = vunpack.c.l.b16 %v1482
      %v1655 = vunpack.c.h.b16 %v1482
      %v1656 = vunpack.c.l.b16 %v1483
      %v1657 = vunpack.c.l.b16 %v1484
      %v1658 = vunpack.c.h.b16 %v1484
      %v1659 = vunpack.c.l.b16 %v1485
      %v1660 = vunpack.c.l.b16 %v1486
      %v1661 = vunpack.c.h.b16 %v1486
      %v1662 = vunpack.c.l.b16 %v1487
      %v1663 = vunpack.c.l.b16 %v1488
      %v1664 = vunpack.c.h.b16 %v1488
      %v1665 = vunpack.c.l.b16 %v1489
      %v1666 = vunpack.c.l.b16 %v1490
      %v1667 = vunpack.c.h.b16 %v1490
      %v1668 = vunpack.c.l.b16 %v1491
      %v1669 = vunpack.c.l.b16 %v1492
      %v1670 = vunpack.c.h.b16 %v1492
      %v1671 = vunpack.c.l.b16 %v1493
      %v1672 = vunpack.c.l.b16 %v1494
      %v1673 = vunpack.c.h.b16 %v1494
      %v1674 = vunpack.c.l.b16 %v1495
      %v1675 = vunpack.c.l.b16 %v1496
      %v1676 = vunpack.c.h.b16 %v1496
      %v1677 = vunpack.c.l.b16 %v1497
      %v1678 = vunpack.c.l.b16 %v1498
      %v1679 = vunpack.c.h.b16 %v1498
      %v1680 = vunpack.c.l.b16 %v1499
      %v1681 = vunpack.c.l.b16 %v1500
      %v1682 = vunpack.c.h.b16 %v1500
      %v1683 = vunpack.c.l.b16 %v1501
      %v1684 = vpack.c.b16 %v1603, %v1600
      %v1685 = vpack.c.b16 %v1604, %v1601
      %v1686 = vpack.c.b16 %v1605, %v1602
      %v1687 = vpack.c.b16 %v1609, %v1606
      %v1688 = vpack.c.b16 %v1610, %v1607
      %v1689 = vpack.c.b16 %v1611, %v1608
      %v1690 = vpack.c.b16 %v1615, %v1612
      %v1691 = vpack.c.b16 %v1616, %v1613
      %v1692 = vpack.c.b16 %v1617, %v1614
      %v1693 = vpack.c.b16 %v1621, %v1618
      %v1694 = vpack.c.b16 %v1622, %v1619
      %v1695 = vpack.c.b16 %v1623, %v1620
      %v1696 = vpack.c.b16 %v1627, %v1624
      %v1697 = vpack.c.b16 %v1628, %v1625
      %v1698 = vpack.c.b16 %v1629, %v1626
      %v1699 = vpack.c.b16 %v1633, %v1630
      %v1700 = vpack.c.b16 %v1634, %v1631
      %v1701 = vpack.c.b16 %v1635, %v1632
      %v1702 = vpack.c.b16 %v1639, %v1636
      %v1703 = vpack.c.b16 %v1640, %v1637
      %v1704 = vpack.c.b16 %v1641, %v1638
      %v1705 = vpack.c.b16 %v1645, %v1642
      %v1706 = vpack.c.b16 %v1646, %v1643
      %v1707 = vpack.c.b16 %v1647, %v1644
      %v1708 = vpack.c.b16 %v1651, %v1648
      %v1709 = vpack.c.b16 %v1652, %v1649
      %v1710 = vpack.c.b16 %v1653, %v1650
      %v1711 = vpack.c.b16 %v1657, %v1654
      %v1712 = vpack.c.b16 %v1658, %v1655
      %v1713 = vpack.c.b16 %v1659, %v1656
      %v1714 = vpack.c.b16 %v1663, %v1660
      %v1715 = vpack.c.b16 %v1664, %v1661
      %v1716 = vpack.c.b16 %v1665, %v1662
      %v1717 = vpack.c.b16 %v1669, %v1666
      %v1718 = vpack.c.b16 %v1670, %v1667
      %v1719 = vpack.c.b16 %v1671, %v1668
      %v1720 = vpack.c.b16 %v1675, %v1672
      %v1721 = vpack.c.b16 %v1676, %v1673
      %v1722 = vpack.c.b16 %v1677, %v1674
      %v1723 = vpack.c.b16 %v1681, %v1678
      %v1724 = vpack.c.b16 %v1682, %v1679
      %v1725 = vpack.c.b16 %v1683, %v1680
      %v1769 = vsel %vm997, %v1539, 0
      %v1772 = vsel %vm997, %v1541, 0
      %1774 = vmatpush.bf16.msra.mxu0 %v1705
      %1775 = vmatpush.bf16.msra.mxu0 %v1702
      %1776 = vmatpush.bf16.msra.mxu0 %v1699
      %1777 = vmatpush.bf16.msra.mxu0 %v1696
      %1778 = vmatpush.bf16.msra.mxu0 %v1693
      %1779 = vmatpush.bf16.msra.mxu0 %v1690
      %1780 = vmatpush.bf16.msra.mxu0 %v1687
      %1781 = vmatpush.bf16.msra.mxu0 %v1684
      %1782 = vmatmul.bf16.gmra.mxu0 %v1538
      %v1783 = vpop.f32.mrf.mxu0
      %v1784 = vadd.f32 %v1509, %v1783
      %v1785 = vpop.f32.mrf.mxu0
      %v1786 = vadd.f32 %v1514, %v1785
      %1787 = vmatmul.bf16.gmra.mxu0 %v1540
      %v1788 = vpop.f32.mrf.mxu0
      %v1789 = vadd.f32 %v1519, %v1788
      %v1790 = vpop.f32.mrf.mxu0
      %v1791 = vadd.f32 %v1524, %v1790
      %1792 = vdwg.mxu0
      %1793 = vmatpush.bf16.msra.mxu0 0
      %1794 = vmatpush.bf16.msra.mxu0 0
      %1795 = vmatpush.bf16.msra.mxu0 %v1723
      %1796 = vmatpush.bf16.msra.mxu0 %v1720
      %1797 = vmatpush.bf16.msra.mxu0 %v1717
      %1798 = vmatpush.bf16.msra.mxu0 %v1714
      %1799 = vmatpush.bf16.msra.mxu0 %v1711
      %1800 = vmatpush.bf16.msra.mxu0 %v1708
      %1801 = vmatmul.bf16.gmra.mxu0 %v1769
      %v1802 = vpop.f32.mrf.mxu0
      %v1803 = vadd.f32 %v1784, %v1802
      %v1804 = vpop.f32.mrf.mxu0
      %v1805 = vadd.f32 %v1786, %v1804
      %1806 = vmatmul.bf16.gmra.mxu0 %v1772
      %v1807 = vpop.f32.mrf.mxu0
      %v1808 = vadd.f32 %v1789, %v1807
      %v1809 = vpop.f32.mrf.mxu0
      %v1810 = vadd.f32 %v1791, %v1809
      %1811 = vdwg.mxu0
      %1812 = vmatpush.bf16.msra.mxu0 %v1706
      %1813 = vmatpush.bf16.msra.mxu0 %v1703
      %1814 = vmatpush.bf16.msra.mxu0 %v1700
      %1815 = vmatpush.bf16.msra.mxu0 %v1697
      %1816 = vmatpush.bf16.msra.mxu0 %v1694
      %1817 = vmatpush.bf16.msra.mxu0 %v1691
      %1818 = vmatpush.bf16.msra.mxu0 %v1688
      %1819 = vmatpush.bf16.msra.mxu0 %v1685
      %1820 = vmatmul.bf16.gmra.mxu0 %v1538
      %v1821 = vpop.f32.mrf.mxu0
      %v1822 = vadd.f32 %v1509, %v1821
      %v1823 = vpop.f32.mrf.mxu0
      %v1824 = vadd.f32 %v1514, %v1823
      %1825 = vmatmul.bf16.gmra.mxu0 %v1540
      %v1826 = vpop.f32.mrf.mxu0
      %v1827 = vadd.f32 %v1519, %v1826
      %v1828 = vpop.f32.mrf.mxu0
      %v1829 = vadd.f32 %v1524, %v1828
      %1830 = vdwg.mxu0
      %1831 = vmatpush.bf16.msra.mxu0 0
      %1832 = vmatpush.bf16.msra.mxu0 0
      %1833 = vmatpush.bf16.msra.mxu0 %v1724
      %1834 = vmatpush.bf16.msra.mxu0 %v1721
      %1835 = vmatpush.bf16.msra.mxu0 %v1718
      %1836 = vmatpush.bf16.msra.mxu0 %v1715
      %1837 = vmatpush.bf16.msra.mxu0 %v1712
      %1838 = vmatpush.bf16.msra.mxu0 %v1709
      %1839 = vmatmul.bf16.gmra.mxu0 %v1769
      %v1840 = vpop.f32.mrf.mxu0
      %v1841 = vadd.f32 %v1822, %v1840
      %v1842 = vpop.f32.mrf.mxu0
      %v1843 = vadd.f32 %v1824, %v1842
      %1844 = vmatmul.bf16.gmra.mxu0 %v1772
      %v1845 = vpop.f32.mrf.mxu0
      %v1846 = vadd.f32 %v1827, %v1845
      %v1847 = vpop.f32.mrf.mxu0
      %v1848 = vadd.f32 %v1829, %v1847
      %1849 = vdwg.mxu0
      %1850 = vmatpush.bf16.msra.mxu0 %v1707
      %1851 = vmatpush.bf16.msra.mxu0 %v1704
      %1852 = vmatpush.bf16.msra.mxu0 %v1701
      %1853 = vmatpush.bf16.msra.mxu0 %v1698
      %1854 = vmatpush.bf16.msra.mxu0 %v1695
      %1855 = vmatpush.bf16.msra.mxu0 %v1692
      %1856 = vmatpush.bf16.msra.mxu0 %v1689
      %1857 = vmatpush.bf16.msra.mxu0 %v1686
      %1858 = vmatmul.bf16.gmra.mxu0 %v1538
      %v1859 = vpop.f32.mrf.mxu0
      %v1860 = vadd.f32 %v1509, %v1859
      %v1861 = vpop.f32.mrf.mxu0
      %v1862 = vadd.f32 %v1514, %v1861
      %1863 = vmatmul.bf16.gmra.mxu0 %v1540
      %v1864 = vpop.f32.mrf.mxu0
      %v1865 = vadd.f32 %v1519, %v1864
      %v1866 = vpop.f32.mrf.mxu0
      %v1867 = vadd.f32 %v1524, %v1866
      %1868 = vdwg.mxu0
      %1869 = vmatpush.bf16.msra.mxu0 0
      %1870 = vmatpush.bf16.msra.mxu0 0
      %1871 = vmatpush.bf16.msra.mxu0 %v1725
      %1872 = vmatpush.bf16.msra.mxu0 %v1722
      %1873 = vmatpush.bf16.msra.mxu0 %v1719
      %1874 = vmatpush.bf16.msra.mxu0 %v1716
      %1875 = vmatpush.bf16.msra.mxu0 %v1713
      %1876 = vmatpush.bf16.msra.mxu0 %v1710
      %1877 = vmatmul.bf16.gmra.mxu0 %v1769
      %v1878 = vpop.f32.mrf.mxu0
      %v1879 = vadd.f32 %v1860, %v1878
      %v1880 = vpop.f32.mrf.mxu0
      %v1881 = vadd.f32 %v1862, %v1880
      %1882 = vmatmul.bf16.gmra.mxu0 %v1772
      %v1883 = vpop.f32.mrf.mxu0
      %v1884 = vadd.f32 %v1865, %v1883
      %v1885 = vpop.f32.mrf.mxu0
      %v1886 = vadd.f32 %v1867, %v1885
      %1887 = vdwg.mxu0
      %v1888 = vmax.f32 %v1803, 0.0
      %v1889 = vmax.f32 %v1841, 0.0
      %v1890 = vmax.f32 %v1879, 0.0
      %v1891 = vmax.f32 %v1805, 0.0
      %v1892 = vmax.f32 %v1843, 0.0
      %v1893 = vmax.f32 %v1881, 0.0
      %v1894 = vmax.f32 %v1808, 0.0
      %v1895 = vmax.f32 %v1846, 0.0
      %v1896 = vmax.f32 %v1884, 0.0
      %v1897 = vmax.f32 %v1810, 0.0
      %v1898 = vmax.f32 %v1848, 0.0
      %v1899 = vmax.f32 %v1886, 0.0
      %v1900 = vadd.f32 %v1888, %v342
      %v1901 = vadd.f32 %v1889, %v343
      %v1902 = vadd.f32 %v1890, %v344
      %v1903 = vadd.f32 %v1891, %v345
      %v1904 = vadd.f32 %v1892, %v346
      %v1905 = vadd.f32 %v1893, %v347
      %v1906 = vadd.f32 %v1894, %v348
      %v1907 = vadd.f32 %v1895, %v349
      %v1908 = vadd.f32 %v1896, %v350
      %v1909 = vadd.f32 %v1897, %v351
      %v1910 = vadd.f32 %v1898, %v352
      %v1911 = vadd.f32 %v1899, %v353
      %v1912 = vmax.f32 %v1900, 0.0
      %v1913 = vmax.f32 %v1901, 0.0
      %v1914 = vmax.f32 %v1902, 0.0
      %v1915 = vmax.f32 %v1903, 0.0
      %v1916 = vmax.f32 %v1904, 0.0
      %v1917 = vmax.f32 %v1905, 0.0
      %v1918 = vmax.f32 %v1906, 0.0
      %v1919 = vmax.f32 %v1907, 0.0
      %v1920 = vmax.f32 %v1908, 0.0
      %v1921 = vmax.f32 %v1909, 0.0
      %v1922 = vmax.f32 %v1910, 0.0
      %v1923 = vmax.f32 %v1911, 0.0
      %v1924 = vsel %vm339, %v1912, 0.0
      %v1925 = vsel %vm340, %v1913, 0.0
      %v1926 = vsel %vm341, %v1914, 0.0
      %v1927 = vsel %vm339, %v1915, 0.0
      %v1928 = vsel %vm340, %v1916, 0.0
      %v1929 = vsel %vm341, %v1917, 0.0
      %v1930 = vsel %vm339, %v1918, 0.0
      %v1931 = vsel %vm340, %v1919, 0.0
      %v1932 = vsel %vm341, %v1920, 0.0
      %v1933 = vsel %vm339, %v1921, 0.0
      %v1934 = vsel %vm340, %v1922, 0.0
      %v1935 = vsel %vm341, %v1923, 0.0
      %v1936 = vpack.c.bf16 %v1925, %v1924
      %v1937 = vpack.c.bf16 %v1926, %v1926
      %v1938 = vpack.c.bf16 %v1928, %v1927
      %v1939 = vpack.c.bf16 %v1929, %v1929
      %v1940 = vpack.c.bf16 %v1931, %v1930
      %v1941 = vpack.c.bf16 %v1932, %v1932
      %v1942 = vpack.c.bf16 %v1934, %v1933
      %v1943 = vpack.c.bf16 %v1935, %v1935
      %1952 = vrot.lane.b32.xlu0 %v1936, 6
      %v1953 = vpop.permute.xlu0 %1952
      %1954 = vrot.lane.b32.xlu0 %v1937, 6
      %v1955 = vpop.permute.xlu0 %1954
      %1956 = vrot.lane.b32.xlu0 %v1938, 6
      %v1957 = vpop.permute.xlu0 %1956
      %1958 = vrot.lane.b32.xlu0 %v1939, 6
      %v1959 = vpop.permute.xlu0 %1958
      %1960 = vrot.lane.b32.xlu0 %v1940, 6
      %v1961 = vpop.permute.xlu0 %1960
      %1962 = vrot.lane.b32.xlu0 %v1941, 6
      %v1963 = vpop.permute.xlu0 %1962
      %1964 = vrot.lane.b32.xlu0 %v1942, 6
      %v1965 = vpop.permute.xlu0 %1964
      %1966 = vrot.lane.b32.xlu0 %v1943, 6
      %v1967 = vpop.permute.xlu0 %1966
      %v1968 = vrot.slane %v1953, 4
      %v1969 = vrot.slane %v1957, 4
      %v1970 = vrot.slane %v1961, 4
      %v1971 = vrot.slane %v1965, 4
      %vm1972 = vcmask 48128
      %v1973 = vsel %vm1972, %v1968, %v1953
      %v1974 = vsel %vm1972, %v1968, %v1955
      %v1975 = vsel %vm1972, %v1969, %v1957
      %v1976 = vsel %vm1972, %v1969, %v1959
      %v1977 = vsel %vm1972, %v1970, %v1961
      %v1978 = vsel %vm1972, %v1970, %v1963
      %v1979 = vsel %vm1972, %v1971, %v1965
      %v1980 = vsel %vm1972, %v1971, %v1967
      %vm1989 = vcmask 1043504
      %vm1990 = vmor %vm408, %vm1989
      %1991 = vst.msk [vmem:[#allocation2] sm:$0xff] %vm1990, %v1973
      %1992 = vst [vmem:[#allocation2 + $0x8] sm:$0xf] %v1974
      %1993 = vst.msk [vmem:[#allocation2 + $0xc] sm:$0xff] %vm1990, %v1975
      %1994 = vst [vmem:[#allocation2 + $0x14] sm:$0xf] %v1976
      %1995 = vst.msk [vmem:[#allocation2 + $0x18] sm:$0xff] %vm1990, %v1977
      %1996 = vst [vmem:[#allocation2 + $0x20] sm:$0xf] %v1978
      %1997 = vst.msk [vmem:[#allocation2 + $0x24] sm:$0xff] %vm1990, %v1979
      %1998 = vst [vmem:[#allocation2 + $0x2c] sm:$0xf] %v1980
      %1999 = vrot.lane.b32.xlu0 %v1936, 4
      %v2000 = vpop.permute.xlu0 %1999
      %2001 = vrot.lane.b32.xlu0 %v1937, 4
      %v2002 = vpop.permute.xlu0 %2001
      %2003 = vrot.lane.b32.xlu0 %v1938, 4
      %v2004 = vpop.permute.xlu0 %2003
      %2005 = vrot.lane.b32.xlu0 %v1939, 4
      %v2006 = vpop.permute.xlu0 %2005
      %2007 = vrot.lane.b32.xlu0 %v1940, 4
      %v2008 = vpop.permute.xlu0 %2007
      %2009 = vrot.lane.b32.xlu0 %v1941, 4
      %v2010 = vpop.permute.xlu0 %2009
      %2011 = vrot.lane.b32.xlu0 %v1942, 4
      %v2012 = vpop.permute.xlu0 %2011
      %2013 = vrot.lane.b32.xlu0 %v1943, 4
      %v2014 = vpop.permute.xlu0 %2013
      %v2015 = vrot.slane %v2000, 4
      %v2016 = vrot.slane %v2004, 4
      %v2017 = vrot.slane %v2008, 4
      %v2018 = vrot.slane %v2012, 4
      %vm2019 = vcmask 31744
      %v2020 = vsel %vm2019, %v2015, %v2000
      %v2021 = vsel %vm2019, %v2015, %v2002
      %v2022 = vsel %vm2019, %v2016, %v2004
      %v2023 = vsel %vm2019, %v2016, %v2006
      %v2024 = vsel %vm2019, %v2017, %v2008
      %v2025 = vsel %vm2019, %v2017, %v2010
      %v2026 = vsel %vm2019, %v2018, %v2012
      %v2027 = vsel %vm2019, %v2018, %v2014
      %vm2036 = vcmask 1043488
      %vm2037 = vmor %vm408, %vm2036
      %2038 = vst.msk [vmem:[#allocation2 + $0x30] sm:$0xff] %vm2037, %v2020
      %2039 = vst [vmem:[#allocation2 + $0x38] sm:$0xf] %v2021
      %2040 = vst.msk [vmem:[#allocation2 + $0x3c] sm:$0xff] %vm2037, %v2022
      %2041 = vst [vmem:[#allocation2 + $0x44] sm:$0xf] %v2023
      %2042 = vst.msk [vmem:[#allocation2 + $0x48] sm:$0xff] %vm2037, %v2024
      %2043 = vst [vmem:[#allocation2 + $0x50] sm:$0xf] %v2025
      %2044 = vst.msk [vmem:[#allocation2 + $0x54] sm:$0xff] %vm2037, %v2026
      %2045 = vst [vmem:[#allocation2 + $0x5c] sm:$0xf] %v2027
      %2046 = vrot.lane.b32.xlu0 %v1936, 2
      %v2047 = vpop.permute.xlu0 %2046
      %2048 = vrot.lane.b32.xlu0 %v1937, 2
      %v2049 = vpop.permute.xlu0 %2048
      %2050 = vrot.lane.b32.xlu0 %v1938, 2
      %v2051 = vpop.permute.xlu0 %2050
      %2052 = vrot.lane.b32.xlu0 %v1939, 2
      %v2053 = vpop.permute.xlu0 %2052
      %2054 = vrot.lane.b32.xlu0 %v1940, 2
      %v2055 = vpop.permute.xlu0 %2054
      %2056 = vrot.lane.b32.xlu0 %v1941, 2
      %v2057 = vpop.permute.xlu0 %2056
      %2058 = vrot.lane.b32.xlu0 %v1942, 2
      %v2059 = vpop.permute.xlu0 %2058
      %2060 = vrot.lane.b32.xlu0 %v1943, 2
      %v2061 = vpop.permute.xlu0 %2060
      %v2062 = vrot.slane %v2047, 4
      %v2063 = vrot.slane %v2051, 4
      %v2064 = vrot.slane %v2055, 4
      %v2065 = vrot.slane %v2059, 4
      %v2066 = vsel %vm438, %v2062, %v2047
      %v2067 = vsel %vm438, %v2062, %v2049
      %v2068 = vsel %vm438, %v2063, %v2051
      %v2069 = vsel %vm438, %v2063, %v2053
      %v2070 = vsel %vm438, %v2064, %v2055
      %v2071 = vsel %vm438, %v2064, %v2057
      %v2072 = vsel %vm438, %v2065, %v2059
      %v2073 = vsel %vm438, %v2065, %v2061
      %2082 = vst.msk [vmem:[#allocation2 + $0x60] sm:$0xff] %vm456, %v2066
      %2083 = vst [vmem:[#allocation2 + $0x68] sm:$0xf] %v2067
      %2084 = vst.msk [vmem:[#allocation2 + $0x6c] sm:$0xff] %vm456, %v2068
      %2085 = vst [vmem:[#allocation2 + $0x74] sm:$0xf] %v2069
      %2086 = vst.msk [vmem:[#allocation2 + $0x78] sm:$0xff] %vm456, %v2070
      %2087 = vst [vmem:[#allocation2 + $0x80] sm:$0xf] %v2071
      %2088 = vst.msk [vmem:[#allocation2 + $0x84] sm:$0xff] %vm456, %v2072
      %2089 = vst [vmem:[#allocation2 + $0x8c] sm:$0xf] %v2073
      %2090 = vst [vmem:[#allocation2 + $0x90] sm:$0xff] %v1936
      %2091 = vst [vmem:[#allocation2 + $0x98] sm:$0xf] %v1937
      %2092 = vst [vmem:[#allocation2 + $0x9c] sm:$0xff] %v1938
      %2093 = vst [vmem:[#allocation2 + $0xa4] sm:$0xf] %v1939
      %2094 = vst [vmem:[#allocation2 + $0xa8] sm:$0xff] %v1940
      %2095 = vst [vmem:[#allocation2 + $0xb0] sm:$0xf] %v1941
      %2096 = vst [vmem:[#allocation2 + $0xb4] sm:$0xff] %v1942
      %2097 = vst [vmem:[#allocation2 + $0xbc] sm:$0xf] %v1943
      %2098 = vrot.lane.b32.xlu0 %v1936, 126
      %v2099 = vpop.permute.xlu0 %2098
      %2100 = vrot.lane.b32.xlu0 %v1937, 126
      %v2101 = vpop.permute.xlu0 %2100
      %2102 = vrot.lane.b32.xlu0 %v1938, 126
      %v2103 = vpop.permute.xlu0 %2102
      %2104 = vrot.lane.b32.xlu0 %v1939, 126
      %v2105 = vpop.permute.xlu0 %2104
      %2106 = vrot.lane.b32.xlu0 %v1940, 126
      %v2107 = vpop.permute.xlu0 %2106
      %2108 = vrot.lane.b32.xlu0 %v1941, 126
      %v2109 = vpop.permute.xlu0 %2108
      %2110 = vrot.lane.b32.xlu0 %v1942, 126
      %v2111 = vpop.permute.xlu0 %2110
      %2112 = vrot.lane.b32.xlu0 %v1943, 126
      %v2113 = vpop.permute.xlu0 %2112
      %v2114 = vrot.slane %v2099, 4
      %v2115 = vrot.slane %v2101, 4
      %v2116 = vrot.slane %v2103, 4
      %v2117 = vrot.slane %v2105, 4
      %v2118 = vrot.slane %v2107, 4
      %v2119 = vrot.slane %v2109, 4
      %v2120 = vrot.slane %v2111, 4
      %v2121 = vrot.slane %v2113, 4
      %v2122 = vsel %vm544, %v2114, %v2115
      %v2123 = vsel %vm596, %v2099, %v2122
      %v2124 = vsel %vm544, %v2116, %v2117
      %v2125 = vsel %vm596, %v2103, %v2124
      %v2126 = vsel %vm544, %v2118, %v2119
      %v2127 = vsel %vm596, %v2107, %v2126
      %v2128 = vsel %vm544, %v2120, %v2121
      %v2129 = vsel %vm596, %v2111, %v2128
      %2138 = vst [vmem:[#allocation2 + $0xc0] sm:$0xff] %v2123
      %2139 = vst.msk [vmem:[#allocation2 + $0xc8] sm:$0xf] %vm613, %v2101
      %2140 = vst [vmem:[#allocation2 + $0xcc] sm:$0xff] %v2125
      %2141 = vst.msk [vmem:[#allocation2 + $0xd4] sm:$0xf] %vm613, %v2105
      %2142 = vst [vmem:[#allocation2 + $0xd8] sm:$0xff] %v2127
      %2143 = vst.msk [vmem:[#allocation2 + $0xe0] sm:$0xf] %vm613, %v2109
      %2144 = vst [vmem:[#allocation2 + $0xe4] sm:$0xff] %v2129
      %2145 = vst.msk [vmem:[#allocation2 + $0xec] sm:$0xf] %vm613, %v2113
      %2146 = vrot.lane.b32.xlu0 %v1936, 124
      %v2147 = vpop.permute.xlu0 %2146
      %2148 = vrot.lane.b32.xlu0 %v1937, 124
      %v2149 = vpop.permute.xlu0 %2148
      %2150 = vrot.lane.b32.xlu0 %v1938, 124
      %v2151 = vpop.permute.xlu0 %2150
      %2152 = vrot.lane.b32.xlu0 %v1939, 124
      %v2153 = vpop.permute.xlu0 %2152
      %2154 = vrot.lane.b32.xlu0 %v1940, 124
      %v2155 = vpop.permute.xlu0 %2154
      %2156 = vrot.lane.b32.xlu0 %v1941, 124
      %v2157 = vpop.permute.xlu0 %2156
      %2158 = vrot.lane.b32.xlu0 %v1942, 124
      %v2159 = vpop.permute.xlu0 %2158
      %2160 = vrot.lane.b32.xlu0 %v1943, 124
      %v2161 = vpop.permute.xlu0 %2160
      %v2162 = vrot.slane %v2147, 4
      %v2163 = vrot.slane %v2149, 4
      %v2164 = vrot.slane %v2151, 4
      %v2165 = vrot.slane %v2153, 4
      %v2166 = vrot.slane %v2155, 4
      %v2167 = vrot.slane %v2157, 4
      %v2168 = vrot.slane %v2159, 4
      %v2169 = vrot.slane %v2161, 4
      %v2170 = vsel %vm544, %v2162, %v2163
      %vm2171 = vcmask 1014784
      %v2172 = vsel %vm2171, %v2147, %v2170
      %v2173 = vsel %vm544, %v2164, %v2165
      %v2174 = vsel %vm2171, %v2151, %v2173
      %v2175 = vsel %vm544, %v2166, %v2167
      %v2176 = vsel %vm2171, %v2155, %v2175
      %v2177 = vsel %vm544, %v2168, %v2169
      %v2178 = vsel %vm2171, %v2159, %v2177
      %2187 = vst [vmem:[#allocation2 + $0xf0] sm:$0xff] %v2172
      %vm2188 = vcmask 1010688
      %2189 = vst.msk [vmem:[#allocation2 + $0xf8] sm:$0xf] %vm2188, %v2149
      %2190 = vst [vmem:[#allocation2 + $0xfc] sm:$0xff] %v2174
      %2191 = vst.msk [vmem:[#allocation2 + $0x104] sm:$0xf] %vm2188, %v2153
      %2192 = vst [vmem:[#allocation2 + $0x108] sm:$0xff] %v2176
      %2193 = vst.msk [vmem:[#allocation2 + $0x110] sm:$0xf] %vm2188, %v2157
      %2194 = vst [vmem:[#allocation2 + $0x114] sm:$0xff] %v2178
      %2195 = vst.msk [vmem:[#allocation2 + $0x11c] sm:$0xf] %vm2188, %v2161
      %2196 = vrot.lane.b32.xlu0 %v1936, 122
      %v2197 = vpop.permute.xlu0 %2196
      %2198 = vrot.lane.b32.xlu0 %v1937, 122
      %v2199 = vpop.permute.xlu0 %2198
      %2200 = vrot.lane.b32.xlu0 %v1938, 122
      %v2201 = vpop.permute.xlu0 %2200
      %2202 = vrot.lane.b32.xlu0 %v1939, 122
      %v2203 = vpop.permute.xlu0 %2202
      %2204 = vrot.lane.b32.xlu0 %v1940, 122
      %v2205 = vpop.permute.xlu0 %2204
      %2206 = vrot.lane.b32.xlu0 %v1941, 122
      %v2207 = vpop.permute.xlu0 %2206
      %2208 = vrot.lane.b32.xlu0 %v1942, 122
      %v2209 = vpop.permute.xlu0 %2208
      %2210 = vrot.lane.b32.xlu0 %v1943, 122
      %v2211 = vpop.permute.xlu0 %2210
      %v2212 = vrot.slane %v2197, 4
      %v2213 = vrot.slane %v2199, 4
      %v2214 = vrot.slane %v2201, 4
      %v2215 = vrot.slane %v2203, 4
      %v2216 = vrot.slane %v2205, 4
      %v2217 = vrot.slane %v2207, 4
      %v2218 = vrot.slane %v2209, 4
      %v2219 = vrot.slane %v2211, 4
      %v2220 = vsel %vm544, %v2212, %v2213
      %vm2221 = vcmask 998400
      %v2222 = vsel %vm2221, %v2197, %v2220
      %v2223 = vsel %vm544, %v2214, %v2215
      %v2224 = vsel %vm2221, %v2201, %v2223
      %v2225 = vsel %vm544, %v2216, %v2217
      %v2226 = vsel %vm2221, %v2205, %v2225
      %v2227 = vsel %vm544, %v2218, %v2219
      %v2228 = vsel %vm2221, %v2209, %v2227
      %2237 = vst [vmem:[#allocation2 + $0x120] sm:$0xff] %v2222
      %vm2238 = vcmask 994304
      %2239 = vst.msk [vmem:[#allocation2 + $0x128] sm:$0xf] %vm2238, %v2199
      %2240 = vst [vmem:[#allocation2 + $0x12c] sm:$0xff] %v2224
      %2241 = vst.msk [vmem:[#allocation2 + $0x134] sm:$0xf] %vm2238, %v2203
      %2242 = vst [vmem:[#allocation2 + $0x138] sm:$0xff] %v2226
      %2243 = vst.msk [vmem:[#allocation2 + $0x140] sm:$0xf] %vm2238, %v2207
      %2244 = vst [vmem:[#allocation2 + $0x144] sm:$0xff] %v2228
      %2245 = vst.msk [vmem:[#allocation2 + $0x14c] sm:$0xf] %vm2238, %v2211
      %v2246 = vld [vmem:[%s1 + $0xc0] sm:$0xff]
      %v2247 = vld [vmem:[%s1 + $0xd0] sm:$0xff]
      %v2248 = vld [vmem:[%s1 + $0xe0] sm:$0xff]
      %v2249 = vld [vmem:[%s1 + $0xf0] sm:$0xff]
      %v2250 = vld [vmem:[%s1 + $0x100] sm:$0xff]
      %v2251 = vld [vmem:[%s1 + $0x110] sm:$0xff]
      %v2252 = vld [vmem:[%s1 + $0x120] sm:$0xff]
      %v2253 = vld [vmem:[%s1 + $0x130] sm:$0xff]
      %v2254 = vld [vmem:[#allocation2] sm:$0xff]
      %v2255 = vld [vmem:[#allocation2 + $0x8] sm:$0xf]
      %v2256 = vld [vmem:[#allocation2 + $0xc] sm:$0xff]
      %v2257 = vld [vmem:[#allocation2 + $0x14] sm:$0xf]
      %v2258 = vld [vmem:[#allocation2 + $0x18] sm:$0xff]
      %v2259 = vld [vmem:[#allocation2 + $0x20] sm:$0xf]
      %v2260 = vld [vmem:[#allocation2 + $0x24] sm:$0xff]
      %v2261 = vld [vmem:[#allocation2 + $0x2c] sm:$0xf]
      %v2262 = vld [vmem:[#allocation2 + $0x30] sm:$0xff]
      %v2263 = vld [vmem:[#allocation2 + $0x38] sm:$0xf]
      %v2264 = vld [vmem:[#allocation2 + $0x3c] sm:$0xff]
      %v2265 = vld [vmem:[#allocation2 + $0x44] sm:$0xf]
      %v2266 = vld [vmem:[#allocation2 + $0x48] sm:$0xff]
      %v2267 = vld [vmem:[#allocation2 + $0x50] sm:$0xf]
      %v2268 = vld [vmem:[#allocation2 + $0x54] sm:$0xff]
      %v2269 = vld [vmem:[#allocation2 + $0x5c] sm:$0xf]
      %v2270 = vld [vmem:[#allocation2 + $0x60] sm:$0xff]
      %v2271 = vld [vmem:[#allocation2 + $0x68] sm:$0xf]
      %v2272 = vld [vmem:[#allocation2 + $0x6c] sm:$0xff]
      %v2273 = vld [vmem:[#allocation2 + $0x74] sm:$0xf]
      %v2274 = vld [vmem:[#allocation2 + $0x78] sm:$0xff]
      %v2275 = vld [vmem:[#allocation2 + $0x80] sm:$0xf]
      %v2276 = vld [vmem:[#allocation2 + $0x84] sm:$0xff]
      %v2277 = vld [vmem:[#allocation2 + $0x8c] sm:$0xf]
      %v2278 = vld [vmem:[#allocation2 + $0x90] sm:$0xff]
      %v2279 = vld [vmem:[#allocation2 + $0x98] sm:$0xf]
      %v2280 = vld [vmem:[#allocation2 + $0x9c] sm:$0xff]
      %v2281 = vld [vmem:[#allocation2 + $0xa4] sm:$0xf]
      %v2282 = vld [vmem:[#allocation2 + $0xa8] sm:$0xff]
      %v2283 = vld [vmem:[#allocation2 + $0xb0] sm:$0xf]
      %v2284 = vld [vmem:[#allocation2 + $0xb4] sm:$0xff]
      %v2285 = vld [vmem:[#allocation2 + $0xbc] sm:$0xf]
      %v2286 = vld [vmem:[#allocation2 + $0xc0] sm:$0xff]
      %v2287 = vld [vmem:[#allocation2 + $0xc8] sm:$0xf]
      %v2288 = vld [vmem:[#allocation2 + $0xcc] sm:$0xff]
      %v2289 = vld [vmem:[#allocation2 + $0xd4] sm:$0xf]
      %v2290 = vld [vmem:[#allocation2 + $0xd8] sm:$0xff]
      %v2291 = vld [vmem:[#allocation2 + $0xe0] sm:$0xf]
      %v2292 = vld [vmem:[#allocation2 + $0xe4] sm:$0xff]
      %v2293 = vld [vmem:[#allocation2 + $0xec] sm:$0xf]
      %v2294 = vld [vmem:[#allocation2 + $0xf0] sm:$0xff]
      %v2295 = vld [vmem:[#allocation2 + $0xf8] sm:$0xf]
      %v2296 = vld [vmem:[#allocation2 + $0xfc] sm:$0xff]
      %v2297 = vld [vmem:[#allocation2 + $0x104] sm:$0xf]
      %v2298 = vld [vmem:[#allocation2 + $0x108] sm:$0xff]
      %v2299 = vld [vmem:[#allocation2 + $0x110] sm:$0xf]
      %v2300 = vld [vmem:[#allocation2 + $0x114] sm:$0xff]
      %v2301 = vld [vmem:[#allocation2 + $0x11c] sm:$0xf]
      %v2302 = vld [vmem:[#allocation2 + $0x120] sm:$0xff]
      %v2303 = vld [vmem:[#allocation2 + $0x128] sm:$0xf]
      %v2304 = vld [vmem:[#allocation2 + $0x12c] sm:$0xff]
      %v2305 = vld [vmem:[#allocation2 + $0x134] sm:$0xf]
      %v2306 = vld [vmem:[#allocation2 + $0x138] sm:$0xff]
      %v2307 = vld [vmem:[#allocation2 + $0x140] sm:$0xf]
      %v2308 = vld [vmem:[#allocation2 + $0x144] sm:$0xff]
      %v2309 = vld [vmem:[#allocation2 + $0x14c] sm:$0xf]
      %v2310 = vld [vmem:[%s2 + $0x60] sm:$0xff]
      %v2311 = vld [vmem:[%s2 + $0x68] sm:$0xff]
      %v2312 = vld [vmem:[%s2 + $0x70] sm:$0xff]
      %v2313 = vld [vmem:[%s2 + $0x78] sm:$0xff]
      %v2314 = vld [vmem:[%s2 + $0x80] sm:$0xff]
      %v2315 = vld [vmem:[%s2 + $0x88] sm:$0xff]
      %v2316 = vld [vmem:[%s2 + $0x90] sm:$0xff]
      %v2317 = vld [vmem:[%s2 + $0x98] sm:$0xff]
      %2319 = vset.pattern.permute.xlu0 0
      %2320 = vperm.xlu0 %2319, %v2310
      %v2321 = vpop.permute.xlu0 %2320
      %2324 = vset.pattern.permute.xlu0 0
      %2325 = vperm.xlu0 %2324, %v2311
      %v2326 = vpop.permute.xlu0 %2325
      %2329 = vset.pattern.permute.xlu0 0
      %2330 = vperm.xlu0 %2329, %v2312
      %v2331 = vpop.permute.xlu0 %2330
      %2334 = vset.pattern.permute.xlu0 0
      %2335 = vperm.xlu0 %2334, %v2313
      %v2336 = vpop.permute.xlu0 %2335
      %2339 = vset.pattern.permute.xlu0 0
      %2340 = vperm.xlu0 %2339, %v2314
      %v2341 = vpop.permute.xlu0 %2340
      %2344 = vset.pattern.permute.xlu0 0
      %2345 = vperm.xlu0 %2344, %v2315
      %v2346 = vpop.permute.xlu0 %2345
      %2349 = vset.pattern.permute.xlu0 0
      %2350 = vperm.xlu0 %2349, %v2316
      %v2351 = vpop.permute.xlu0 %2350
      %2354 = vset.pattern.permute.xlu0 0
      %2355 = vperm.xlu0 %2354, %v2317
      %v2356 = vpop.permute.xlu0 %2355
      %v2366 = vunpack.c.l.b16 %v2246
      %v2367 = vunpack.c.h.b16 %v2246
      %v2368 = vunpack.c.l.b16 %v2247
      %v2369 = vunpack.c.h.b16 %v2247
      %v2370 = vunpack.c.l.b16 %v2248
      %v2371 = vunpack.c.h.b16 %v2248
      %v2372 = vunpack.c.l.b16 %v2249
      %v2373 = vunpack.c.h.b16 %v2249
      %v2374 = vunpack.c.l.b16 %v2250
      %v2375 = vunpack.c.h.b16 %v2250
      %v2376 = vunpack.c.l.b16 %v2251
      %v2377 = vunpack.c.h.b16 %v2251
      %v2378 = vunpack.c.l.b16 %v2252
      %v2379 = vunpack.c.h.b16 %v2252
      %v2380 = vunpack.c.l.b16 %v2253
      %v2381 = vunpack.c.h.b16 %v2253
      %v2382 = vpack.c.b16 %v2368, %v2366
      %v2383 = vpack.c.b16 %v2369, %v2367
      %v2384 = vpack.c.b16 %v2372, %v2370
      %v2385 = vpack.c.b16 %v2373, %v2371
      %v2386 = vpack.c.b16 %v2376, %v2374
      %v2387 = vpack.c.b16 %v2377, %v2375
      %v2388 = vpack.c.b16 %v2380, %v2378
      %v2389 = vpack.c.b16 %v2381, %v2379
      %v2450 = vunpack.c.l.b16 %v2254
      %v2451 = vunpack.c.h.b16 %v2254
      %v2452 = vunpack.c.l.b16 %v2255
      %v2453 = vunpack.c.l.b16 %v2256
      %v2454 = vunpack.c.h.b16 %v2256
      %v2455 = vunpack.c.l.b16 %v2257
      %v2456 = vunpack.c.l.b16 %v2258
      %v2457 = vunpack.c.h.b16 %v2258
      %v2458 = vunpack.c.l.b16 %v2259
      %v2459 = vunpack.c.l.b16 %v2260
      %v2460 = vunpack.c.h.b16 %v2260
      %v2461 = vunpack.c.l.b16 %v2261
      %v2462 = vunpack.c.l.b16 %v2262
      %v2463 = vunpack.c.h.b16 %v2262
      %v2464 = vunpack.c.l.b16 %v2263
      %v2465 = vunpack.c.l.b16 %v2264
      %v2466 = vunpack.c.h.b16 %v2264
      %v2467 = vunpack.c.l.b16 %v2265
      %v2468 = vunpack.c.l.b16 %v2266
      %v2469 = vunpack.c.h.b16 %v2266
      %v2470 = vunpack.c.l.b16 %v2267
      %v2471 = vunpack.c.l.b16 %v2268
      %v2472 = vunpack.c.h.b16 %v2268
      %v2473 = vunpack.c.l.b16 %v2269
      %v2474 = vunpack.c.l.b16 %v2270
      %v2475 = vunpack.c.h.b16 %v2270
      %v2476 = vunpack.c.l.b16 %v2271
      %v2477 = vunpack.c.l.b16 %v2272
      %v2478 = vunpack.c.h.b16 %v2272
      %v2479 = vunpack.c.l.b16 %v2273
      %v2480 = vunpack.c.l.b16 %v2274
      %v2481 = vunpack.c.h.b16 %v2274
      %v2482 = vunpack.c.l.b16 %v2275
      %v2483 = vunpack.c.l.b16 %v2276
      %v2484 = vunpack.c.h.b16 %v2276
      %v2485 = vunpack.c.l.b16 %v2277
      %v2486 = vunpack.c.l.b16 %v2278
      %v2487 = vunpack.c.h.b16 %v2278
      %v2488 = vunpack.c.l.b16 %v2279
      %v2489 = vunpack.c.l.b16 %v2280
      %v2490 = vunpack.c.h.b16 %v2280
      %v2491 = vunpack.c.l.b16 %v2281
      %v2492 = vunpack.c.l.b16 %v2282
      %v2493 = vunpack.c.h.b16 %v2282
      %v2494 = vunpack.c.l.b16 %v2283
      %v2495 = vunpack.c.l.b16 %v2284
      %v2496 = vunpack.c.h.b16 %v2284
      %v2497 = vunpack.c.l.b16 %v2285
      %v2498 = vunpack.c.l.b16 %v2286
      %v2499 = vunpack.c.h.b16 %v2286
      %v2500 = vunpack.c.l.b16 %v2287
      %v2501 = vunpack.c.l.b16 %v2288
      %v2502 = vunpack.c.h.b16 %v2288
      %v2503 = vunpack.c.l.b16 %v2289
      %v2504 = vunpack.c.l.b16 %v2290
      %v2505 = vunpack.c.h.b16 %v2290
      %v2506 = vunpack.c.l.b16 %v2291
      %v2507 = vunpack.c.l.b16 %v2292
      %v2508 = vunpack.c.h.b16 %v2292
      %v2509 = vunpack.c.l.b16 %v2293
      %v2510 = vunpack.c.l.b16 %v2294
      %v2511 = vunpack.c.h.b16 %v2294
      %v2512 = vunpack.c.l.b16 %v2295
      %v2513 = vunpack.c.l.b16 %v2296
      %v2514 = vunpack.c.h.b16 %v2296
      %v2515 = vunpack.c.l.b16 %v2297
      %v2516 = vunpack.c.l.b16 %v2298
      %v2517 = vunpack.c.h.b16 %v2298
      %v2518 = vunpack.c.l.b16 %v2299
      %v2519 = vunpack.c.l.b16 %v2300
      %v2520 = vunpack.c.h.b16 %v2300
      %v2521 = vunpack.c.l.b16 %v2301
      %v2522 = vunpack.c.l.b16 %v2302
      %v2523 = vunpack.c.h.b16 %v2302
      %v2524 = vunpack.c.l.b16 %v2303
      %v2525 = vunpack.c.l.b16 %v2304
      %v2526 = vunpack.c.h.b16 %v2304
      %v2527 = vunpack.c.l.b16 %v2305
      %v2528 = vunpack.c.l.b16 %v2306
      %v2529 = vunpack.c.h.b16 %v2306
      %v2530 = vunpack.c.l.b16 %v2307
      %v2531 = vunpack.c.l.b16 %v2308
      %v2532 = vunpack.c.h.b16 %v2308
      %v2533 = vunpack.c.l.b16 %v2309
      %v2534 = vpack.c.b16 %v2453, %v2450
      %v2535 = vpack.c.b16 %v2454, %v2451
      %v2536 = vpack.c.b16 %v2455, %v2452
      %v2537 = vpack.c.b16 %v2459, %v2456
      %v2538 = vpack.c.b16 %v2460, %v2457
      %v2539 = vpack.c.b16 %v2461, %v2458
      %v2540 = vpack.c.b16 %v2465, %v2462
      %v2541 = vpack.c.b16 %v2466, %v2463
      %v2542 = vpack.c.b16 %v2467, %v2464
      %v2543 = vpack.c.b16 %v2471, %v2468
      %v2544 = vpack.c.b16 %v2472, %v2469
      %v2545 = vpack.c.b16 %v2473, %v2470
      %v2546 = vpack.c.b16 %v2477, %v2474
      %v2547 = vpack.c.b16 %v2478, %v2475
      %v2548 = vpack.c.b16 %v2479, %v2476
      %v2549 = vpack.c.b16 %v2483, %v2480
      %v2550 = vpack.c.b16 %v2484, %v2481
      %v2551 = vpack.c.b16 %v2485, %v2482
      %v2552 = vpack.c.b16 %v2489, %v2486
      %v2553 = vpack.c.b16 %v2490, %v2487
      %v2554 = vpack.c.b16 %v2491, %v2488
      %v2555 = vpack.c.b16 %v2495, %v2492
      %v2556 = vpack.c.b16 %v2496, %v2493
      %v2557 = vpack.c.b16 %v2497, %v2494
      %v2558 = vpack.c.b16 %v2501, %v2498
      %v2559 = vpack.c.b16 %v2502, %v2499
      %v2560 = vpack.c.b16 %v2503, %v2500
      %v2561 = vpack.c.b16 %v2507, %v2504
      %v2562 = vpack.c.b16 %v2508, %v2505
      %v2563 = vpack.c.b16 %v2509, %v2506
      %v2564 = vpack.c.b16 %v2513, %v2510
      %v2565 = vpack.c.b16 %v2514, %v2511
      %v2566 = vpack.c.b16 %v2515, %v2512
      %v2567 = vpack.c.b16 %v2519, %v2516
      %v2568 = vpack.c.b16 %v2520, %v2517
      %v2569 = vpack.c.b16 %v2521, %v2518
      %v2570 = vpack.c.b16 %v2525, %v2522
      %v2571 = vpack.c.b16 %v2526, %v2523
      %v2572 = vpack.c.b16 %v2527, %v2524
      %v2573 = vpack.c.b16 %v2531, %v2528
      %v2574 = vpack.c.b16 %v2532, %v2529
      %v2575 = vpack.c.b16 %v2533, %v2530
      %v2619 = vsel %vm997, %v2383, 0
      %v2622 = vsel %vm997, %v2385, 0
      %v2625 = vsel %vm997, %v2387, 0
      %v2628 = vsel %vm997, %v2389, 0
      %2630 = vmatpush.bf16.msra.mxu0 %v2555
      %2631 = vmatpush.bf16.msra.mxu0 %v2552
      %2632 = vmatpush.bf16.msra.mxu0 %v2549
      %2633 = vmatpush.bf16.msra.mxu0 %v2546
      %2634 = vmatpush.bf16.msra.mxu0 %v2543
      %2635 = vmatpush.bf16.msra.mxu0 %v2540
      %2636 = vmatpush.bf16.msra.mxu0 %v2537
      %2637 = vmatpush.bf16.msra.mxu0 %v2534
      %2638 = vmatmul.bf16.gmra.mxu0 %v2382
      %v2639 = vpop.f32.mrf.mxu0
      %v2640 = vadd.f32 %v2321, %v2639
      %v2641 = vpop.f32.mrf.mxu0
      %v2642 = vadd.f32 %v2326, %v2641
      %2643 = vmatmul.bf16.gmra.mxu0 %v2384
      %v2644 = vpop.f32.mrf.mxu0
      %v2645 = vadd.f32 %v2331, %v2644
      %v2646 = vpop.f32.mrf.mxu0
      %v2647 = vadd.f32 %v2336, %v2646
      %2648 = vmatmul.bf16.gmra.mxu0 %v2386
      %v2649 = vpop.f32.mrf.mxu0
      %v2650 = vadd.f32 %v2341, %v2649
      %v2651 = vpop.f32.mrf.mxu0
      %v2652 = vadd.f32 %v2346, %v2651
      %2653 = vmatmul.bf16.gmra.mxu0 %v2388
      %v2654 = vpop.f32.mrf.mxu0
      %v2655 = vadd.f32 %v2351, %v2654
      %v2656 = vpop.f32.mrf.mxu0
      %v2657 = vadd.f32 %v2356, %v2656
      %2658 = vdwg.mxu0
      %2659 = vmatpush.bf16.msra.mxu0 0
      %2660 = vmatpush.bf16.msra.mxu0 0
      %2661 = vmatpush.bf16.msra.mxu0 %v2573
      %2662 = vmatpush.bf16.msra.mxu0 %v2570
      %2663 = vmatpush.bf16.msra.mxu0 %v2567
      %2664 = vmatpush.bf16.msra.mxu0 %v2564
      %2665 = vmatpush.bf16.msra.mxu0 %v2561
      %2666 = vmatpush.bf16.msra.mxu0 %v2558
      %2667 = vmatmul.bf16.gmra.mxu0 %v2619
      %v2668 = vpop.f32.mrf.mxu0
      %v2669 = vadd.f32 %v2640, %v2668
      %v2670 = vpop.f32.mrf.mxu0
      %v2671 = vadd.f32 %v2642, %v2670
      %2672 = vmatmul.bf16.gmra.mxu0 %v2622
      %v2673 = vpop.f32.mrf.mxu0
      %v2674 = vadd.f32 %v2645, %v2673
      %v2675 = vpop.f32.mrf.mxu0
      %v2676 = vadd.f32 %v2647, %v2675
      %2677 = vmatmul.bf16.gmra.mxu0 %v2625
      %v2678 = vpop.f32.mrf.mxu0
      %v2679 = vadd.f32 %v2650, %v2678
      %v2680 = vpop.f32.mrf.mxu0
      %v2681 = vadd.f32 %v2652, %v2680
      %2682 = vmatmul.bf16.gmra.mxu0 %v2628
      %v2683 = vpop.f32.mrf.mxu0
      %v2684 = vadd.f32 %v2655, %v2683
      %v2685 = vpop.f32.mrf.mxu0
      %v2686 = vadd.f32 %v2657, %v2685
      %2687 = vdwg.mxu0
      %2688 = vmatpush.bf16.msra.mxu0 %v2556
      %2689 = vmatpush.bf16.msra.mxu0 %v2553
      %2690 = vmatpush.bf16.msra.mxu0 %v2550
      %2691 = vmatpush.bf16.msra.mxu0 %v2547
      %2692 = vmatpush.bf16.msra.mxu0 %v2544
      %2693 = vmatpush.bf16.msra.mxu0 %v2541
      %2694 = vmatpush.bf16.msra.mxu0 %v2538
      %2695 = vmatpush.bf16.msra.mxu0 %v2535
      %2696 = vmatmul.bf16.gmra.mxu0 %v2382
      %v2697 = vpop.f32.mrf.mxu0
      %v2698 = vadd.f32 %v2321, %v2697
      %v2699 = vpop.f32.mrf.mxu0
      %v2700 = vadd.f32 %v2326, %v2699
      %2701 = vmatmul.bf16.gmra.mxu0 %v2384
      %v2702 = vpop.f32.mrf.mxu0
      %v2703 = vadd.f32 %v2331, %v2702
      %v2704 = vpop.f32.mrf.mxu0
      %v2705 = vadd.f32 %v2336, %v2704
      %2706 = vmatmul.bf16.gmra.mxu0 %v2386
      %v2707 = vpop.f32.mrf.mxu0
      %v2708 = vadd.f32 %v2341, %v2707
      %v2709 = vpop.f32.mrf.mxu0
      %v2710 = vadd.f32 %v2346, %v2709
      %2711 = vmatmul.bf16.gmra.mxu0 %v2388
      %v2712 = vpop.f32.mrf.mxu0
      %v2713 = vadd.f32 %v2351, %v2712
      %v2714 = vpop.f32.mrf.mxu0
      %v2715 = vadd.f32 %v2356, %v2714
      %2716 = vdwg.mxu0
      %2717 = vmatpush.bf16.msra.mxu0 0
      %2718 = vmatpush.bf16.msra.mxu0 0
      %2719 = vmatpush.bf16.msra.mxu0 %v2574
      %2720 = vmatpush.bf16.msra.mxu0 %v2571
      %2721 = vmatpush.bf16.msra.mxu0 %v2568
      %2722 = vmatpush.bf16.msra.mxu0 %v2565
      %2723 = vmatpush.bf16.msra.mxu0 %v2562
      %2724 = vmatpush.bf16.msra.mxu0 %v2559
      %2725 = vmatmul.bf16.gmra.mxu0 %v2619
      %v2726 = vpop.f32.mrf.mxu0
      %v2727 = vadd.f32 %v2698, %v2726
      %v2728 = vpop.f32.mrf.mxu0
      %v2729 = vadd.f32 %v2700, %v2728
      %2730 = vmatmul.bf16.gmra.mxu0 %v2622
      %v2731 = vpop.f32.mrf.mxu0
      %v2732 = vadd.f32 %v2703, %v2731
      %v2733 = vpop.f32.mrf.mxu0
      %v2734 = vadd.f32 %v2705, %v2733
      %2735 = vmatmul.bf16.gmra.mxu0 %v2625
      %v2736 = vpop.f32.mrf.mxu0
      %v2737 = vadd.f32 %v2708, %v2736
      %v2738 = vpop.f32.mrf.mxu0
      %v2739 = vadd.f32 %v2710, %v2738
      %2740 = vmatmul.bf16.gmra.mxu0 %v2628
      %v2741 = vpop.f32.mrf.mxu0
      %v2742 = vadd.f32 %v2713, %v2741
      %v2743 = vpop.f32.mrf.mxu0
      %v2744 = vadd.f32 %v2715, %v2743
      %2745 = vdwg.mxu0
      %2746 = vmatpush.bf16.msra.mxu0 %v2557
      %2747 = vmatpush.bf16.msra.mxu0 %v2554
      %2748 = vmatpush.bf16.msra.mxu0 %v2551
      %2749 = vmatpush.bf16.msra.mxu0 %v2548
      %2750 = vmatpush.bf16.msra.mxu0 %v2545
      %2751 = vmatpush.bf16.msra.mxu0 %v2542
      %2752 = vmatpush.bf16.msra.mxu0 %v2539
      %2753 = vmatpush.bf16.msra.mxu0 %v2536
      %2754 = vmatmul.bf16.gmra.mxu0 %v2382
      %v2755 = vpop.f32.mrf.mxu0
      %v2756 = vadd.f32 %v2321, %v2755
      %v2757 = vpop.f32.mrf.mxu0
      %v2758 = vadd.f32 %v2326, %v2757
      %2759 = vmatmul.bf16.gmra.mxu0 %v2384
      %v2760 = vpop.f32.mrf.mxu0
      %v2761 = vadd.f32 %v2331, %v2760
      %v2762 = vpop.f32.mrf.mxu0
      %v2763 = vadd.f32 %v2336, %v2762
      %2764 = vmatmul.bf16.gmra.mxu0 %v2386
      %v2765 = vpop.f32.mrf.mxu0
      %v2766 = vadd.f32 %v2341, %v2765
      %v2767 = vpop.f32.mrf.mxu0
      %v2768 = vadd.f32 %v2346, %v2767
      %2769 = vmatmul.bf16.gmra.mxu0 %v2388
      %v2770 = vpop.f32.mrf.mxu0
      %v2771 = vadd.f32 %v2351, %v2770
      %v2772 = vpop.f32.mrf.mxu0
      %v2773 = vadd.f32 %v2356, %v2772
      %2774 = vdwg.mxu0
      %2775 = vmatpush.bf16.msra.mxu0 0
      %2776 = vmatpush.bf16.msra.mxu0 0
      %2777 = vmatpush.bf16.msra.mxu0 %v2575
      %2778 = vmatpush.bf16.msra.mxu0 %v2572
      %2779 = vmatpush.bf16.msra.mxu0 %v2569
      %2780 = vmatpush.bf16.msra.mxu0 %v2566
      %2781 = vmatpush.bf16.msra.mxu0 %v2563
      %2782 = vmatpush.bf16.msra.mxu0 %v2560
      %2783 = vmatmul.bf16.gmra.mxu0 %v2619
      %v2784 = vpop.f32.mrf.mxu0
      %v2785 = vadd.f32 %v2756, %v2784
      %v2786 = vpop.f32.mrf.mxu0
      %v2787 = vadd.f32 %v2758, %v2786
      %2788 = vmatmul.bf16.gmra.mxu0 %v2622
      %v2789 = vpop.f32.mrf.mxu0
      %v2790 = vadd.f32 %v2761, %v2789
      %v2791 = vpop.f32.mrf.mxu0
      %v2792 = vadd.f32 %v2763, %v2791
      %2793 = vmatmul.bf16.gmra.mxu0 %v2625
      %v2794 = vpop.f32.mrf.mxu0
      %v2795 = vadd.f32 %v2766, %v2794
      %v2796 = vpop.f32.mrf.mxu0
      %v2797 = vadd.f32 %v2768, %v2796
      %2798 = vmatmul.bf16.gmra.mxu0 %v2628
      %v2799 = vpop.f32.mrf.mxu0
      %v2800 = vadd.f32 %v2771, %v2799
      %v2801 = vpop.f32.mrf.mxu0
      %v2802 = vadd.f32 %v2773, %v2801
      %2803 = vdwg.mxu0
      %v2804 = vmax.f32 %v2669, 0.0
      %v2805 = vmax.f32 %v2727, 0.0
      %v2806 = vmax.f32 %v2785, 0.0
      %v2807 = vmax.f32 %v2671, 0.0
      %v2808 = vmax.f32 %v2729, 0.0
      %v2809 = vmax.f32 %v2787, 0.0
      %v2810 = vmax.f32 %v2674, 0.0
      %v2811 = vmax.f32 %v2732, 0.0
      %v2812 = vmax.f32 %v2790, 0.0
      %v2813 = vmax.f32 %v2676, 0.0
      %v2814 = vmax.f32 %v2734, 0.0
      %v2815 = vmax.f32 %v2792, 0.0
      %v2816 = vmax.f32 %v2679, 0.0
      %v2817 = vmax.f32 %v2737, 0.0
      %v2818 = vmax.f32 %v2795, 0.0
      %v2819 = vmax.f32 %v2681, 0.0
      %v2820 = vmax.f32 %v2739, 0.0
      %v2821 = vmax.f32 %v2797, 0.0
      %v2822 = vmax.f32 %v2684, 0.0
      %v2823 = vmax.f32 %v2742, 0.0
      %v2824 = vmax.f32 %v2800, 0.0
      %v2825 = vmax.f32 %v2686, 0.0
      %v2826 = vmax.f32 %v2744, 0.0
      %v2827 = vmax.f32 %v2802, 0.0
      %v2828 = vsel %vm339, %v2804, 0.0
      %v2829 = vsel %vm340, %v2805, 0.0
      %v2830 = vsel %vm341, %v2806, 0.0
      %v2831 = vsel %vm339, %v2807, 0.0
      %v2832 = vsel %vm340, %v2808, 0.0
      %v2833 = vsel %vm341, %v2809, 0.0
      %v2834 = vsel %vm339, %v2810, 0.0
      %v2835 = vsel %vm340, %v2811, 0.0
      %v2836 = vsel %vm341, %v2812, 0.0
      %v2837 = vsel %vm339, %v2813, 0.0
      %v2838 = vsel %vm340, %v2814, 0.0
      %v2839 = vsel %vm341, %v2815, 0.0
      %v2840 = vsel %vm339, %v2816, 0.0
      %v2841 = vsel %vm340, %v2817, 0.0
      %v2842 = vsel %vm341, %v2818, 0.0
      %v2843 = vsel %vm339, %v2819, 0.0
      %v2844 = vsel %vm340, %v2820, 0.0
      %v2845 = vsel %vm341, %v2821, 0.0
      %v2846 = vsel %vm339, %v2822, 0.0
      %v2847 = vsel %vm340, %v2823, 0.0
      %v2848 = vsel %vm341, %v2824, 0.0
      %v2849 = vsel %vm339, %v2825, 0.0
      %v2850 = vsel %vm340, %v2826, 0.0
      %v2851 = vsel %vm341, %v2827, 0.0
      %v2852 = vpack.c.bf16 %v2829, %v2828
      %v2853 = vpack.c.bf16 %v2830, %v2830
      %v2854 = vpack.c.bf16 %v2832, %v2831
      %v2855 = vpack.c.bf16 %v2833, %v2833
      %v2856 = vpack.c.bf16 %v2835, %v2834
      %v2857 = vpack.c.bf16 %v2836, %v2836
      %v2858 = vpack.c.bf16 %v2838, %v2837
      %v2859 = vpack.c.bf16 %v2839, %v2839
      %v2860 = vpack.c.bf16 %v2841, %v2840
      %v2861 = vpack.c.bf16 %v2842, %v2842
      %v2862 = vpack.c.bf16 %v2844, %v2843
      %v2863 = vpack.c.bf16 %v2845, %v2845
      %v2864 = vpack.c.bf16 %v2847, %v2846
      %v2865 = vpack.c.bf16 %v2848, %v2848
      %v2866 = vpack.c.bf16 %v2850, %v2849
      %v2867 = vpack.c.bf16 %v2851, %v2851
      %2884 = vrot.lane.b32.xlu0 %v2852, 6
      %v2885 = vpop.permute.xlu0 %2884
      %2886 = vrot.lane.b32.xlu0 %v2853, 6
      %v2887 = vpop.permute.xlu0 %2886
      %2888 = vrot.lane.b32.xlu0 %v2854, 6
      %v2889 = vpop.permute.xlu0 %2888
      %2890 = vrot.lane.b32.xlu0 %v2855, 6
      %v2891 = vpop.permute.xlu0 %2890
      %2892 = vrot.lane.b32.xlu0 %v2856, 6
      %v2893 = vpop.permute.xlu0 %2892
      %2894 = vrot.lane.b32.xlu0 %v2857, 6
      %v2895 = vpop.permute.xlu0 %2894
      %2896 = vrot.lane.b32.xlu0 %v2858, 6
      %v2897 = vpop.permute.xlu0 %2896
      %2898 = vrot.lane.b32.xlu0 %v2859, 6
      %v2899 = vpop.permute.xlu0 %2898
      %2900 = vrot.lane.b32.xlu0 %v2860, 6
      %v2901 = vpop.permute.xlu0 %2900
      %2902 = vrot.lane.b32.xlu0 %v2861, 6
      %v2903 = vpop.permute.xlu0 %2902
      %2904 = vrot.lane.b32.xlu0 %v2862, 6
      %v2905 = vpop.permute.xlu0 %2904
      %2906 = vrot.lane.b32.xlu0 %v2863, 6
      %v2907 = vpop.permute.xlu0 %2906
      %2908 = vrot.lane.b32.xlu0 %v2864, 6
      %v2909 = vpop.permute.xlu0 %2908
      %2910 = vrot.lane.b32.xlu0 %v2865, 6
      %v2911 = vpop.permute.xlu0 %2910
      %2912 = vrot.lane.b32.xlu0 %v2866, 6
      %v2913 = vpop.permute.xlu0 %2912
      %2914 = vrot.lane.b32.xlu0 %v2867, 6
      %v2915 = vpop.permute.xlu0 %2914
      %v2916 = vrot.slane %v2885, 4
      %v2917 = vrot.slane %v2889, 4
      %v2918 = vrot.slane %v2893, 4
      %v2919 = vrot.slane %v2897, 4
      %v2920 = vrot.slane %v2901, 4
      %v2921 = vrot.slane %v2905, 4
      %v2922 = vrot.slane %v2909, 4
      %v2923 = vrot.slane %v2913, 4
      %v2924 = vsel %vm1972, %v2916, %v2885
      %v2925 = vsel %vm1972, %v2916, %v2887
      %v2926 = vsel %vm1972, %v2917, %v2889
      %v2927 = vsel %vm1972, %v2917, %v2891
      %v2928 = vsel %vm1972, %v2918, %v2893
      %v2929 = vsel %vm1972, %v2918, %v2895
      %v2930 = vsel %vm1972, %v2919, %v2897
      %v2931 = vsel %vm1972, %v2919, %v2899
      %v2932 = vsel %vm1972, %v2920, %v2901
      %v2933 = vsel %vm1972, %v2920, %v2903
      %v2934 = vsel %vm1972, %v2921, %v2905
      %v2935 = vsel %vm1972, %v2921, %v2907
      %v2936 = vsel %vm1972, %v2922, %v2909
      %v2937 = vsel %vm1972, %v2922, %v2911
      %v2938 = vsel %vm1972, %v2923, %v2913
      %v2939 = vsel %vm1972, %v2923, %v2915
      %2956 = vst.msk [vmem:[#allocation2] sm:$0xff] %vm1990, %v2924
      %2957 = vst [vmem:[#allocation2 + $0x8] sm:$0xf] %v2925
      %2958 = vst.msk [vmem:[#allocation2 + $0xc] sm:$0xff] %vm1990, %v2926
      %2959 = vst [vmem:[#allocation2 + $0x14] sm:$0xf] %v2927
      %2960 = vst.msk [vmem:[#allocation2 + $0x18] sm:$0xff] %vm1990, %v2928
      %2961 = vst [vmem:[#allocation2 + $0x20] sm:$0xf] %v2929
      %2962 = vst.msk [vmem:[#allocation2 + $0x24] sm:$0xff] %vm1990, %v2930
      %2963 = vst [vmem:[#allocation2 + $0x2c] sm:$0xf] %v2931
      %2964 = vst.msk [vmem:[#allocation2 + $0x30] sm:$0xff] %vm1990, %v2932
      %2965 = vst [vmem:[#allocation2 + $0x38] sm:$0xf] %v2933
      %2966 = vst.msk [vmem:[#allocation2 + $0x3c] sm:$0xff] %vm1990, %v2934
      %2967 = vst [vmem:[#allocation2 + $0x44] sm:$0xf] %v2935
      %2968 = vst.msk [vmem:[#allocation2 + $0x48] sm:$0xff] %vm1990, %v2936
      %2969 = vst [vmem:[#allocation2 + $0x50] sm:$0xf] %v2937
      %2970 = vst.msk [vmem:[#allocation2 + $0x54] sm:$0xff] %vm1990, %v2938
      %2971 = vst [vmem:[#allocation2 + $0x5c] sm:$0xf] %v2939
      %2972 = vrot.lane.b32.xlu0 %v2852, 4
      %v2973 = vpop.permute.xlu0 %2972
      %2974 = vrot.lane.b32.xlu0 %v2853, 4
      %v2975 = vpop.permute.xlu0 %2974
      %2976 = vrot.lane.b32.xlu0 %v2854, 4
      %v2977 = vpop.permute.xlu0 %2976
      %2978 = vrot.lane.b32.xlu0 %v2855, 4
      %v2979 = vpop.permute.xlu0 %2978
      %2980 = vrot.lane.b32.xlu0 %v2856, 4
      %v2981 = vpop.permute.xlu0 %2980
      %2982 = vrot.lane.b32.xlu0 %v2857, 4
      %v2983 = vpop.permute.xlu0 %2982
      %2984 = vrot.lane.b32.xlu0 %v2858, 4
      %v2985 = vpop.permute.xlu0 %2984
      %2986 = vrot.lane.b32.xlu0 %v2859, 4
      %v2987 = vpop.permute.xlu0 %2986
      %2988 = vrot.lane.b32.xlu0 %v2860, 4
      %v2989 = vpop.permute.xlu0 %2988
      %2990 = vrot.lane.b32.xlu0 %v2861, 4
      %v2991 = vpop.permute.xlu0 %2990
      %2992 = vrot.lane.b32.xlu0 %v2862, 4
      %v2993 = vpop.permute.xlu0 %2992
      %2994 = vrot.lane.b32.xlu0 %v2863, 4
      %v2995 = vpop.permute.xlu0 %2994
      %2996 = vrot.lane.b32.xlu0 %v2864, 4
      %v2997 = vpop.permute.xlu0 %2996
      %2998 = vrot.lane.b32.xlu0 %v2865, 4
      %v2999 = vpop.permute.xlu0 %2998
      %3000 = vrot.lane.b32.xlu0 %v2866, 4
      %v3001 = vpop.permute.xlu0 %3000
      %3002 = vrot.lane.b32.xlu0 %v2867, 4
      %v3003 = vpop.permute.xlu0 %3002
      %v3004 = vrot.slane %v2973, 4
      %v3005 = vrot.slane %v2977, 4
      %v3006 = vrot.slane %v2981, 4
      %v3007 = vrot.slane %v2985, 4
      %v3008 = vrot.slane %v2989, 4
      %v3009 = vrot.slane %v2993, 4
      %v3010 = vrot.slane %v2997, 4
      %v3011 = vrot.slane %v3001, 4
      %v3012 = vsel %vm2019, %v3004, %v2973
      %v3013 = vsel %vm2019, %v3004, %v2975
      %v3014 = vsel %vm2019, %v3005, %v2977
      %v3015 = vsel %vm2019, %v3005, %v2979
      %v3016 = vsel %vm2019, %v3006, %v2981
      %v3017 = vsel %vm2019, %v3006, %v2983
      %v3018 = vsel %vm2019, %v3007, %v2985
      %v3019 = vsel %vm2019, %v3007, %v2987
      %v3020 = vsel %vm2019, %v3008, %v2989
      %v3021 = vsel %vm2019, %v3008, %v2991
      %v3022 = vsel %vm2019, %v3009, %v2993
      %v3023 = vsel %vm2019, %v3009, %v2995
      %v3024 = vsel %vm2019, %v3010, %v2997
      %v3025 = vsel %vm2019, %v3010, %v2999
      %v3026 = vsel %vm2019, %v3011, %v3001
      %v3027 = vsel %vm2019, %v3011, %v3003
      %3044 = vst.msk [vmem:[#allocation2 + $0x60] sm:$0xff] %vm2037, %v3012
      %3045 = vst [vmem:[#allocation2 + $0x68] sm:$0xf] %v3013
      %3046 = vst.msk [vmem:[#allocation2 + $0x6c] sm:$0xff] %vm2037, %v3014
      %3047 = vst [vmem:[#allocation2 + $0x74] sm:$0xf] %v3015
      %3048 = vst.msk [vmem:[#allocation2 + $0x78] sm:$0xff] %vm2037, %v3016
      %3049 = vst [vmem:[#allocation2 + $0x80] sm:$0xf] %v3017
      %3050 = vst.msk [vmem:[#allocation2 + $0x84] sm:$0xff] %vm2037, %v3018
      %3051 = vst [vmem:[#allocation2 + $0x8c] sm:$0xf] %v3019
      %3052 = vst.msk [vmem:[#allocation2 + $0x90] sm:$0xff] %vm2037, %v3020
      %3053 = vst [vmem:[#allocation2 + $0x98] sm:$0xf] %v3021
      %3054 = vst.msk [vmem:[#allocation2 + $0x9c] sm:$0xff] %vm2037, %v3022
      %3055 = vst [vmem:[#allocation2 + $0xa4] sm:$0xf] %v3023
      %3056 = vst.msk [vmem:[#allocation2 + $0xa8] sm:$0xff] %vm2037, %v3024
      %3057 = vst [vmem:[#allocation2 + $0xb0] sm:$0xf] %v3025
      %3058 = vst.msk [vmem:[#allocation2 + $0xb4] sm:$0xff] %vm2037, %v3026
      %3059 = vst [vmem:[#allocation2 + $0xbc] sm:$0xf] %v3027
      %3060 = vrot.lane.b32.xlu0 %v2852, 2
      %v3061 = vpop.permute.xlu0 %3060
      %3062 = vrot.lane.b32.xlu0 %v2853, 2
      %v3063 = vpop.permute.xlu0 %3062
      %3064 = vrot.lane.b32.xlu0 %v2854, 2
      %v3065 = vpop.permute.xlu0 %3064
      %3066 = vrot.lane.b32.xlu0 %v2855, 2
      %v3067 = vpop.permute.xlu0 %3066
      %3068 = vrot.lane.b32.xlu0 %v2856, 2
      %v3069 = vpop.permute.xlu0 %3068
      %3070 = vrot.lane.b32.xlu0 %v2857, 2
      %v3071 = vpop.permute.xlu0 %3070
      %3072 = vrot.lane.b32.xlu0 %v2858, 2
      %v3073 = vpop.permute.xlu0 %3072
      %3074 = vrot.lane.b32.xlu0 %v2859, 2
      %v3075 = vpop.permute.xlu0 %3074
      %3076 = vrot.lane.b32.xlu0 %v2860, 2
      %v3077 = vpop.permute.xlu0 %3076
      %3078 = vrot.lane.b32.xlu0 %v2861, 2
      %v3079 = vpop.permute.xlu0 %3078
      %3080 = vrot.lane.b32.xlu0 %v2862, 2
      %v3081 = vpop.permute.xlu0 %3080
      %3082 = vrot.lane.b32.xlu0 %v2863, 2
      %v3083 = vpop.permute.xlu0 %3082
      %3084 = vrot.lane.b32.xlu0 %v2864, 2
      %v3085 = vpop.permute.xlu0 %3084
      %3086 = vrot.lane.b32.xlu0 %v2865, 2
      %v3087 = vpop.permute.xlu0 %3086
      %3088 = vrot.lane.b32.xlu0 %v2866, 2
      %v3089 = vpop.permute.xlu0 %3088
      %3090 = vrot.lane.b32.xlu0 %v2867, 2
      %v3091 = vpop.permute.xlu0 %3090
      %v3092 = vrot.slane %v3061, 4
      %v3093 = vrot.slane %v3065, 4
      %v3094 = vrot.slane %v3069, 4
      %v3095 = vrot.slane %v3073, 4
      %v3096 = vrot.slane %v3077, 4
      %v3097 = vrot.slane %v3081, 4
      %v3098 = vrot.slane %v3085, 4
      %v3099 = vrot.slane %v3089, 4
      %v3100 = vsel %vm438, %v3092, %v3061
      %v3101 = vsel %vm438, %v3092, %v3063
      %v3102 = vsel %vm438, %v3093, %v3065
      %v3103 = vsel %vm438, %v3093, %v3067
      %v3104 = vsel %vm438, %v3094, %v3069
      %v3105 = vsel %vm438, %v3094, %v3071
      %v3106 = vsel %vm438, %v3095, %v3073
      %v3107 = vsel %vm438, %v3095, %v3075
      %v3108 = vsel %vm438, %v3096, %v3077
      %v3109 = vsel %vm438, %v3096, %v3079
      %v3110 = vsel %vm438, %v3097, %v3081
      %v3111 = vsel %vm438, %v3097, %v3083
      %v3112 = vsel %vm438, %v3098, %v3085
      %v3113 = vsel %vm438, %v3098, %v3087
      %v3114 = vsel %vm438, %v3099, %v3089
      %v3115 = vsel %vm438, %v3099, %v3091
      %3132 = vst.msk [vmem:[#allocation2 + $0xc0] sm:$0xff] %vm456, %v3100
      %3133 = vst [vmem:[#allocation2 + $0xc8] sm:$0xf] %v3101
      %3134 = vst.msk [vmem:[#allocation2 + $0xcc] sm:$0xff] %vm456, %v3102
      %3135 = vst [vmem:[#allocation2 + $0xd4] sm:$0xf] %v3103
      %3136 = vst.msk [vmem:[#allocation2 + $0xd8] sm:$0xff] %vm456, %v3104
      %3137 = vst [vmem:[#allocation2 + $0xe0] sm:$0xf] %v3105
      %3138 = vst.msk [vmem:[#allocation2 + $0xe4] sm:$0xff] %vm456, %v3106
      %3139 = vst [vmem:[#allocation2 + $0xec] sm:$0xf] %v3107
      %3140 = vst.msk [vmem:[#allocation2 + $0xf0] sm:$0xff] %vm456, %v3108
      %3141 = vst [vmem:[#allocation2 + $0xf8] sm:$0xf] %v3109
      %3142 = vst.msk [vmem:[#allocation2 + $0xfc] sm:$0xff] %vm456, %v3110
      %3143 = vst [vmem:[#allocation2 + $0x104] sm:$0xf] %v3111
      %3144 = vst.msk [vmem:[#allocation2 + $0x108] sm:$0xff] %vm456, %v3112
      %3145 = vst [vmem:[#allocation2 + $0x110] sm:$0xf] %v3113
      %3146 = vst.msk [vmem:[#allocation2 + $0x114] sm:$0xff] %vm456, %v3114
      %3147 = vst [vmem:[#allocation2 + $0x11c] sm:$0xf] %v3115
      %3148 = vst [vmem:[#allocation2 + $0x120] sm:$0xff] %v2852
      %3149 = vst [vmem:[#allocation2 + $0x128] sm:$0xf] %v2853
      %3150 = vst [vmem:[#allocation2 + $0x12c] sm:$0xff] %v2854
      %3151 = vst [vmem:[#allocation2 + $0x134] sm:$0xf] %v2855
      %3152 = vst [vmem:[#allocation2 + $0x138] sm:$0xff] %v2856
      %3153 = vst [vmem:[#allocation2 + $0x140] sm:$0xf] %v2857
      %3154 = vst [vmem:[#allocation2 + $0x144] sm:$0xff] %v2858
      %3155 = vst [vmem:[#allocation2 + $0x14c] sm:$0xf] %v2859
      %3156 = vst [vmem:[#allocation2 + $0x150] sm:$0xff] %v2860
      %3157 = vst [vmem:[#allocation2 + $0x158] sm:$0xf] %v2861
      %3158 = vst [vmem:[#allocation2 + $0x15c] sm:$0xff] %v2862
      %3159 = vst [vmem:[#allocation2 + $0x164] sm:$0xf] %v2863
      %3160 = vst [vmem:[#allocation2 + $0x168] sm:$0xff] %v2864
      %3161 = vst [vmem:[#allocation2 + $0x170] sm:$0xf] %v2865
      %3162 = vst [vmem:[#allocation2 + $0x174] sm:$0xff] %v2866
      %3163 = vst [vmem:[#allocation2 + $0x17c] sm:$0xf] %v2867
      %3164 = vrot.lane.b32.xlu0 %v2852, 126
      %v3165 = vpop.permute.xlu0 %3164
      %3166 = vrot.lane.b32.xlu0 %v2853, 126
      %v3167 = vpop.permute.xlu0 %3166
      %3168 = vrot.lane.b32.xlu0 %v2854, 126
      %v3169 = vpop.permute.xlu0 %3168
      %3170 = vrot.lane.b32.xlu0 %v2855, 126
      %v3171 = vpop.permute.xlu0 %3170
      %3172 = vrot.lane.b32.xlu0 %v2856, 126
      %v3173 = vpop.permute.xlu0 %3172
      %3174 = vrot.lane.b32.xlu0 %v2857, 126
      %v3175 = vpop.permute.xlu0 %3174
      %3176 = vrot.lane.b32.xlu0 %v2858, 126
      %v3177 = vpop.permute.xlu0 %3176
      %3178 = vrot.lane.b32.xlu0 %v2859, 126
      %v3179 = vpop.permute.xlu0 %3178
      %3180 = vrot.lane.b32.xlu0 %v2860, 126
      %v3181 = vpop.permute.xlu0 %3180
      %3182 = vrot.lane.b32.xlu0 %v2861, 126
      %v3183 = vpop.permute.xlu0 %3182
      %3184 = vrot.lane.b32.xlu0 %v2862, 126
      %v3185 = vpop.permute.xlu0 %3184
      %3186 = vrot.lane.b32.xlu0 %v2863, 126
      %v3187 = vpop.permute.xlu0 %3186
      %3188 = vrot.lane.b32.xlu0 %v2864, 126
      %v3189 = vpop.permute.xlu0 %3188
      %3190 = vrot.lane.b32.xlu0 %v2865, 126
      %v3191 = vpop.permute.xlu0 %3190
      %3192 = vrot.lane.b32.xlu0 %v2866, 126
      %v3193 = vpop.permute.xlu0 %3192
      %3194 = vrot.lane.b32.xlu0 %v2867, 126
      %v3195 = vpop.permute.xlu0 %3194
      %v3196 = vrot.slane %v3165, 4
      %v3197 = vrot.slane %v3167, 4
      %v3198 = vrot.slane %v3169, 4
      %v3199 = vrot.slane %v3171, 4
      %v3200 = vrot.slane %v3173, 4
      %v3201 = vrot.slane %v3175, 4
      %v3202 = vrot.slane %v3177, 4
      %v3203 = vrot.slane %v3179, 4
      %v3204 = vrot.slane %v3181, 4
      %v3205 = vrot.slane %v3183, 4
      %v3206 = vrot.slane %v3185, 4
      %v3207 = vrot.slane %v3187, 4
      %v3208 = vrot.slane %v3189, 4
      %v3209 = vrot.slane %v3191, 4
      %v3210 = vrot.slane %v3193, 4
      %v3211 = vrot.slane %v3195, 4
      %v3212 = vsel %vm544, %v3196, %v3197
      %v3213 = vsel %vm596, %v3165, %v3212
      %v3214 = vsel %vm544, %v3198, %v3199
      %v3215 = vsel %vm596, %v3169, %v3214
      %v3216 = vsel %vm544, %v3200, %v3201
      %v3217 = vsel %vm596, %v3173, %v3216
      %v3218 = vsel %vm544, %v3202, %v3203
      %v3219 = vsel %vm596, %v3177, %v3218
      %v3220 = vsel %vm544, %v3204, %v3205
      %v3221 = vsel %vm596, %v3181, %v3220
      %v3222 = vsel %vm544, %v3206, %v3207
      %v3223 = vsel %vm596, %v3185, %v3222
      %v3224 = vsel %vm544, %v3208, %v3209
      %v3225 = vsel %vm596, %v3189, %v3224
      %v3226 = vsel %vm544, %v3210, %v3211
      %v3227 = vsel %vm596, %v3193, %v3226
      %3244 = vst [vmem:[#allocation2 + $0x180] sm:$0xff] %v3213
      %3245 = vst.msk [vmem:[#allocation2 + $0x188] sm:$0xf] %vm613, %v3167
      %3246 = vst [vmem:[#allocation2 + $0x18c] sm:$0xff] %v3215
      %3247 = vst.msk [vmem:[#allocation2 + $0x194] sm:$0xf] %vm613, %v3171
      %3248 = vst [vmem:[#allocation2 + $0x198] sm:$0xff] %v3217
      %3249 = vst.msk [vmem:[#allocation2 + $0x1a0] sm:$0xf] %vm613, %v3175
      %3250 = vst [vmem:[#allocation2 + $0x1a4] sm:$0xff] %v3219
      %3251 = vst.msk [vmem:[#allocation2 + $0x1ac] sm:$0xf] %vm613, %v3179
      %3252 = vst [vmem:[#allocation2 + $0x1b0] sm:$0xff] %v3221
      %3253 = vst.msk [vmem:[#allocation2 + $0x1b8] sm:$0xf] %vm613, %v3183
      %3254 = vst [vmem:[#allocation2 + $0x1bc] sm:$0xff] %v3223
      %3255 = vst.msk [vmem:[#allocation2 + $0x1c4] sm:$0xf] %vm613, %v3187
      %3256 = vst [vmem:[#allocation2 + $0x1c8] sm:$0xff] %v3225
      %3257 = vst.msk [vmem:[#allocation2 + $0x1d0] sm:$0xf] %vm613, %v3191
      %3258 = vst [vmem:[#allocation2 + $0x1d4] sm:$0xff] %v3227
      %3259 = vst.msk [vmem:[#allocation2 + $0x1dc] sm:$0xf] %vm613, %v3195
      %3260 = vrot.lane.b32.xlu0 %v2852, 124
      %v3261 = vpop.permute.xlu0 %3260
      %3262 = vrot.lane.b32.xlu0 %v2853, 124
      %v3263 = vpop.permute.xlu0 %3262
      %3264 = vrot.lane.b32.xlu0 %v2854, 124
      %v3265 = vpop.permute.xlu0 %3264
      %3266 = vrot.lane.b32.xlu0 %v2855, 124
      %v3267 = vpop.permute.xlu0 %3266
      %3268 = vrot.lane.b32.xlu0 %v2856, 124
      %v3269 = vpop.permute.xlu0 %3268
      %3270 = vrot.lane.b32.xlu0 %v2857, 124
      %v3271 = vpop.permute.xlu0 %3270
      %3272 = vrot.lane.b32.xlu0 %v2858, 124
      %v3273 = vpop.permute.xlu0 %3272
      %3274 = vrot.lane.b32.xlu0 %v2859, 124
      %v3275 = vpop.permute.xlu0 %3274
      %3276 = vrot.lane.b32.xlu0 %v2860, 124
      %v3277 = vpop.permute.xlu0 %3276
      %3278 = vrot.lane.b32.xlu0 %v2861, 124
      %v3279 = vpop.permute.xlu0 %3278
      %3280 = vrot.lane.b32.xlu0 %v2862, 124
      %v3281 = vpop.permute.xlu0 %3280
      %3282 = vrot.lane.b32.xlu0 %v2863, 124
      %v3283 = vpop.permute.xlu0 %3282
      %3284 = vrot.lane.b32.xlu0 %v2864, 124
      %v3285 = vpop.permute.xlu0 %3284
      %3286 = vrot.lane.b32.xlu0 %v2865, 124
      %v3287 = vpop.permute.xlu0 %3286
      %3288 = vrot.lane.b32.xlu0 %v2866, 124
      %v3289 = vpop.permute.xlu0 %3288
      %3290 = vrot.lane.b32.xlu0 %v2867, 124
      %v3291 = vpop.permute.xlu0 %3290
      %v3292 = vrot.slane %v3261, 4
      %v3293 = vrot.slane %v3263, 4
      %v3294 = vrot.slane %v3265, 4
      %v3295 = vrot.slane %v3267, 4
      %v3296 = vrot.slane %v3269, 4
      %v3297 = vrot.slane %v3271, 4
      %v3298 = vrot.slane %v3273, 4
      %v3299 = vrot.slane %v3275, 4
      %v3300 = vrot.slane %v3277, 4
      %v3301 = vrot.slane %v3279, 4
      %v3302 = vrot.slane %v3281, 4
      %v3303 = vrot.slane %v3283, 4
      %v3304 = vrot.slane %v3285, 4
      %v3305 = vrot.slane %v3287, 4
      %v3306 = vrot.slane %v3289, 4
      %v3307 = vrot.slane %v3291, 4
      %v3308 = vsel %vm544, %v3292, %v3293
      %v3309 = vsel %vm2171, %v3261, %v3308
      %v3310 = vsel %vm544, %v3294, %v3295
      %v3311 = vsel %vm2171, %v3265, %v3310
      %v3312 = vsel %vm544, %v3296, %v3297
      %v3313 = vsel %vm2171, %v3269, %v3312
      %v3314 = vsel %vm544, %v3298, %v3299
      %v3315 = vsel %vm2171, %v3273, %v3314
      %v3316 = vsel %vm544, %v3300, %v3301
      %v3317 = vsel %vm2171, %v3277, %v3316
      %v3318 = vsel %vm544, %v3302, %v3303
      %v3319 = vsel %vm2171, %v3281, %v3318
      %v3320 = vsel %vm544, %v3304, %v3305
      %v3321 = vsel %vm2171, %v3285, %v3320
      %v3322 = vsel %vm544, %v3306, %v3307
      %v3323 = vsel %vm2171, %v3289, %v3322
      %3340 = vst [vmem:[#allocation2 + $0x1e0] sm:$0xff] %v3309
      %3341 = vst.msk [vmem:[#allocation2 + $0x1e8] sm:$0xf] %vm2188, %v3263
      %3342 = vst [vmem:[#allocation2 + $0x1ec] sm:$0xff] %v3311
      %3343 = vst.msk [vmem:[#allocation2 + $0x1f4] sm:$0xf] %vm2188, %v3267
      %3344 = vst [vmem:[#allocation2 + $0x1f8] sm:$0xff] %v3313
      %3345 = vst.msk [vmem:[#allocation2 + $0x200] sm:$0xf] %vm2188, %v3271
      %3346 = vst [vmem:[#allocation2 + $0x204] sm:$0xff] %v3315
      %3347 = vst.msk [vmem:[#allocation2 + $0x20c] sm:$0xf] %vm2188, %v3275
      %3348 = vst [vmem:[#allocation2 + $0x210] sm:$0xff] %v3317
      %3349 = vst.msk [vmem:[#allocation2 + $0x218] sm:$0xf] %vm2188, %v3279
      %3350 = vst [vmem:[#allocation2 + $0x21c] sm:$0xff] %v3319
      %3351 = vst.msk [vmem:[#allocation2 + $0x224] sm:$0xf] %vm2188, %v3283
      %3352 = vst [vmem:[#allocation2 + $0x228] sm:$0xff] %v3321
      %3353 = vst.msk [vmem:[#allocation2 + $0x230] sm:$0xf] %vm2188, %v3287
      %3354 = vst [vmem:[#allocation2 + $0x234] sm:$0xff] %v3323
      %3355 = vst.msk [vmem:[#allocation2 + $0x23c] sm:$0xf] %vm2188, %v3291
      %3356 = vrot.lane.b32.xlu0 %v2852, 122
      %v3357 = vpop.permute.xlu0 %3356
      %3358 = vrot.lane.b32.xlu0 %v2853, 122
      %v3359 = vpop.permute.xlu0 %3358
      %3360 = vrot.lane.b32.xlu0 %v2854, 122
      %v3361 = vpop.permute.xlu0 %3360
      %3362 = vrot.lane.b32.xlu0 %v2855, 122
      %v3363 = vpop.permute.xlu0 %3362
      %3364 = vrot.lane.b32.xlu0 %v2856, 122
      %v3365 = vpop.permute.xlu0 %3364
      %3366 = vrot.lane.b32.xlu0 %v2857, 122
      %v3367 = vpop.permute.xlu0 %3366
      %3368 = vrot.lane.b32.xlu0 %v2858, 122
      %v3369 = vpop.permute.xlu0 %3368
      %3370 = vrot.lane.b32.xlu0 %v2859, 122
      %v3371 = vpop.permute.xlu0 %3370
      %3372 = vrot.lane.b32.xlu0 %v2860, 122
      %v3373 = vpop.permute.xlu0 %3372
      %3374 = vrot.lane.b32.xlu0 %v2861, 122
      %v3375 = vpop.permute.xlu0 %3374
      %3376 = vrot.lane.b32.xlu0 %v2862, 122
      %v3377 = vpop.permute.xlu0 %3376
      %3378 = vrot.lane.b32.xlu0 %v2863, 122
      %v3379 = vpop.permute.xlu0 %3378
      %3380 = vrot.lane.b32.xlu0 %v2864, 122
      %v3381 = vpop.permute.xlu0 %3380
      %3382 = vrot.lane.b32.xlu0 %v2865, 122
      %v3383 = vpop.permute.xlu0 %3382
      %3384 = vrot.lane.b32.xlu0 %v2866, 122
      %v3385 = vpop.permute.xlu0 %3384
      %3386 = vrot.lane.b32.xlu0 %v2867, 122
      %v3387 = vpop.permute.xlu0 %3386
      %v3388 = vrot.slane %v3357, 4
      %v3389 = vrot.slane %v3359, 4
      %v3390 = vrot.slane %v3361, 4
      %v3391 = vrot.slane %v3363, 4
      %v3392 = vrot.slane %v3365, 4
      %v3393 = vrot.slane %v3367, 4
      %v3394 = vrot.slane %v3369, 4
      %v3395 = vrot.slane %v3371, 4
      %v3396 = vrot.slane %v3373, 4
      %v3397 = vrot.slane %v3375, 4
      %v3398 = vrot.slane %v3377, 4
      %v3399 = vrot.slane %v3379, 4
      %v3400 = vrot.slane %v3381, 4
      %v3401 = vrot.slane %v3383, 4
      %v3402 = vrot.slane %v3385, 4
      %v3403 = vrot.slane %v3387, 4
      %v3404 = vsel %vm544, %v3388, %v3389
      %v3405 = vsel %vm2221, %v3357, %v3404
      %v3406 = vsel %vm544, %v3390, %v3391
      %v3407 = vsel %vm2221, %v3361, %v3406
      %v3408 = vsel %vm544, %v3392, %v3393
      %v3409 = vsel %vm2221, %v3365, %v3408
      %v3410 = vsel %vm544, %v3394, %v3395
      %v3411 = vsel %vm2221, %v3369, %v3410
      %v3412 = vsel %vm544, %v3396, %v3397
      %v3413 = vsel %vm2221, %v3373, %v3412
      %v3414 = vsel %vm544, %v3398, %v3399
      %v3415 = vsel %vm2221, %v3377, %v3414
      %v3416 = vsel %vm544, %v3400, %v3401
      %v3417 = vsel %vm2221, %v3381, %v3416
      %v3418 = vsel %vm544, %v3402, %v3403
      %v3419 = vsel %vm2221, %v3385, %v3418
      %3436 = vst [vmem:[#allocation2 + $0x240] sm:$0xff] %v3405
      %3437 = vst.msk [vmem:[#allocation2 + $0x248] sm:$0xf] %vm2238, %v3359
      %3438 = vst [vmem:[#allocation2 + $0x24c] sm:$0xff] %v3407
      %3439 = vst.msk [vmem:[#allocation2 + $0x254] sm:$0xf] %vm2238, %v3363
      %3440 = vst [vmem:[#allocation2 + $0x258] sm:$0xff] %v3409
      %3441 = vst.msk [vmem:[#allocation2 + $0x260] sm:$0xf] %vm2238, %v3367
      %3442 = vst [vmem:[#allocation2 + $0x264] sm:$0xff] %v3411
      %3443 = vst.msk [vmem:[#allocation2 + $0x26c] sm:$0xf] %vm2238, %v3371
      %3444 = vst [vmem:[#allocation2 + $0x270] sm:$0xff] %v3413
      %3445 = vst.msk [vmem:[#allocation2 + $0x278] sm:$0xf] %vm2238, %v3375
      %3446 = vst [vmem:[#allocation2 + $0x27c] sm:$0xff] %v3415
      %3447 = vst.msk [vmem:[#allocation2 + $0x284] sm:$0xf] %vm2238, %v3379
      %3448 = vst [vmem:[#allocation2 + $0x288] sm:$0xff] %v3417
      %3449 = vst.msk [vmem:[#allocation2 + $0x290] sm:$0xf] %vm2238, %v3383
      %3450 = vst [vmem:[#allocation2 + $0x294] sm:$0xff] %v3419
      %3451 = vst.msk [vmem:[#allocation2 + $0x29c] sm:$0xf] %vm2238, %v3387
      %v3452 = vld [vmem:[%s1 + $0x140] sm:$0xff]
      %v3453 = vld [vmem:[%s1 + $0x148] sm:$0xff]
      %v3454 = vld [vmem:[%s1 + $0x150] sm:$0xff]
      %v3455 = vld [vmem:[%s1 + $0x158] sm:$0xff]
      %v3456 = vld [vmem:[%s1 + $0x160] sm:$0xff]
      %v3457 = vld [vmem:[%s1 + $0x168] sm:$0xff]
      %v3458 = vld [vmem:[%s1 + $0x170] sm:$0xff]
      %v3459 = vld [vmem:[%s1 + $0x178] sm:$0xff]
      %v3460 = vld [vmem:[%s1 + $0x180] sm:$0xff]
      %v3461 = vld [vmem:[%s1 + $0x188] sm:$0xff]
      %v3462 = vld [vmem:[%s1 + $0x190] sm:$0xff]
      %v3463 = vld [vmem:[%s1 + $0x198] sm:$0xff]
      %v3464 = vld [vmem:[%s1 + $0x1a0] sm:$0xff]
      %v3465 = vld [vmem:[%s1 + $0x1a8] sm:$0xff]
      %v3466 = vld [vmem:[%s1 + $0x1b0] sm:$0xff]
      %v3467 = vld [vmem:[%s1 + $0x1b8] sm:$0xff]
      %v3468 = vld [vmem:[#allocation2] sm:$0xff]
      %v3469 = vld [vmem:[#allocation2 + $0x8] sm:$0xf]
      %v3470 = vld [vmem:[#allocation2 + $0xc] sm:$0xff]
      %v3471 = vld [vmem:[#allocation2 + $0x14] sm:$0xf]
      %v3472 = vld [vmem:[#allocation2 + $0x18] sm:$0xff]
      %v3473 = vld [vmem:[#allocation2 + $0x20] sm:$0xf]
      %v3474 = vld [vmem:[#allocation2 + $0x24] sm:$0xff]
      %v3475 = vld [vmem:[#allocation2 + $0x2c] sm:$0xf]
      %v3476 = vld [vmem:[#allocation2 + $0x30] sm:$0xff]
      %v3477 = vld [vmem:[#allocation2 + $0x38] sm:$0xf]
      %v3478 = vld [vmem:[#allocation2 + $0x3c] sm:$0xff]
      %v3479 = vld [vmem:[#allocation2 + $0x44] sm:$0xf]
      %v3480 = vld [vmem:[#allocation2 + $0x48] sm:$0xff]
      %v3481 = vld [vmem:[#allocation2 + $0x50] sm:$0xf]
      %v3482 = vld [vmem:[#allocation2 + $0x54] sm:$0xff]
      %v3483 = vld [vmem:[#allocation2 + $0x5c] sm:$0xf]
      %v3484 = vld [vmem:[#allocation2 + $0x60] sm:$0xff]
      %v3485 = vld [vmem:[#allocation2 + $0x68] sm:$0xf]
      %v3486 = vld [vmem:[#allocation2 + $0x6c] sm:$0xff]
      %v3487 = vld [vmem:[#allocation2 + $0x74] sm:$0xf]
      %v3488 = vld [vmem:[#allocation2 + $0x78] sm:$0xff]
      %v3489 = vld [vmem:[#allocation2 + $0x80] sm:$0xf]
      %v3490 = vld [vmem:[#allocation2 + $0x84] sm:$0xff]
      %v3491 = vld [vmem:[#allocation2 + $0x8c] sm:$0xf]
      %v3492 = vld [vmem:[#allocation2 + $0x90] sm:$0xff]
      %v3493 = vld [vmem:[#allocation2 + $0x98] sm:$0xf]
      %v3494 = vld [vmem:[#allocation2 + $0x9c] sm:$0xff]
      %v3495 = vld [vmem:[#allocation2 + $0xa4] sm:$0xf]
      %v3496 = vld [vmem:[#allocation2 + $0xa8] sm:$0xff]
      %v3497 = vld [vmem:[#allocation2 + $0xb0] sm:$0xf]
      %v3498 = vld [vmem:[#allocation2 + $0xb4] sm:$0xff]
      %v3499 = vld [vmem:[#allocation2 + $0xbc] sm:$0xf]
      %v3500 = vld [vmem:[#allocation2 + $0xc0] sm:$0xff]
      %v3501 = vld [vmem:[#allocation2 + $0xc8] sm:$0xf]
      %v3502 = vld [vmem:[#allocation2 + $0xcc] sm:$0xff]
      %v3503 = vld [vmem:[#allocation2 + $0xd4] sm:$0xf]
      %v3504 = vld [vmem:[#allocation2 + $0xd8] sm:$0xff]
      %v3505 = vld [vmem:[#allocation2 + $0xe0] sm:$0xf]
      %v3506 = vld [vmem:[#allocation2 + $0xe4] sm:$0xff]
      %v3507 = vld [vmem:[#allocation2 + $0xec] sm:$0xf]
      %v3508 = vld [vmem:[#allocation2 + $0xf0] sm:$0xff]
      %v3509 = vld [vmem:[#allocation2 + $0xf8] sm:$0xf]
      %v3510 = vld [vmem:[#allocation2 + $0xfc] sm:$0xff]
      %v3511 = vld [vmem:[#allocation2 + $0x104] sm:$0xf]
      %v3512 = vld [vmem:[#allocation2 + $0x108] sm:$0xff]
      %v3513 = vld [vmem:[#allocation2 + $0x110] sm:$0xf]
      %v3514 = vld [vmem:[#allocation2 + $0x114] sm:$0xff]
      %v3515 = vld [vmem:[#allocation2 + $0x11c] sm:$0xf]
      %v3516 = vld [vmem:[#allocation2 + $0x120] sm:$0xff]
      %v3517 = vld [vmem:[#allocation2 + $0x128] sm:$0xf]
      %v3518 = vld [vmem:[#allocation2 + $0x12c] sm:$0xff]
      %v3519 = vld [vmem:[#allocation2 + $0x134] sm:$0xf]
      %v3520 = vld [vmem:[#allocation2 + $0x138] sm:$0xff]
      %v3521 = vld [vmem:[#allocation2 + $0x140] sm:$0xf]
      %v3522 = vld [vmem:[#allocation2 + $0x144] sm:$0xff]
      %v3523 = vld [vmem:[#allocation2 + $0x14c] sm:$0xf]
      %v3524 = vld [vmem:[#allocation2 + $0x150] sm:$0xff]
      %v3525 = vld [vmem:[#allocation2 + $0x158] sm:$0xf]
      %v3526 = vld [vmem:[#allocation2 + $0x15c] sm:$0xff]
      %v3527 = vld [vmem:[#allocation2 + $0x164] sm:$0xf]
      %v3528 = vld [vmem:[#allocation2 + $0x168] sm:$0xff]
      %v3529 = vld [vmem:[#allocation2 + $0x170] sm:$0xf]
      %v3530 = vld [vmem:[#allocation2 + $0x174] sm:$0xff]
      %v3531 = vld [vmem:[#allocation2 + $0x17c] sm:$0xf]
      %v3532 = vld [vmem:[#allocation2 + $0x180] sm:$0xff]
      %v3533 = vld [vmem:[#allocation2 + $0x188] sm:$0xf]
      %v3534 = vld [vmem:[#allocation2 + $0x18c] sm:$0xff]
      %v3535 = vld [vmem:[#allocation2 + $0x194] sm:$0xf]
      %v3536 = vld [vmem:[#allocation2 + $0x198] sm:$0xff]
      %v3537 = vld [vmem:[#allocation2 + $0x1a0] sm:$0xf]
      %v3538 = vld [vmem:[#allocation2 + $0x1a4] sm:$0xff]
      %v3539 = vld [vmem:[#allocation2 + $0x1ac] sm:$0xf]
      %v3540 = vld [vmem:[#allocation2 + $0x1b0] sm:$0xff]
      %v3541 = vld [vmem:[#allocation2 + $0x1b8] sm:$0xf]
      %v3542 = vld [vmem:[#allocation2 + $0x1bc] sm:$0xff]
      %v3543 = vld [vmem:[#allocation2 + $0x1c4] sm:$0xf]
      %v3544 = vld [vmem:[#allocation2 + $0x1c8] sm:$0xff]
      %v3545 = vld [vmem:[#allocation2 + $0x1d0] sm:$0xf]
      %v3546 = vld [vmem:[#allocation2 + $0x1d4] sm:$0xff]
      %v3547 = vld [vmem:[#allocation2 + $0x1dc] sm:$0xf]
      %v3548 = vld [vmem:[#allocation2 + $0x1e0] sm:$0xff]
      %v3549 = vld [vmem:[#allocation2 + $0x1e8] sm:$0xf]
      %v3550 = vld [vmem:[#allocation2 + $0x1ec] sm:$0xff]
      %v3551 = vld [vmem:[#allocation2 + $0x1f4] sm:$0xf]
      %v3552 = vld [vmem:[#allocation2 + $0x1f8] sm:$0xff]
      %v3553 = vld [vmem:[#allocation2 + $0x200] sm:$0xf]
      %v3554 = vld [vmem:[#allocation2 + $0x204] sm:$0xff]
      %v3555 = vld [vmem:[#allocation2 + $0x20c] sm:$0xf]
      %v3556 = vld [vmem:[#allocation2 + $0x210] sm:$0xff]
      %v3557 = vld [vmem:[#allocation2 + $0x218] sm:$0xf]
      %v3558 = vld [vmem:[#allocation2 + $0x21c] sm:$0xff]
      %v3559 = vld [vmem:[#allocation2 + $0x224] sm:$0xf]
      %v3560 = vld [vmem:[#allocation2 + $0x228] sm:$0xff]
      %v3561 = vld [vmem:[#allocation2 + $0x230] sm:$0xf]
      %v3562 = vld [vmem:[#allocation2 + $0x234] sm:$0xff]
      %v3563 = vld [vmem:[#allocation2 + $0x23c] sm:$0xf]
      %v3564 = vld [vmem:[#allocation2 + $0x240] sm:$0xff]
      %v3565 = vld [vmem:[#allocation2 + $0x248] sm:$0xf]
      %v3566 = vld [vmem:[#allocation2 + $0x24c] sm:$0xff]
      %v3567 = vld [vmem:[#allocation2 + $0x254] sm:$0xf]
      %v3568 = vld [vmem:[#allocation2 + $0x258] sm:$0xff]
      %v3569 = vld [vmem:[#allocation2 + $0x260] sm:$0xf]
      %v3570 = vld [vmem:[#allocation2 + $0x264] sm:$0xff]
      %v3571 = vld [vmem:[#allocation2 + $0x26c] sm:$0xf]
      %v3572 = vld [vmem:[#allocation2 + $0x270] sm:$0xff]
      %v3573 = vld [vmem:[#allocation2 + $0x278] sm:$0xf]
      %v3574 = vld [vmem:[#allocation2 + $0x27c] sm:$0xff]
      %v3575 = vld [vmem:[#allocation2 + $0x284] sm:$0xf]
      %v3576 = vld [vmem:[#allocation2 + $0x288] sm:$0xff]
      %v3577 = vld [vmem:[#allocation2 + $0x290] sm:$0xf]
      %v3578 = vld [vmem:[#allocation2 + $0x294] sm:$0xff]
      %v3579 = vld [vmem:[#allocation2 + $0x29c] sm:$0xf]
      %v3580 = vld [vmem:[%s2 + $0xa0] sm:$0xff]
      %v3581 = vld [vmem:[%s2 + $0xa8] sm:$0xff]
      %v3582 = vld [vmem:[%s2 + $0xb0] sm:$0xff]
      %v3583 = vld [vmem:[%s2 + $0xb8] sm:$0xff]
      %v3584 = vld [vmem:[%s2 + $0xc0] sm:$0xff]
      %v3585 = vld [vmem:[%s2 + $0xc8] sm:$0xff]
      %v3586 = vld [vmem:[%s2 + $0xd0] sm:$0xff]
      %v3587 = vld [vmem:[%s2 + $0xd8] sm:$0xff]
      %3589 = vset.pattern.permute.xlu0 0
      %3590 = vperm.xlu0 %3589, %v3580
      %v3591 = vpop.permute.xlu0 %3590
      %3594 = vset.pattern.permute.xlu0 0
      %3595 = vperm.xlu0 %3594, %v3581
      %v3596 = vpop.permute.xlu0 %3595
      %3599 = vset.pattern.permute.xlu0 0
      %3600 = vperm.xlu0 %3599, %v3582
      %v3601 = vpop.permute.xlu0 %3600
      %3604 = vset.pattern.permute.xlu0 0
      %3605 = vperm.xlu0 %3604, %v3583
      %v3606 = vpop.permute.xlu0 %3605
      %3609 = vset.pattern.permute.xlu0 0
      %3610 = vperm.xlu0 %3609, %v3584
      %v3611 = vpop.permute.xlu0 %3610
      %3614 = vset.pattern.permute.xlu0 0
      %3615 = vperm.xlu0 %3614, %v3585
      %v3616 = vpop.permute.xlu0 %3615
      %3619 = vset.pattern.permute.xlu0 0
      %3620 = vperm.xlu0 %3619, %v3586
      %v3621 = vpop.permute.xlu0 %3620
      %3624 = vset.pattern.permute.xlu0 0
      %3625 = vperm.xlu0 %3624, %v3587
      %v3626 = vpop.permute.xlu0 %3625
      %v3644 = vunpack.c.l.b16 %v3452
      %v3645 = vunpack.c.h.b16 %v3452
      %v3646 = vunpack.c.l.b16 %v3453
      %v3647 = vunpack.c.h.b16 %v3453
      %v3648 = vunpack.c.l.b16 %v3454
      %v3649 = vunpack.c.h.b16 %v3454
      %v3650 = vunpack.c.l.b16 %v3455
      %v3651 = vunpack.c.h.b16 %v3455
      %v3652 = vunpack.c.l.b16 %v3456
      %v3653 = vunpack.c.h.b16 %v3456
      %v3654 = vunpack.c.l.b16 %v3457
      %v3655 = vunpack.c.h.b16 %v3457
      %v3656 = vunpack.c.l.b16 %v3458
      %v3657 = vunpack.c.h.b16 %v3458
      %v3658 = vunpack.c.l.b16 %v3459
      %v3659 = vunpack.c.h.b16 %v3459
      %v3660 = vunpack.c.l.b16 %v3460
      %v3661 = vunpack.c.h.b16 %v3460
      %v3662 = vunpack.c.l.b16 %v3461
      %v3663 = vunpack.c.h.b16 %v3461
      %v3664 = vunpack.c.l.b16 %v3462
      %v3665 = vunpack.c.h.b16 %v3462
      %v3666 = vunpack.c.l.b16 %v3463
      %v3667 = vunpack.c.h.b16 %v3463
      %v3668 = vunpack.c.l.b16 %v3464
      %v3669 = vunpack.c.h.b16 %v3464
      %v3670 = vunpack.c.l.b16 %v3465
      %v3671 = vunpack.c.h.b16 %v3465
      %v3672 = vunpack.c.l.b16 %v3466
      %v3673 = vunpack.c.h.b16 %v3466
      %v3674 = vunpack.c.l.b16 %v3467
      %v3675 = vunpack.c.h.b16 %v3467
      %v3676 = vpack.c.b16 %v3648, %v3644
      %v3677 = vpack.c.b16 %v3649, %v3645
      %v3678 = vpack.c.b16 %v3650, %v3646
      %v3679 = vpack.c.b16 %v3651, %v3647
      %v3680 = vpack.c.b16 %v3656, %v3652
      %v3681 = vpack.c.b16 %v3657, %v3653
      %v3682 = vpack.c.b16 %v3658, %v3654
      %v3683 = vpack.c.b16 %v3659, %v3655
      %v3684 = vpack.c.b16 %v3664, %v3660
      %v3685 = vpack.c.b16 %v3665, %v3661
      %v3686 = vpack.c.b16 %v3666, %v3662
      %v3687 = vpack.c.b16 %v3667, %v3663
      %v3688 = vpack.c.b16 %v3672, %v3668
      %v3689 = vpack.c.b16 %v3673, %v3669
      %v3690 = vpack.c.b16 %v3674, %v3670
      %v3691 = vpack.c.b16 %v3675, %v3671
      %v3816 = vunpack.c.l.b16 %v3468
      %v3817 = vunpack.c.h.b16 %v3468
      %v3818 = vunpack.c.l.b16 %v3469
      %v3819 = vunpack.c.l.b16 %v3470
      %v3820 = vunpack.c.h.b16 %v3470
      %v3821 = vunpack.c.l.b16 %v3471
      %v3822 = vunpack.c.l.b16 %v3472
      %v3823 = vunpack.c.h.b16 %v3472
      %v3824 = vunpack.c.l.b16 %v3473
      %v3825 = vunpack.c.l.b16 %v3474
      %v3826 = vunpack.c.h.b16 %v3474
      %v3827 = vunpack.c.l.b16 %v3475
      %v3828 = vunpack.c.l.b16 %v3476
      %v3829 = vunpack.c.h.b16 %v3476
      %v3830 = vunpack.c.l.b16 %v3477
      %v3831 = vunpack.c.l.b16 %v3478
      %v3832 = vunpack.c.h.b16 %v3478
      %v3833 = vunpack.c.l.b16 %v3479
      %v3834 = vunpack.c.l.b16 %v3480
      %v3835 = vunpack.c.h.b16 %v3480
      %v3836 = vunpack.c.l.b16 %v3481
      %v3837 = vunpack.c.l.b16 %v3482
      %v3838 = vunpack.c.h.b16 %v3482
      %v3839 = vunpack.c.l.b16 %v3483
      %v3840 = vunpack.c.l.b16 %v3484
      %v3841 = vunpack.c.h.b16 %v3484
      %v3842 = vunpack.c.l.b16 %v3485
      %v3843 = vunpack.c.l.b16 %v3486
      %v3844 = vunpack.c.h.b16 %v3486
      %v3845 = vunpack.c.l.b16 %v3487
      %v3846 = vunpack.c.l.b16 %v3488
      %v3847 = vunpack.c.h.b16 %v3488
      %v3848 = vunpack.c.l.b16 %v3489
      %v3849 = vunpack.c.l.b16 %v3490
      %v3850 = vunpack.c.h.b16 %v3490
      %v3851 = vunpack.c.l.b16 %v3491
      %v3852 = vunpack.c.l.b16 %v3492
      %v3853 = vunpack.c.h.b16 %v3492
      %v3854 = vunpack.c.l.b16 %v3493
      %v3855 = vunpack.c.l.b16 %v3494
      %v3856 = vunpack.c.h.b16 %v3494
      %v3857 = vunpack.c.l.b16 %v3495
      %v3858 = vunpack.c.l.b16 %v3496
      %v3859 = vunpack.c.h.b16 %v3496
      %v3860 = vunpack.c.l.b16 %v3497
      %v3861 = vunpack.c.l.b16 %v3498
      %v3862 = vunpack.c.h.b16 %v3498
      %v3863 = vunpack.c.l.b16 %v3499
      %v3864 = vunpack.c.l.b16 %v3500
      %v3865 = vunpack.c.h.b16 %v3500
      %v3866 = vunpack.c.l.b16 %v3501
      %v3867 = vunpack.c.l.b16 %v3502
      %v3868 = vunpack.c.h.b16 %v3502
      %v3869 = vunpack.c.l.b16 %v3503
      %v3870 = vunpack.c.l.b16 %v3504
      %v3871 = vunpack.c.h.b16 %v3504
      %v3872 = vunpack.c.l.b16 %v3505
      %v3873 = vunpack.c.l.b16 %v3506
      %v3874 = vunpack.c.h.b16 %v3506
      %v3875 = vunpack.c.l.b16 %v3507
      %v3876 = vunpack.c.l.b16 %v3508
      %v3877 = vunpack.c.h.b16 %v3508
      %v3878 = vunpack.c.l.b16 %v3509
      %v3879 = vunpack.c.l.b16 %v3510
      %v3880 = vunpack.c.h.b16 %v3510
      %v3881 = vunpack.c.l.b16 %v3511
      %v3882 = vunpack.c.l.b16 %v3512
      %v3883 = vunpack.c.h.b16 %v3512
      %v3884 = vunpack.c.l.b16 %v3513
      %v3885 = vunpack.c.l.b16 %v3514
      %v3886 = vunpack.c.h.b16 %v3514
      %v3887 = vunpack.c.l.b16 %v3515
      %v3888 = vunpack.c.l.b16 %v3516
      %v3889 = vunpack.c.h.b16 %v3516
      %v3890 = vunpack.c.l.b16 %v3517
      %v3891 = vunpack.c.l.b16 %v3518
      %v3892 = vunpack.c.h.b16 %v3518
      %v3893 = vunpack.c.l.b16 %v3519
      %v3894 = vunpack.c.l.b16 %v3520
      %v3895 = vunpack.c.h.b16 %v3520
      %v3896 = vunpack.c.l.b16 %v3521
      %v3897 = vunpack.c.l.b16 %v3522
      %v3898 = vunpack.c.h.b16 %v3522
      %v3899 = vunpack.c.l.b16 %v3523
      %v3900 = vunpack.c.l.b16 %v3524
      %v3901 = vunpack.c.h.b16 %v3524
      %v3902 = vunpack.c.l.b16 %v3525
      %v3903 = vunpack.c.l.b16 %v3526
      %v3904 = vunpack.c.h.b16 %v3526
      %v3905 = vunpack.c.l.b16 %v3527
      %v3906 = vunpack.c.l.b16 %v3528
      %v3907 = vunpack.c.h.b16 %v3528
      %v3908 = vunpack.c.l.b16 %v3529
      %v3909 = vunpack.c.l.b16 %v3530
      %v3910 = vunpack.c.h.b16 %v3530
      %v3911 = vunpack.c.l.b16 %v3531
      %v3912 = vunpack.c.l.b16 %v3532
      %v3913 = vunpack.c.h.b16 %v3532
      %v3914 = vunpack.c.l.b16 %v3533
      %v3915 = vunpack.c.l.b16 %v3534
      %v3916 = vunpack.c.h.b16 %v3534
      %v3917 = vunpack.c.l.b16 %v3535
      %v3918 = vunpack.c.l.b16 %v3536
      %v3919 = vunpack.c.h.b16 %v3536
      %v3920 = vunpack.c.l.b16 %v3537
      %v3921 = vunpack.c.l.b16 %v3538
      %v3922 = vunpack.c.h.b16 %v3538
      %v3923 = vunpack.c.l.b16 %v3539
      %v3924 = vunpack.c.l.b16 %v3540
      %v3925 = vunpack.c.h.b16 %v3540
      %v3926 = vunpack.c.l.b16 %v3541
      %v3927 = vunpack.c.l.b16 %v3542
      %v3928 = vunpack.c.h.b16 %v3542
      %v3929 = vunpack.c.l.b16 %v3543
      %v3930 = vunpack.c.l.b16 %v3544
      %v3931 = vunpack.c.h.b16 %v3544
      %v3932 = vunpack.c.l.b16 %v3545
      %v3933 = vunpack.c.l.b16 %v3546
      %v3934 = vunpack.c.h.b16 %v3546
      %v3935 = vunpack.c.l.b16 %v3547
      %v3936 = vunpack.c.l.b16 %v3548
      %v3937 = vunpack.c.h.b16 %v3548
      %v3938 = vunpack.c.l.b16 %v3549
      %v3939 = vunpack.c.l.b16 %v3550
      %v3940 = vunpack.c.h.b16 %v3550
      %v3941 = vunpack.c.l.b16 %v3551
      %v3942 = vunpack.c.l.b16 %v3552
      %v3943 = vunpack.c.h.b16 %v3552
      %v3944 = vunpack.c.l.b16 %v3553
      %v3945 = vunpack.c.l.b16 %v3554
      %v3946 = vunpack.c.h.b16 %v3554
      %v3947 = vunpack.c.l.b16 %v3555
      %v3948 = vunpack.c.l.b16 %v3556
      %v3949 = vunpack.c.h.b16 %v3556
      %v3950 = vunpack.c.l.b16 %v3557
      %v3951 = vunpack.c.l.b16 %v3558
      %v3952 = vunpack.c.h.b16 %v3558
      %v3953 = vunpack.c.l.b16 %v3559
      %v3954 = vunpack.c.l.b16 %v3560
      %v3955 = vunpack.c.h.b16 %v3560
      %v3956 = vunpack.c.l.b16 %v3561
      %v3957 = vunpack.c.l.b16 %v3562
      %v3958 = vunpack.c.h.b16 %v3562
      %v3959 = vunpack.c.l.b16 %v3563
      %v3960 = vunpack.c.l.b16 %v3564
      %v3961 = vunpack.c.h.b16 %v3564
      %v3962 = vunpack.c.l.b16 %v3565
      %v3963 = vunpack.c.l.b16 %v3566
      %v3964 = vunpack.c.h.b16 %v3566
      %v3965 = vunpack.c.l.b16 %v3567
      %v3966 = vunpack.c.l.b16 %v3568
      %v3967 = vunpack.c.h.b16 %v3568
      %v3968 = vunpack.c.l.b16 %v3569
      %v3969 = vunpack.c.l.b16 %v3570
      %v3970 = vunpack.c.h.b16 %v3570
      %v3971 = vunpack.c.l.b16 %v3571
      %v3972 = vunpack.c.l.b16 %v3572
      %v3973 = vunpack.c.h.b16 %v3572
      %v3974 = vunpack.c.l.b16 %v3573
      %v3975 = vunpack.c.l.b16 %v3574
      %v3976 = vunpack.c.h.b16 %v3574
      %v3977 = vunpack.c.l.b16 %v3575
      %v3978 = vunpack.c.l.b16 %v3576
      %v3979 = vunpack.c.h.b16 %v3576
      %v3980 = vunpack.c.l.b16 %v3577
      %v3981 = vunpack.c.l.b16 %v3578
      %v3982 = vunpack.c.h.b16 %v3578
      %v3983 = vunpack.c.l.b16 %v3579
      %v3984 = vpack.c.b16 %v3819, %v3816
      %v3985 = vpack.c.b16 %v3820, %v3817
      %v3986 = vpack.c.b16 %v3821, %v3818
      %v3987 = vpack.c.b16 %v3825, %v3822
      %v3988 = vpack.c.b16 %v3826, %v3823
      %v3989 = vpack.c.b16 %v3827, %v3824
      %v3990 = vpack.c.b16 %v3831, %v3828
      %v3991 = vpack.c.b16 %v3832, %v3829
      %v3992 = vpack.c.b16 %v3833, %v3830
      %v3993 = vpack.c.b16 %v3837, %v3834
      %v3994 = vpack.c.b16 %v3838, %v3835
      %v3995 = vpack.c.b16 %v3839, %v3836
      %v3996 = vpack.c.b16 %v3843, %v3840
      %v3997 = vpack.c.b16 %v3844, %v3841
      %v3998 = vpack.c.b16 %v3845, %v3842
      %v3999 = vpack.c.b16 %v3849, %v3846
      %v4000 = vpack.c.b16 %v3850, %v3847
      %v4001 = vpack.c.b16 %v3851, %v3848
      %v4002 = vpack.c.b16 %v3855, %v3852
      %v4003 = vpack.c.b16 %v3856, %v3853
      %v4004 = vpack.c.b16 %v3857, %v3854
      %v4005 = vpack.c.b16 %v3861, %v3858
      %v4006 = vpack.c.b16 %v3862, %v3859
      %v4007 = vpack.c.b16 %v3863, %v3860
      %v4008 = vpack.c.b16 %v3867, %v3864
      %v4009 = vpack.c.b16 %v3868, %v3865
      %v4010 = vpack.c.b16 %v3869, %v3866
      %v4011 = vpack.c.b16 %v3873, %v3870
      %v4012 = vpack.c.b16 %v3874, %v3871
      %v4013 = vpack.c.b16 %v3875, %v3872
      %v4014 = vpack.c.b16 %v3879, %v3876
      %v4015 = vpack.c.b16 %v3880, %v3877
      %v4016 = vpack.c.b16 %v3881, %v3878
      %v4017 = vpack.c.b16 %v3885, %v3882
      %v4018 = vpack.c.b16 %v3886, %v3883
      %v4019 = vpack.c.b16 %v3887, %v3884
      %v4020 = vpack.c.b16 %v3891, %v3888
      %v4021 = vpack.c.b16 %v3892, %v3889
      %v4022 = vpack.c.b16 %v3893, %v3890
      %v4023 = vpack.c.b16 %v3897, %v3894
      %v4024 = vpack.c.b16 %v3898, %v3895
      %v4025 = vpack.c.b16 %v3899, %v3896
      %v4026 = vpack.c.b16 %v3903, %v3900
      %v4027 = vpack.c.b16 %v3904, %v3901
      %v4028 = vpack.c.b16 %v3905, %v3902
      %v4029 = vpack.c.b16 %v3909, %v3906
      %v4030 = vpack.c.b16 %v3910, %v3907
      %v4031 = vpack.c.b16 %v3911, %v3908
      %v4032 = vpack.c.b16 %v3915, %v3912
      %v4033 = vpack.c.b16 %v3916, %v3913
      %v4034 = vpack.c.b16 %v3917, %v3914
      %v4035 = vpack.c.b16 %v3921, %v3918
      %v4036 = vpack.c.b16 %v3922, %v3919
      %v4037 = vpack.c.b16 %v3923, %v3920
      %v4038 = vpack.c.b16 %v3927, %v3924
      %v4039 = vpack.c.b16 %v3928, %v3925
      %v4040 = vpack.c.b16 %v3929, %v3926
      %v4041 = vpack.c.b16 %v3933, %v3930
      %v4042 = vpack.c.b16 %v3934, %v3931
      %v4043 = vpack.c.b16 %v3935, %v3932
      %v4044 = vpack.c.b16 %v3939, %v3936
      %v4045 = vpack.c.b16 %v3940, %v3937
      %v4046 = vpack.c.b16 %v3941, %v3938
      %v4047 = vpack.c.b16 %v3945, %v3942
      %v4048 = vpack.c.b16 %v3946, %v3943
      %v4049 = vpack.c.b16 %v3947, %v3944
      %v4050 = vpack.c.b16 %v3951, %v3948
      %v4051 = vpack.c.b16 %v3952, %v3949
      %v4052 = vpack.c.b16 %v3953, %v3950
      %v4053 = vpack.c.b16 %v3957, %v3954
      %v4054 = vpack.c.b16 %v3958, %v3955
      %v4055 = vpack.c.b16 %v3959, %v3956
      %v4056 = vpack.c.b16 %v3963, %v3960
      %v4057 = vpack.c.b16 %v3964, %v3961
      %v4058 = vpack.c.b16 %v3965, %v3962
      %v4059 = vpack.c.b16 %v3969, %v3966
      %v4060 = vpack.c.b16 %v3970, %v3967
      %v4061 = vpack.c.b16 %v3971, %v3968
      %v4062 = vpack.c.b16 %v3975, %v3972
      %v4063 = vpack.c.b16 %v3976, %v3973
      %v4064 = vpack.c.b16 %v3977, %v3974
      %v4065 = vpack.c.b16 %v3981, %v3978
      %v4066 = vpack.c.b16 %v3982, %v3979
      %v4067 = vpack.c.b16 %v3983, %v3980
      %vm4152 = vcmask 523264
      %v4154 = vsel %vm4152, %v3679, 0
      %v4157 = vsel %vm4152, %v3683, 0
      %v4160 = vsel %vm4152, %v3687, 0
      %v4163 = vsel %vm4152, %v3691, 0
      %4165 = vmatpush.bf16.msra.mxu0 %v4005
      %4166 = vmatpush.bf16.msra.mxu0 %v4002
      %4167 = vmatpush.bf16.msra.mxu0 %v3999
      %4168 = vmatpush.bf16.msra.mxu0 %v3996
      %4169 = vmatpush.bf16.msra.mxu0 %v3993
      %4170 = vmatpush.bf16.msra.mxu0 %v3990
      %4171 = vmatpush.bf16.msra.mxu0 %v3987
      %4172 = vmatpush.bf16.msra.mxu0 %v3984
      %4173 = vmatmul.bf16.gmra.mxu0 %v3676
      %v4174 = vpop.f32.mrf.mxu0
      %v4175 = vadd.f32 %v3591, %v4174
      %v4176 = vpop.f32.mrf.mxu0
      %v4177 = vadd.f32 %v3596, %v4176
      %4178 = vmatmul.bf16.gmra.mxu0 %v3680
      %v4179 = vpop.f32.mrf.mxu0
      %v4180 = vadd.f32 %v3601, %v4179
      %v4181 = vpop.f32.mrf.mxu0
      %v4182 = vadd.f32 %v3606, %v4181
      %4183 = vmatmul.bf16.gmra.mxu0 %v3684
      %v4184 = vpop.f32.mrf.mxu0
      %v4185 = vadd.f32 %v3611, %v4184
      %v4186 = vpop.f32.mrf.mxu0
      %v4187 = vadd.f32 %v3616, %v4186
      %4188 = vmatmul.bf16.gmra.mxu0 %v3688
      %v4189 = vpop.f32.mrf.mxu0
      %v4190 = vadd.f32 %v3621, %v4189
      %v4191 = vpop.f32.mrf.mxu0
      %v4192 = vadd.f32 %v3626, %v4191
      %4193 = vdwg.mxu0
      %4194 = vmatpush.bf16.msra.mxu0 %v4029
      %4195 = vmatpush.bf16.msra.mxu0 %v4026
      %4196 = vmatpush.bf16.msra.mxu0 %v4023
      %4197 = vmatpush.bf16.msra.mxu0 %v4020
      %4198 = vmatpush.bf16.msra.mxu0 %v4017
      %4199 = vmatpush.bf16.msra.mxu0 %v4014
      %4200 = vmatpush.bf16.msra.mxu0 %v4011
      %4201 = vmatpush.bf16.msra.mxu0 %v4008
      %4202 = vmatmul.bf16.gmra.mxu0 %v3677
      %v4203 = vpop.f32.mrf.mxu0
      %v4204 = vadd.f32 %v4175, %v4203
      %v4205 = vpop.f32.mrf.mxu0
      %v4206 = vadd.f32 %v4177, %v4205
      %4207 = vmatmul.bf16.gmra.mxu0 %v3681
      %v4208 = vpop.f32.mrf.mxu0
      %v4209 = vadd.f32 %v4180, %v4208
      %v4210 = vpop.f32.mrf.mxu0
      %v4211 = vadd.f32 %v4182, %v4210
      %4212 = vmatmul.bf16.gmra.mxu0 %v3685
      %v4213 = vpop.f32.mrf.mxu0
      %v4214 = vadd.f32 %v4185, %v4213
      %v4215 = vpop.f32.mrf.mxu0
      %v4216 = vadd.f32 %v4187, %v4215
      %4217 = vmatmul.bf16.gmra.mxu0 %v3689
      %v4218 = vpop.f32.mrf.mxu0
      %v4219 = vadd.f32 %v4190, %v4218
      %v4220 = vpop.f32.mrf.mxu0
      %v4221 = vadd.f32 %v4192, %v4220
      %4222 = vdwg.mxu0
      %4223 = vmatpush.bf16.msra.mxu0 %v4053
      %4224 = vmatpush.bf16.msra.mxu0 %v4050
      %4225 = vmatpush.bf16.msra.mxu0 %v4047
      %4226 = vmatpush.bf16.msra.mxu0 %v4044
      %4227 = vmatpush.bf16.msra.mxu0 %v4041
      %4228 = vmatpush.bf16.msra.mxu0 %v4038
      %4229 = vmatpush.bf16.msra.mxu0 %v4035
      %4230 = vmatpush.bf16.msra.mxu0 %v4032
      %4231 = vmatmul.bf16.gmra.mxu0 %v3678
      %v4232 = vpop.f32.mrf.mxu0
      %v4233 = vadd.f32 %v4204, %v4232
      %v4234 = vpop.f32.mrf.mxu0
      %v4235 = vadd.f32 %v4206, %v4234
      %4236 = vmatmul.bf16.gmra.mxu0 %v3682
      %v4237 = vpop.f32.mrf.mxu0
      %v4238 = vadd.f32 %v4209, %v4237
      %v4239 = vpop.f32.mrf.mxu0
      %v4240 = vadd.f32 %v4211, %v4239
      %4241 = vmatmul.bf16.gmra.mxu0 %v3686
      %v4242 = vpop.f32.mrf.mxu0
      %v4243 = vadd.f32 %v4214, %v4242
      %v4244 = vpop.f32.mrf.mxu0
      %v4245 = vadd.f32 %v4216, %v4244
      %4246 = vmatmul.bf16.gmra.mxu0 %v3690
      %v4247 = vpop.f32.mrf.mxu0
      %v4248 = vadd.f32 %v4219, %v4247
      %v4249 = vpop.f32.mrf.mxu0
      %v4250 = vadd.f32 %v4221, %v4249
      %4251 = vdwg.mxu0
      %4252 = vmatpush.bf16.msra.mxu0 0
      %4253 = vmatpush.bf16.msra.mxu0 0
      %4254 = vmatpush.bf16.msra.mxu0 0
      %4255 = vmatpush.bf16.msra.mxu0 0
      %4256 = vmatpush.bf16.msra.mxu0 %v4065
      %4257 = vmatpush.bf16.msra.mxu0 %v4062
      %4258 = vmatpush.bf16.msra.mxu0 %v4059
      %4259 = vmatpush.bf16.msra.mxu0 %v4056
      %4260 = vmatmul.bf16.gmra.mxu0 %v4154
      %v4261 = vpop.f32.mrf.mxu0
      %v4262 = vadd.f32 %v4233, %v4261
      %v4263 = vpop.f32.mrf.mxu0
      %v4264 = vadd.f32 %v4235, %v4263
      %4265 = vmatmul.bf16.gmra.mxu0 %v4157
      %v4266 = vpop.f32.mrf.mxu0
      %v4267 = vadd.f32 %v4238, %v4266
      %v4268 = vpop.f32.mrf.mxu0
      %v4269 = vadd.f32 %v4240, %v4268
      %4270 = vmatmul.bf16.gmra.mxu0 %v4160
      %v4271 = vpop.f32.mrf.mxu0
      %v4272 = vadd.f32 %v4243, %v4271
      %v4273 = vpop.f32.mrf.mxu0
      %v4274 = vadd.f32 %v4245, %v4273
      %4275 = vmatmul.bf16.gmra.mxu0 %v4163
      %v4276 = vpop.f32.mrf.mxu0
      %v4277 = vadd.f32 %v4248, %v4276
      %v4278 = vpop.f32.mrf.mxu0
      %v4279 = vadd.f32 %v4250, %v4278
      %4280 = vdwg.mxu0
      %4281 = vmatpush.bf16.msra.mxu0 %v4006
      %4282 = vmatpush.bf16.msra.mxu0 %v4003
      %4283 = vmatpush.bf16.msra.mxu0 %v4000
      %4284 = vmatpush.bf16.msra.mxu0 %v3997
      %4285 = vmatpush.bf16.msra.mxu0 %v3994
      %4286 = vmatpush.bf16.msra.mxu0 %v3991
      %4287 = vmatpush.bf16.msra.mxu0 %v3988
      %4288 = vmatpush.bf16.msra.mxu0 %v3985
      %4289 = vmatmul.bf16.gmra.mxu0 %v3676
      %v4290 = vpop.f32.mrf.mxu0
      %v4291 = vadd.f32 %v3591, %v4290
      %v4292 = vpop.f32.mrf.mxu0
      %v4293 = vadd.f32 %v3596, %v4292
      %4294 = vmatmul.bf16.gmra.mxu0 %v3680
      %v4295 = vpop.f32.mrf.mxu0
      %v4296 = vadd.f32 %v3601, %v4295
      %v4297 = vpop.f32.mrf.mxu0
      %v4298 = vadd.f32 %v3606, %v4297
      %4299 = vmatmul.bf16.gmra.mxu0 %v3684
      %v4300 = vpop.f32.mrf.mxu0
      %v4301 = vadd.f32 %v3611, %v4300
      %v4302 = vpop.f32.mrf.mxu0
      %v4303 = vadd.f32 %v3616, %v4302
      %4304 = vmatmul.bf16.gmra.mxu0 %v3688
      %v4305 = vpop.f32.mrf.mxu0
      %v4306 = vadd.f32 %v3621, %v4305
      %v4307 = vpop.f32.mrf.mxu0
      %v4308 = vadd.f32 %v3626, %v4307
      %4309 = vdwg.mxu0
      %4310 = vmatpush.bf16.msra.mxu0 %v4030
      %4311 = vmatpush.bf16.msra.mxu0 %v4027
      %4312 = vmatpush.bf16.msra.mxu0 %v4024
      %4313 = vmatpush.bf16.msra.mxu0 %v4021
      %4314 = vmatpush.bf16.msra.mxu0 %v4018
      %4315 = vmatpush.bf16.msra.mxu0 %v4015
      %4316 = vmatpush.bf16.msra.mxu0 %v4012
      %4317 = vmatpush.bf16.msra.mxu0 %v4009
      %4318 = vmatmul.bf16.gmra.mxu0 %v3677
      %v4319 = vpop.f32.mrf.mxu0
      %v4320 = vadd.f32 %v4291, %v4319
      %v4321 = vpop.f32.mrf.mxu0
      %v4322 = vadd.f32 %v4293, %v4321
      %4323 = vmatmul.bf16.gmra.mxu0 %v3681
      %v4324 = vpop.f32.mrf.mxu0
      %v4325 = vadd.f32 %v4296, %v4324
      %v4326 = vpop.f32.mrf.mxu0
      %v4327 = vadd.f32 %v4298, %v4326
      %4328 = vmatmul.bf16.gmra.mxu0 %v3685
      %v4329 = vpop.f32.mrf.mxu0
      %v4330 = vadd.f32 %v4301, %v4329
      %v4331 = vpop.f32.mrf.mxu0
      %v4332 = vadd.f32 %v4303, %v4331
      %4333 = vmatmul.bf16.gmra.mxu0 %v3689
      %v4334 = vpop.f32.mrf.mxu0
      %v4335 = vadd.f32 %v4306, %v4334
      %v4336 = vpop.f32.mrf.mxu0
      %v4337 = vadd.f32 %v4308, %v4336
      %4338 = vdwg.mxu0
      %4339 = vmatpush.bf16.msra.mxu0 %v4054
      %4340 = vmatpush.bf16.msra.mxu0 %v4051
      %4341 = vmatpush.bf16.msra.mxu0 %v4048
      %4342 = vmatpush.bf16.msra.mxu0 %v4045
      %4343 = vmatpush.bf16.msra.mxu0 %v4042
      %4344 = vmatpush.bf16.msra.mxu0 %v4039
      %4345 = vmatpush.bf16.msra.mxu0 %v4036
      %4346 = vmatpush.bf16.msra.mxu0 %v4033
      %4347 = vmatmul.bf16.gmra.mxu0 %v3678
      %v4348 = vpop.f32.mrf.mxu0
      %v4349 = vadd.f32 %v4320, %v4348
      %v4350 = vpop.f32.mrf.mxu0
      %v4351 = vadd.f32 %v4322, %v4350
      %4352 = vmatmul.bf16.gmra.mxu0 %v3682
      %v4353 = vpop.f32.mrf.mxu0
      %v4354 = vadd.f32 %v4325, %v4353
      %v4355 = vpop.f32.mrf.mxu0
      %v4356 = vadd.f32 %v4327, %v4355
      %4357 = vmatmul.bf16.gmra.mxu0 %v3686
      %v4358 = vpop.f32.mrf.mxu0
      %v4359 = vadd.f32 %v4330, %v4358
      %v4360 = vpop.f32.mrf.mxu0
      %v4361 = vadd.f32 %v4332, %v4360
      %4362 = vmatmul.bf16.gmra.mxu0 %v3690
      %v4363 = vpop.f32.mrf.mxu0
      %v4364 = vadd.f32 %v4335, %v4363
      %v4365 = vpop.f32.mrf.mxu0
      %v4366 = vadd.f32 %v4337, %v4365
      %4367 = vdwg.mxu0
      %4368 = vmatpush.bf16.msra.mxu0 0
      %4369 = vmatpush.bf16.msra.mxu0 0
      %4370 = vmatpush.bf16.msra.mxu0 0
      %4371 = vmatpush.bf16.msra.mxu0 0
      %4372 = vmatpush.bf16.msra.mxu0 %v4066
      %4373 = vmatpush.bf16.msra.mxu0 %v4063
      %4374 = vmatpush.bf16.msra.mxu0 %v4060
      %4375 = vmatpush.bf16.msra.mxu0 %v4057
      %4376 = vmatmul.bf16.gmra.mxu0 %v4154
      %v4377 = vpop.f32.mrf.mxu0
      %v4378 = vadd.f32 %v4349, %v4377
      %v4379 = vpop.f32.mrf.mxu0
      %v4380 = vadd.f32 %v4351, %v4379
      %4381 = vmatmul.bf16.gmra.mxu0 %v4157
      %v4382 = vpop.f32.mrf.mxu0
      %v4383 = vadd.f32 %v4354, %v4382
      %v4384 = vpop.f32.mrf.mxu0
      %v4385 = vadd.f32 %v4356, %v4384
      %4386 = vmatmul.bf16.gmra.mxu0 %v4160
      %v4387 = vpop.f32.mrf.mxu0
      %v4388 = vadd.f32 %v4359, %v4387
      %v4389 = vpop.f32.mrf.mxu0
      %v4390 = vadd.f32 %v4361, %v4389
      %4391 = vmatmul.bf16.gmra.mxu0 %v4163
      %v4392 = vpop.f32.mrf.mxu0
      %v4393 = vadd.f32 %v4364, %v4392
      %v4394 = vpop.f32.mrf.mxu0
      %v4395 = vadd.f32 %v4366, %v4394
      %4396 = vdwg.mxu0
      %4397 = vmatpush.bf16.msra.mxu0 %v4007
      %4398 = vmatpush.bf16.msra.mxu0 %v4004
      %4399 = vmatpush.bf16.msra.mxu0 %v4001
      %4400 = vmatpush.bf16.msra.mxu0 %v3998
      %4401 = vmatpush.bf16.msra.mxu0 %v3995
      %4402 = vmatpush.bf16.msra.mxu0 %v3992
      %4403 = vmatpush.bf16.msra.mxu0 %v3989
      %4404 = vmatpush.bf16.msra.mxu0 %v3986
      %4405 = vmatmul.bf16.gmra.mxu0 %v3676
      %v4406 = vpop.f32.mrf.mxu0
      %v4407 = vadd.f32 %v3591, %v4406
      %v4408 = vpop.f32.mrf.mxu0
      %v4409 = vadd.f32 %v3596, %v4408
      %4410 = vmatmul.bf16.gmra.mxu0 %v3680
      %v4411 = vpop.f32.mrf.mxu0
      %v4412 = vadd.f32 %v3601, %v4411
      %v4413 = vpop.f32.mrf.mxu0
      %v4414 = vadd.f32 %v3606, %v4413
      %4415 = vmatmul.bf16.gmra.mxu0 %v3684
      %v4416 = vpop.f32.mrf.mxu0
      %v4417 = vadd.f32 %v3611, %v4416
      %v4418 = vpop.f32.mrf.mxu0
      %v4419 = vadd.f32 %v3616, %v4418
      %4420 = vmatmul.bf16.gmra.mxu0 %v3688
      %v4421 = vpop.f32.mrf.mxu0
      %v4422 = vadd.f32 %v3621, %v4421
      %v4423 = vpop.f32.mrf.mxu0
      %v4424 = vadd.f32 %v3626, %v4423
      %4425 = vdwg.mxu0
      %4426 = vmatpush.bf16.msra.mxu0 %v4031
      %4427 = vmatpush.bf16.msra.mxu0 %v4028
      %4428 = vmatpush.bf16.msra.mxu0 %v4025
      %4429 = vmatpush.bf16.msra.mxu0 %v4022
      %4430 = vmatpush.bf16.msra.mxu0 %v4019
      %4431 = vmatpush.bf16.msra.mxu0 %v4016
      %4432 = vmatpush.bf16.msra.mxu0 %v4013
      %4433 = vmatpush.bf16.msra.mxu0 %v4010
      %4434 = vmatmul.bf16.gmra.mxu0 %v3677
      %v4435 = vpop.f32.mrf.mxu0
      %v4436 = vadd.f32 %v4407, %v4435
      %v4437 = vpop.f32.mrf.mxu0
      %v4438 = vadd.f32 %v4409, %v4437
      %4439 = vmatmul.bf16.gmra.mxu0 %v3681
      %v4440 = vpop.f32.mrf.mxu0
      %v4441 = vadd.f32 %v4412, %v4440
      %v4442 = vpop.f32.mrf.mxu0
      %v4443 = vadd.f32 %v4414, %v4442
      %4444 = vmatmul.bf16.gmra.mxu0 %v3685
      %v4445 = vpop.f32.mrf.mxu0
      %v4446 = vadd.f32 %v4417, %v4445
      %v4447 = vpop.f32.mrf.mxu0
      %v4448 = vadd.f32 %v4419, %v4447
      %4449 = vmatmul.bf16.gmra.mxu0 %v3689
      %v4450 = vpop.f32.mrf.mxu0
      %v4451 = vadd.f32 %v4422, %v4450
      %v4452 = vpop.f32.mrf.mxu0
      %v4453 = vadd.f32 %v4424, %v4452
      %4454 = vdwg.mxu0
      %4455 = vmatpush.bf16.msra.mxu0 %v4055
      %4456 = vmatpush.bf16.msra.mxu0 %v4052
      %4457 = vmatpush.bf16.msra.mxu0 %v4049
      %4458 = vmatpush.bf16.msra.mxu0 %v4046
      %4459 = vmatpush.bf16.msra.mxu0 %v4043
      %4460 = vmatpush.bf16.msra.mxu0 %v4040
      %4461 = vmatpush.bf16.msra.mxu0 %v4037
      %4462 = vmatpush.bf16.msra.mxu0 %v4034
      %4463 = vmatmul.bf16.gmra.mxu0 %v3678
      %v4464 = vpop.f32.mrf.mxu0
      %v4465 = vadd.f32 %v4436, %v4464
      %v4466 = vpop.f32.mrf.mxu0
      %v4467 = vadd.f32 %v4438, %v4466
      %4468 = vmatmul.bf16.gmra.mxu0 %v3682
      %v4469 = vpop.f32.mrf.mxu0
      %v4470 = vadd.f32 %v4441, %v4469
      %v4471 = vpop.f32.mrf.mxu0
      %v4472 = vadd.f32 %v4443, %v4471
      %4473 = vmatmul.bf16.gmra.mxu0 %v3686
      %v4474 = vpop.f32.mrf.mxu0
      %v4475 = vadd.f32 %v4446, %v4474
      %v4476 = vpop.f32.mrf.mxu0
      %v4477 = vadd.f32 %v4448, %v4476
      %4478 = vmatmul.bf16.gmra.mxu0 %v3690
      %v4479 = vpop.f32.mrf.mxu0
      %v4480 = vadd.f32 %v4451, %v4479
      %v4481 = vpop.f32.mrf.mxu0
      %v4482 = vadd.f32 %v4453, %v4481
      %4483 = vdwg.mxu0
      %4484 = vmatpush.bf16.msra.mxu0 0
      %4485 = vmatpush.bf16.msra.mxu0 0
      %4486 = vmatpush.bf16.msra.mxu0 0
      %4487 = vmatpush.bf16.msra.mxu0 0
      %4488 = vmatpush.bf16.msra.mxu0 %v4067
      %4489 = vmatpush.bf16.msra.mxu0 %v4064
      %4490 = vmatpush.bf16.msra.mxu0 %v4061
      %4491 = vmatpush.bf16.msra.mxu0 %v4058
      %4492 = vmatmul.bf16.gmra.mxu0 %v4154
      %v4493 = vpop.f32.mrf.mxu0
      %v4494 = vadd.f32 %v4465, %v4493
      %v4495 = vpop.f32.mrf.mxu0
      %v4496 = vadd.f32 %v4467, %v4495
      %4497 = vmatmul.bf16.gmra.mxu0 %v4157
      %v4498 = vpop.f32.mrf.mxu0
      %v4499 = vadd.f32 %v4470, %v4498
      %v4500 = vpop.f32.mrf.mxu0
      %v4501 = vadd.f32 %v4472, %v4500
      %4502 = vmatmul.bf16.gmra.mxu0 %v4160
      %v4503 = vpop.f32.mrf.mxu0
      %v4504 = vadd.f32 %v4475, %v4503
      %v4505 = vpop.f32.mrf.mxu0
      %v4506 = vadd.f32 %v4477, %v4505
      %4507 = vmatmul.bf16.gmra.mxu0 %v4163
      %v4508 = vpop.f32.mrf.mxu0
      %v4509 = vadd.f32 %v4480, %v4508
      %v4510 = vpop.f32.mrf.mxu0
      %v4511 = vadd.f32 %v4482, %v4510
      %4512 = vdwg.mxu0
      %v4513 = vmax.f32 %v4262, 0.0
      %v4514 = vmax.f32 %v4378, 0.0
      %v4515 = vmax.f32 %v4494, 0.0
      %v4516 = vmax.f32 %v4264, 0.0
      %v4517 = vmax.f32 %v4380, 0.0
      %v4518 = vmax.f32 %v4496, 0.0
      %v4519 = vmax.f32 %v4267, 0.0
      %v4520 = vmax.f32 %v4383, 0.0
      %v4521 = vmax.f32 %v4499, 0.0
      %v4522 = vmax.f32 %v4269, 0.0
      %v4523 = vmax.f32 %v4385, 0.0
      %v4524 = vmax.f32 %v4501, 0.0
      %v4525 = vmax.f32 %v4272, 0.0
      %v4526 = vmax.f32 %v4388, 0.0
      %v4527 = vmax.f32 %v4504, 0.0
      %v4528 = vmax.f32 %v4274, 0.0
      %v4529 = vmax.f32 %v4390, 0.0
      %v4530 = vmax.f32 %v4506, 0.0
      %v4531 = vmax.f32 %v4277, 0.0
      %v4532 = vmax.f32 %v4393, 0.0
      %v4533 = vmax.f32 %v4509, 0.0
      %v4534 = vmax.f32 %v4279, 0.0
      %v4535 = vmax.f32 %v4395, 0.0
      %v4536 = vmax.f32 %v4511, 0.0
      %v4537 = vld [vmem:[%s1 + $0x1c0] sm:$0xf]
      %v4538 = vld [vmem:[%s1 + $0x1d0] sm:$0xf]
      %v4539 = vld [vmem:[%s1 + $0x1e0] sm:$0xf]
      %v4540 = vld [vmem:[%s1 + $0x1f0] sm:$0xf]
      %v4541 = vld [vmem:[%s1 + $0x200] sm:$0xf]
      %v4542 = vld [vmem:[%s1 + $0x210] sm:$0xf]
      %v4543 = vld [vmem:[%s1 + $0x220] sm:$0xf]
      %v4544 = vld [vmem:[%s1 + $0x230] sm:$0xf]
      %v4545 = vld [vmem:[%s2 + $0xe0] sm:$0xff]
      %v4546 = vld [vmem:[%s2 + $0xe8] sm:$0xff]
      %v4547 = vld [vmem:[%s2 + $0xf0] sm:$0xff]
      %v4548 = vld [vmem:[%s2 + $0xf8] sm:$0xff]
      %v4549 = vld [vmem:[%s2 + $0x100] sm:$0xff]
      %v4550 = vld [vmem:[%s2 + $0x108] sm:$0xff]
      %v4551 = vld [vmem:[%s2 + $0x110] sm:$0xff]
      %v4552 = vld [vmem:[%s2 + $0x118] sm:$0xff]
      %4554 = vset.pattern.permute.xlu0 0
      %4555 = vperm.xlu0 %4554, %v4545
      %v4556 = vpop.permute.xlu0 %4555
      %4559 = vset.pattern.permute.xlu0 0
      %4560 = vperm.xlu0 %4559, %v4546
      %v4561 = vpop.permute.xlu0 %4560
      %4564 = vset.pattern.permute.xlu0 0
      %4565 = vperm.xlu0 %4564, %v4547
      %v4566 = vpop.permute.xlu0 %4565
      %4569 = vset.pattern.permute.xlu0 0
      %4570 = vperm.xlu0 %4569, %v4548
      %v4571 = vpop.permute.xlu0 %4570
      %4574 = vset.pattern.permute.xlu0 0
      %4575 = vperm.xlu0 %4574, %v4549
      %v4576 = vpop.permute.xlu0 %4575
      %4579 = vset.pattern.permute.xlu0 0
      %4580 = vperm.xlu0 %4579, %v4550
      %v4581 = vpop.permute.xlu0 %4580
      %4584 = vset.pattern.permute.xlu0 0
      %4585 = vperm.xlu0 %4584, %v4551
      %v4586 = vpop.permute.xlu0 %4585
      %4589 = vset.pattern.permute.xlu0 0
      %4590 = vperm.xlu0 %4589, %v4552
      %v4591 = vpop.permute.xlu0 %4590
      %v4601 = vunpack.c.l.b16 %v4537
      %v4602 = vunpack.c.l.b16 %v4538
      %v4603 = vunpack.c.l.b16 %v4539
      %v4604 = vunpack.c.l.b16 %v4540
      %v4605 = vunpack.c.l.b16 %v4541
      %v4606 = vunpack.c.l.b16 %v4542
      %v4607 = vunpack.c.l.b16 %v4543
      %v4608 = vunpack.c.l.b16 %v4544
      %v4609 = vpack.c.b16 %v4602, %v4601
      %v4610 = vpack.c.b16 %v4604, %v4603
      %v4611 = vpack.c.b16 %v4606, %v4605
      %v4612 = vpack.c.b16 %v4608, %v4607
      %v4613 = vunpack.c.l.b16 %v1936
      %v4614 = vunpack.c.h.b16 %v1936
      %v4615 = vunpack.c.l.b16 %v1937
      %v4616 = vunpack.c.l.b16 %v1938
      %v4617 = vunpack.c.h.b16 %v1938
      %v4618 = vunpack.c.l.b16 %v1939
      %v4619 = vunpack.c.l.b16 %v1940
      %v4620 = vunpack.c.h.b16 %v1940
      %v4621 = vunpack.c.l.b16 %v1941
      %v4622 = vunpack.c.l.b16 %v1942
      %v4623 = vunpack.c.h.b16 %v1942
      %v4624 = vunpack.c.l.b16 %v1943
      %v4625 = vpack.c.b16 %v4616, %v4613
      %v4626 = vpack.c.b16 %v4617, %v4614
      %v4627 = vpack.c.b16 %v4618, %v4615
      %v4628 = vpack.c.b16 %v4622, %v4619
      %v4629 = vpack.c.b16 %v4623, %v4620
      %v4630 = vpack.c.b16 %v4624, %v4621
      %vm4637 = vcmask 261120
      %v4639 = vsel %vm4637, %v4609, 0
      %v4642 = vsel %vm4637, %v4610, 0
      %v4645 = vsel %vm4637, %v4611, 0
      %v4648 = vsel %vm4637, %v4612, 0
      %4650 = vmatpush.bf16.msra.mxu0 0
      %4651 = vmatpush.bf16.msra.mxu0 0
      %4652 = vmatpush.bf16.msra.mxu0 0
      %4653 = vmatpush.bf16.msra.mxu0 0
      %4654 = vmatpush.bf16.msra.mxu0 0
      %4655 = vmatpush.bf16.msra.mxu0 0
      %4656 = vmatpush.bf16.msra.mxu0 %v4628
      %4657 = vmatpush.bf16.msra.mxu0 %v4625
      %4658 = vmatmul.bf16.gmra.mxu0 %v4639
      %v4659 = vpop.f32.mrf.mxu0
      %v4660 = vadd.f32 %v4556, %v4659
      %v4661 = vpop.f32.mrf.mxu0
      %v4662 = vadd.f32 %v4561, %v4661
      %4663 = vmatmul.bf16.gmra.mxu0 %v4642
      %v4664 = vpop.f32.mrf.mxu0
      %v4665 = vadd.f32 %v4566, %v4664
      %v4666 = vpop.f32.mrf.mxu0
      %v4667 = vadd.f32 %v4571, %v4666
      %4668 = vmatmul.bf16.gmra.mxu0 %v4645
      %v4669 = vpop.f32.mrf.mxu0
      %v4670 = vadd.f32 %v4576, %v4669
      %v4671 = vpop.f32.mrf.mxu0
      %v4672 = vadd.f32 %v4581, %v4671
      %4673 = vmatmul.bf16.gmra.mxu0 %v4648
      %v4674 = vpop.f32.mrf.mxu0
      %v4675 = vadd.f32 %v4586, %v4674
      %v4676 = vpop.f32.mrf.mxu0
      %v4677 = vadd.f32 %v4591, %v4676
      %4678 = vdwg.mxu0
      %4679 = vmatpush.bf16.msra.mxu0 0
      %4680 = vmatpush.bf16.msra.mxu0 0
      %4681 = vmatpush.bf16.msra.mxu0 0
      %4682 = vmatpush.bf16.msra.mxu0 0
      %4683 = vmatpush.bf16.msra.mxu0 0
      %4684 = vmatpush.bf16.msra.mxu0 0
      %4685 = vmatpush.bf16.msra.mxu0 %v4629
      %4686 = vmatpush.bf16.msra.mxu0 %v4626
      %4687 = vmatmul.bf16.gmra.mxu0 %v4639
      %v4688 = vpop.f32.mrf.mxu0
      %v4689 = vadd.f32 %v4556, %v4688
      %v4690 = vpop.f32.mrf.mxu0
      %v4691 = vadd.f32 %v4561, %v4690
      %4692 = vmatmul.bf16.gmra.mxu0 %v4642
      %v4693 = vpop.f32.mrf.mxu0
      %v4694 = vadd.f32 %v4566, %v4693
      %v4695 = vpop.f32.mrf.mxu0
      %v4696 = vadd.f32 %v4571, %v4695
      %4697 = vmatmul.bf16.gmra.mxu0 %v4645
      %v4698 = vpop.f32.mrf.mxu0
      %v4699 = vadd.f32 %v4576, %v4698
      %v4700 = vpop.f32.mrf.mxu0
      %v4701 = vadd.f32 %v4581, %v4700
      %4702 = vmatmul.bf16.gmra.mxu0 %v4648
      %v4703 = vpop.f32.mrf.mxu0
      %v4704 = vadd.f32 %v4586, %v4703
      %v4705 = vpop.f32.mrf.mxu0
      %v4706 = vadd.f32 %v4591, %v4705
      %4707 = vdwg.mxu0
      %4708 = vmatpush.bf16.msra.mxu0 0
      %4709 = vmatpush.bf16.msra.mxu0 0
      %4710 = vmatpush.bf16.msra.mxu0 0
      %4711 = vmatpush.bf16.msra.mxu0 0
      %4712 = vmatpush.bf16.msra.mxu0 0
      %4713 = vmatpush.bf16.msra.mxu0 0
      %4714 = vmatpush.bf16.msra.mxu0 %v4630
      %4715 = vmatpush.bf16.msra.mxu0 %v4627
      %4716 = vmatmul.bf16.gmra.mxu0 %v4639
      %v4717 = vpop.f32.mrf.mxu0
      %v4718 = vadd.f32 %v4556, %v4717
      %v4719 = vpop.f32.mrf.mxu0
      %v4720 = vadd.f32 %v4561, %v4719
      %4721 = vmatmul.bf16.gmra.mxu0 %v4642
      %v4722 = vpop.f32.mrf.mxu0
      %v4723 = vadd.f32 %v4566, %v4722
      %v4724 = vpop.f32.mrf.mxu0
      %v4725 = vadd.f32 %v4571, %v4724
      %4726 = vmatmul.bf16.gmra.mxu0 %v4645
      %v4727 = vpop.f32.mrf.mxu0
      %v4728 = vadd.f32 %v4576, %v4727
      %v4729 = vpop.f32.mrf.mxu0
      %v4730 = vadd.f32 %v4581, %v4729
      %4731 = vmatmul.bf16.gmra.mxu0 %v4648
      %v4732 = vpop.f32.mrf.mxu0
      %v4733 = vadd.f32 %v4586, %v4732
      %v4734 = vpop.f32.mrf.mxu0
      %v4735 = vadd.f32 %v4591, %v4734
      %4736 = vdwg.mxu0
      %v4737 = vadd.f32 %v4513, %v4660
      %v4738 = vadd.f32 %v4514, %v4689
      %v4739 = vadd.f32 %v4515, %v4718
      %v4740 = vadd.f32 %v4516, %v4662
      %v4741 = vadd.f32 %v4517, %v4691
      %v4742 = vadd.f32 %v4518, %v4720
      %v4743 = vadd.f32 %v4519, %v4665
      %v4744 = vadd.f32 %v4520, %v4694
      %v4745 = vadd.f32 %v4521, %v4723
      %v4746 = vadd.f32 %v4522, %v4667
      %v4747 = vadd.f32 %v4523, %v4696
      %v4748 = vadd.f32 %v4524, %v4725
      %v4749 = vadd.f32 %v4525, %v4670
      %v4750 = vadd.f32 %v4526, %v4699
      %v4751 = vadd.f32 %v4527, %v4728
      %v4752 = vadd.f32 %v4528, %v4672
      %v4753 = vadd.f32 %v4529, %v4701
      %v4754 = vadd.f32 %v4530, %v4730
      %v4755 = vadd.f32 %v4531, %v4675
      %v4756 = vadd.f32 %v4532, %v4704
      %v4757 = vadd.f32 %v4533, %v4733
      %v4758 = vadd.f32 %v4534, %v4677
      %v4759 = vadd.f32 %v4535, %v4706
      %v4760 = vadd.f32 %v4536, %v4735
      %v4761 = vmax.f32 %v4737, 0.0
      %v4762 = vmax.f32 %v4738, 0.0
      %v4763 = vmax.f32 %v4739, 0.0
      %v4764 = vmax.f32 %v4740, 0.0
      %v4765 = vmax.f32 %v4741, 0.0
      %v4766 = vmax.f32 %v4742, 0.0
      %v4767 = vmax.f32 %v4743, 0.0
      %v4768 = vmax.f32 %v4744, 0.0
      %v4769 = vmax.f32 %v4745, 0.0
      %v4770 = vmax.f32 %v4746, 0.0
      %v4771 = vmax.f32 %v4747, 0.0
      %v4772 = vmax.f32 %v4748, 0.0
      %v4773 = vmax.f32 %v4749, 0.0
      %v4774 = vmax.f32 %v4750, 0.0
      %v4775 = vmax.f32 %v4751, 0.0
      %v4776 = vmax.f32 %v4752, 0.0
      %v4777 = vmax.f32 %v4753, 0.0
      %v4778 = vmax.f32 %v4754, 0.0
      %v4779 = vmax.f32 %v4755, 0.0
      %v4780 = vmax.f32 %v4756, 0.0
      %v4781 = vmax.f32 %v4757, 0.0
      %v4782 = vmax.f32 %v4758, 0.0
      %v4783 = vmax.f32 %v4759, 0.0
      %v4784 = vmax.f32 %v4760, 0.0
      %v4785 = vsel %vm339, %v4761, 0.0
      %v4786 = vsel %vm340, %v4762, 0.0
      %v4787 = vsel %vm341, %v4763, 0.0
      %v4788 = vsel %vm339, %v4764, 0.0
      %v4789 = vsel %vm340, %v4765, 0.0
      %v4790 = vsel %vm341, %v4766, 0.0
      %v4791 = vsel %vm339, %v4767, 0.0
      %v4792 = vsel %vm340, %v4768, 0.0
      %v4793 = vsel %vm341, %v4769, 0.0
      %v4794 = vsel %vm339, %v4770, 0.0
      %v4795 = vsel %vm340, %v4771, 0.0
      %v4796 = vsel %vm341, %v4772, 0.0
      %v4797 = vsel %vm339, %v4773, 0.0
      %v4798 = vsel %vm340, %v4774, 0.0
      %v4799 = vsel %vm341, %v4775, 0.0
      %v4800 = vsel %vm339, %v4776, 0.0
      %v4801 = vsel %vm340, %v4777, 0.0
      %v4802 = vsel %vm341, %v4778, 0.0
      %v4803 = vsel %vm339, %v4779, 0.0
      %v4804 = vsel %vm340, %v4780, 0.0
      %v4805 = vsel %vm341, %v4781, 0.0
      %v4806 = vsel %vm339, %v4782, 0.0
      %v4807 = vsel %vm340, %v4783, 0.0
      %v4808 = vsel %vm341, %v4784, 0.0
      %v4809 = vpack.c.bf16 %v4788, %v4785
      %v4810 = vpack.c.bf16 %v4789, %v4786
      %v4811 = vpack.c.bf16 %v4790, %v4787
      %v4812 = vpack.c.bf16 %v4794, %v4791
      %v4813 = vpack.c.bf16 %v4795, %v4792
      %v4814 = vpack.c.bf16 %v4796, %v4793
      %v4815 = vpack.c.bf16 %v4800, %v4797
      %v4816 = vpack.c.bf16 %v4801, %v4798
      %v4817 = vpack.c.bf16 %v4802, %v4799
      %v4818 = vpack.c.bf16 %v4806, %v4803
      %v4819 = vpack.c.bf16 %v4807, %v4804
      %v4820 = vpack.c.bf16 %v4808, %v4805
      %v4821 = vld [vmem:[%s1 + $0x240] sm:$0xf]
      %v4822 = vld [vmem:[%s2 + $0x120] sm:$0xff]
      %4824 = vset.pattern.permute.xlu0 0
      %4825 = vperm.xlu0 %4824, %v4822
      %v4826 = vpop.permute.xlu0 %4825
      %v4829 = vsel %vm4152, %v4821, 0
      %4831 = vmatpush.bf16.msra.mxu0 0
      %4832 = vmatpush.bf16.msra.mxu0 0
      %4833 = vmatpush.bf16.msra.mxu0 0
      %4834 = vmatpush.bf16.msra.mxu0 0
      %4835 = vmatpush.bf16.msra.mxu0 %v4818
      %4836 = vmatpush.bf16.msra.mxu0 %v4815
      %4837 = vmatpush.bf16.msra.mxu0 %v4812
      %4838 = vmatpush.bf16.msra.mxu0 %v4809
      %4839 = vmatmul.bf16.gmra.mxu0 %v4829
      %v4840 = vpop.f32.mrf.mxu0
      %v4841 = vadd.f32 %v4826, %v4840
      %v4842 = vpop.f32.mrf.mxu0
      %4843 = vdwg.mxu0
      %4844 = vmatpush.bf16.msra.mxu0 0
      %4845 = vmatpush.bf16.msra.mxu0 0
      %4846 = vmatpush.bf16.msra.mxu0 0
      %4847 = vmatpush.bf16.msra.mxu0 0
      %4848 = vmatpush.bf16.msra.mxu0 %v4819
      %4849 = vmatpush.bf16.msra.mxu0 %v4816
      %4850 = vmatpush.bf16.msra.mxu0 %v4813
      %4851 = vmatpush.bf16.msra.mxu0 %v4810
      %4852 = vmatmul.bf16.gmra.mxu0 %v4829
      %v4853 = vpop.f32.mrf.mxu0
      %v4854 = vadd.f32 %v4826, %v4853
      %v4855 = vpop.f32.mrf.mxu0
      %4856 = vdwg.mxu0
      %4857 = vmatpush.bf16.msra.mxu0 0
      %4858 = vmatpush.bf16.msra.mxu0 0
      %4859 = vmatpush.bf16.msra.mxu0 0
      %4860 = vmatpush.bf16.msra.mxu0 0
      %4861 = vmatpush.bf16.msra.mxu0 %v4820
      %4862 = vmatpush.bf16.msra.mxu0 %v4817
      %4863 = vmatpush.bf16.msra.mxu0 %v4814
      %4864 = vmatpush.bf16.msra.mxu0 %v4811
      %4865 = vmatmul.bf16.gmra.mxu0 %v4829
      %v4866 = vpop.f32.mrf.mxu0
      %v4867 = vadd.f32 %v4826, %v4866
      %v4868 = vpop.f32.mrf.mxu0
      %4869 = vdwg.mxu0
      %4870 = vst [vmem:[%s197] sm:$0xff] %v4841
      %4871 = vst [vmem:[%s197 + $0x8] sm:$0xff] %v4854
      %4872 = vst [vmem:[%s197 + $0x10] sm:$0xff] %v4867
      %p4873 = scmp.lt.s32.totalorder %s15, 1
      %s4874 = scalar_select %p4873, %s15, 1
      %s4875 = smul.addr %s4874, 3
      %s4876 = smul.addr %s4875, 8
      %s4877 = scalar_lea.vmem %s4, %s4876
      // Predicated region
      $region37: #{colontcn_forward.1} parent=35 // pred_check
        %p4878 = pneg %p122
      $region38: #{colontcn_forward.1} parent=35 // pred_check_branch
        %4880 = sbr.rel (%p4878) target = $region40
      $region39: #{colontcn_forward.1} parent=35 // pred_region
        _
      $region40: #{colontcn_forward.1} parent=35 // pred_fallthru
        _
    $region36: #{colontcn_forward.1} parent=5 // pred_fallthru
      _
    %p4881 = scmp.le.s32.totalorder 2, %s10
    // Predicated region
    $region41: #{colontcn_forward.1} parent=5 // pred_check
      %p4882 = pneg %p4881
    $region42: #{colontcn_forward.1} parent=5 // pred_check_branch
      %4884 = sbr.rel (%p4882) target = $region44
    $region43: #{colontcn_forward.1} parent=5 // pred_region
      %s4885 = ssub.s32 %s10, 2
      // Predicated region
      $region45: #{colontcn_forward.1} parent=43 // pred_check
        %p4886 = pneg %p128
      $region46: #{colontcn_forward.1} parent=43 // pred_check_branch
        %4888 = sbr.rel (%p4886) target = $region48
      $region47: #{colontcn_forward.1} parent=43 // pred_region
        %p4889 = scmp.lt.s32.totalorder %s16, 1
        %s4890 = scalar_select %p4889, %s16, 1
        %s4891 = smul.addr %s4890, 3
        %s4892 = smul.addr %s4891, 8
        %s4893 = scalar_lea.vmem %s4, %s4892
      $region48: #{colontcn_forward.1} parent=43 // pred_fallthru
        _
    $region44: #{colontcn_forward.1} parent=5 // pred_fallthru
      _
  $region6: #{colontcn_forward.1} parent=0 // loop_footer
    %s14 = sadd.s32 1, %s10
  $region7: #{colontcn_forward.1} parent=0 // loop_footer_branch
    %9 = sbr.rel target = $region3
  $region8: #{colontcn_forward.1} parent=0 // loop_exit
    _

</llo_original>
